<compile_context>
chip_gen: v5e
topology: v5e:2x2
jax: 0.10.0
libtpu: 0.0.40
codegen_flags: <defaults>
</compile_context>

<pallas_src>
import numpy as np
import jax
import jax.numpy as jnp
from jax.experimental import pallas as pl
from jax.experimental.pallas import tpu as pltpu

EPS = 1e-5
EPS2 = EPS * EPS
LANE = 128


def _round_up(x, m):
    return ((x + m - 1) // m) * m


# --------------------------------------------------------------------------
# Pallas kernel: one tile -> fused windowed rDFT matmul + loss partial sums
# --------------------------------------------------------------------------
def _stft_loss_kernel(basis_ref, frames_ref, out_ref):
    # basis_ref  : (n_fft, 2*K_pad)      bf16  window-folded [cos | sin] real-DFT basis
    # frames_ref : (1, 2*TILE_N, n_fft)  bf16  [target tile ; pred tile] stacked along M
    # out_ref    : (1, 3, K_pad)         f32   per-tile lane-partial sums:
    #              row 0: sum((St-Sp)^2), row 1: sum(St^2), row 2: sum(|logSt - logSp|)
    two_tn = frames_ref.shape[1]
    tn = two_tn // 2
    kp = out_ref.shape[2]

    # One MXU matmul, M = 2*TILE_N rows (target + pred), N = 2*K_pad cols (cos + sin).
    res = jnp.dot(frames_ref[0], basis_ref[...],
                  preferred_element_type=jnp.float32)          # (2*TILE_N, 2*K_pad)

    re_t = res[:tn, :kp]
    im_t = res[:tn, kp:]
    re_p = res[tn:, :kp]
    im_p = res[tn:, kp:]

    mag2_t = re_t * re_t + im_t * im_t        # |St|^2 (no sqrt needed for ||St||_2^2)
    mag2_p = re_p * re_p + im_p * im_p
    spec_t = jnp.sqrt(mag2_t)
    spec_p = jnp.sqrt(mag2_p)
    diff = spec_t - spec_p

    # |log(max(St,EPS)) - log(max(Sp,EPS))| == 0.5*|log(max(St^2,EPS^2)) - log(max(Sp^2,EPS^2))|
    # Padded (zero) rows/columns give both args == EPS^2 -> exactly zero contribution.
    log_term = 0.5 * jnp.abs(jnp.log(jnp.maximum(mag2_t, EPS2))
                             - jnp.log(jnp.maximum(mag2_p, EPS2)))

    part = jnp.concatenate(
        [jnp.sum(diff * diff, axis=0, keepdims=True),
         jnp.sum(mag2_t, axis=0, keepdims=True),
         jnp.sum(log_term, axis=0, keepdims=True)],
        axis=0)                                # (3, K_pad) lane-partial sums
    out_ref[...] = part[None, :, :]            # single lane-dense block store


# --------------------------------------------------------------------------
# Host-side glue: framing, window-folded DFT basis, pallas_call wrapper
# --------------------------------------------------------------------------
def _hann_padded_np(win_size, n_fft):
    # torch.hann_window (periodic=True), center-padded to n_fft like torch.stft
    n = np.arange(win_size, dtype=np.float64)
    w = 0.5 - 0.5 * np.cos(2.0 * np.pi * n / win_size)
    wf = np.zeros((n_fft,), dtype=np.float64)
    left = (n_fft - win_size) // 2
    wf[left:left + win_size] = w
    return wf


def _fused_basis(n_fft, win_size):
    """Window-folded [cos | sin] real-DFT basis, K zero-padded to a lane multiple, bf16."""
    K = n_fft // 2 + 1
    K_pad = _round_up(K, LANE)
    wf = _hann_padded_np(win_size, n_fft)                    # (n_fft,)
    nn = np.arange(n_fft, dtype=np.int64)[:, None]
    kk = np.arange(K, dtype=np.int64)[None, :]
    ang = 2.0 * np.pi * ((nn * kk) % n_fft).astype(np.float64) / n_fft
    cosb = wf[:, None] * np.cos(ang)                         # (n_fft, K), window folded in
    sinb = wf[:, None] * np.sin(ang)
    basis = np.zeros((n_fft, 2 * K_pad), dtype=np.float64)
    basis[:, :K] = cosb
    basis[:, K_pad:K_pad + K] = sinb
    return jnp.asarray(basis, jnp.bfloat16), K, K_pad


def _frame_pair(pred, target, n_fft, hop, tile_n):
    """Frame both signals (torch.stft center=True, reflect pad) directly into the
    kernel's tile layout (num_tiles, 2*tile_n, n_fft): target rows on top of pred rows,
    so the kernel needs no in-kernel concat/copy. Padded frames are zeroed."""
    B, T = target.shape
    pad = n_fft // 2
    x = jnp.stack([target, pred])                                   # (2, B, T)
    xp = jnp.pad(x, ((0, 0), (0, 0), (pad, pad)),
                 mode="reflect").astype(jnp.bfloat16)
    num_frames = 1 + T // hop
    N = B * num_frames
    num_tiles = pl.cdiv(N, tile_n)
    N_pad = num_tiles * tile_n

    g = jnp.arange(N_pad)
    valid = g < N
    gc = jnp.minimum(g, N - 1)
    b_idx = gc // num_frames
    samp = (gc % num_frames)[:, None] * hop + jnp.arange(n_fft)[None, :]  # (N_pad, n_fft)
    frames = xp[:, b_idx[:, None], samp]                            # (2, N_pad, n_fft)
    frames = jnp.where(valid[None, :, None], frames,
                       jnp.zeros((), frames.dtype))                 # zero padded frames
    frames = frames.reshape(2, num_tiles, tile_n, n_fft).transpose(1, 0, 2, 3)
    frames = frames.reshape(num_tiles, 2 * tile_n, n_fft)
    return frames, N, num_tiles


def _vmem_limit_bytes():
    # Adapt the scoped-VMEM request to the chip (v7x: 64 MiB physical, v5e/v6e: 128 MiB).
    try:
        cap = pltpu.get_tpu_info().vmem_capacity_bytes
        if cap:
            return min(96 * 1024 * 1024, int(cap * 0.7))
    except Exception:
        pass
    return 48 * 1024 * 1024


def _single_res_sums(pred, target, n_fft, win_size, hop):
    basis, K, K_pad = _fused_basis(n_fft, win_size)

    # Adaptive tile: bigger tiles for small n_fft keep the per-grid-step overhead
    # amortized; clamp by the (padded) frame count so tiny inputs don't over-pad.
    B, T = target.shape
    N_static = B * (1 + T // hop)
    tile_n = max(LANE, min(4 * LANE, (1 << 18) // n_fft))
    tile_n = min(tile_n, _round_up(N_static, LANE))

    frames, N, num_tiles = _frame_pair(pred, target, n_fft, hop, tile_n)

    partials = pl.pallas_call(
        _stft_loss_kernel,
        out_shape=jax.ShapeDtypeStruct((num_tiles, 3, K_pad), jnp.float32),
        grid_spec=pltpu.PrefetchScalarGridSpec(
            num_scalar_prefetch=0,
            grid=(num_tiles,),
            in_specs=[
                pl.BlockSpec((n_fft, 2 * K_pad), lambda i: (0, 0)),         # resident basis
                pl.BlockSpec((1, 2 * tile_n, n_fft), lambda i: (i, 0, 0)),  # frame tile
            ],
            out_specs=pl.BlockSpec((1, 3, K_pad), lambda i: (i, 0, 0)),
        ),
        compiler_params=pltpu.CompilerParams(
            dimension_semantics=("parallel",),        # no carried state -> megacore OK
            vmem_limit_bytes=_vmem_limit_bytes(),
        ),
    )(basis, frames)

    sums = jnp.sum(partials, axis=(0, 2))            # (3,) tiny reduction in plain XLA
    n_elems = N * K                                  # true (unpadded) spectrogram size
    return sums, n_elems


def mrstft_loss(pred, target, n_ffts, win_sizes, hop_sizes):
    """pred, target: (B, 1, T) float, matching the torch module's inputs."""
    pred = pred[:, 0, :].astype(jnp.float32)
    target = target[:, 0, :].astype(jnp.float32)
    sc_total = jnp.float32(0.0)
    mag_total = jnp.float32(0.0)
    for n_fft, win, hop in zip(n_ffts, win_sizes, hop_sizes):
        sums, n_elems = _single_res_sums(pred, target, n_fft, win, hop)
        sc_total = sc_total + jnp.sqrt(sums[0]) / (jnp.sqrt(sums[1]) + EPS)
        mag_total = mag_total + sums[2] / n_elems
    n = len(n_ffts)
    return {
        "G/mrstft_sc_loss": sc_total / n,
        "G/mrstft_mag_loss": mag_total / n,
    }


# --------------------------------------------------------------------------
# Pure-JAX reference (jnp.fft.rfft, f32) for a correctness sanity check
# --------------------------------------------------------------------------
def _ref_amp_spec(x, n_fft, win_size, hop):
    pad = n_fft // 2
    xp = jnp.pad(x, ((0, 0), (pad, pad)), mode="reflect")
    num_frames = 1 + x.shape[1] // hop
    idx = hop * jnp.arange(num_frames)[:, None] + jnp.arange(n_fft)[None, :]
    frames = xp[:, idx]
    wf = jnp.asarray(_hann_padded_np(win_size, n_fft), jnp.float32)
    return jnp.abs(jnp.fft.rfft(frames * wf, axis=-1))


def mrstft_loss_ref(pred, target, n_ffts, win_sizes, hop_sizes):
    pred = pred[:, 0, :].astype(jnp.float32)
    target = target[:, 0, :].astype(jnp.float32)
    sc_total = 0.0
    mag_total = 0.0
    for n_fft, win, hop in zip(n_ffts, win_sizes, hop_sizes):
        st = _ref_amp_spec(target, n_fft, win, hop)
        sp = _ref_amp_spec(pred, n_fft, win, hop)
        sc_total = sc_total + jnp.sqrt(jnp.sum((st - sp) ** 2)) / (jnp.sqrt(jnp.sum(st ** 2)) + EPS)
        mag_total = mag_total + jnp.mean(jnp.abs(jnp.log(jnp.maximum(st, EPS)) - jnp.log(jnp.maximum(sp, EPS))))
    n = len(n_ffts)
    return {"G/mrstft_sc_loss": sc_total / n, "G/mrstft_mag_loss": mag_total / n}


if __name__ == "__main__":
    # Small, deterministic example (scaled-down resolutions of the defaults).
    B, T = 2, 4096
    n_ffts = [256, 512, 1024]
    win_sizes = [180, 450, 900]
    hop_sizes = [40, 80, 160]

    key = jax.random.PRNGKey(0)
    k1, k2 = jax.random.split(key)
    pred = jax.random.normal(k1, (B, 1, T), dtype=jnp.float32)
    target = jax.random.normal(k2, (B, 1, T), dtype=jnp.float32)

    losses = mrstft_loss(pred, target, n_ffts, win_sizes, hop_sizes)
    losses = jax.block_until_ready(losses)

    ref = jax.block_until_ready(mrstft_loss_ref(pred, target, n_ffts, win_sizes, hop_sizes))
    np.testing.assert_allclose(np.asarray(losses["G/mrstft_sc_loss"]),
                               np.asarray(ref["G/mrstft_sc_loss"]), rtol=2e-2, atol=2e-3)
    np.testing.assert_allclose(np.asarray(losses["G/mrstft_mag_loss"]),
                               np.asarray(ref["G/mrstft_mag_loss"]), rtol=2e-2, atol=2e-3)

    print("KERNEL_OK")
</pallas_src>

<mosaic_0001>
module attributes {stable_mosaic.version = 11 : i64} {
  func.func @_stft_loss_kernel(%arg0: i32, %arg1: memref<256x512xbf16, #tpu.memory_space<vmem>>, %arg2: memref<1x512x256xbf16, #tpu.memory_space<vmem>>, %arg3: memref<1x3x256xf32, #tpu.memory_space<vmem>>) attributes {dimension_semantics = [#tpu.dimension_semantics<parallel>], iteration_bounds = array<i64: 1>, scalar_prefetch = 0 : i64, scratch_operands = 0 : i64, tpu.core_type = #tpu.core_type<tc>, window_params = [{pipeline_mode = #tpu.pipeline_mode<synchronous>, transform_indices = @transform_0, window_bounds = array<i64: 256, 512>}, {transform_indices = @transform_1, window_bounds = array<i64: 1, 512, 256>}, {transform_indices = @transform_2, window_bounds = array<i64: 1, 3, 256>}]} {
    %c0 = arith.constant 0 : index
    %c0_0 = arith.constant 0 : index
    %c0_1 = arith.constant 0 : index
    %0 = vector.load %arg2[%c0, %c0_0, %c0_1] : memref<1x512x256xbf16, #tpu.memory_space<vmem>>, vector<1x512x256xbf16>
    %1 = vector.shape_cast %0 : vector<1x512x256xbf16> to vector<512x256xbf16>
    %c0_2 = arith.constant 0 : index
    %c0_3 = arith.constant 0 : index
    %2 = vector.load %arg1[%c0_2, %c0_3] : memref<256x512xbf16, #tpu.memory_space<vmem>>, vector<256x512xbf16>
    %cst = arith.constant dense<0.000000e+00> : vector<512x512xf32>
    %3 = tpu.matmul %1, %2, %cst {dimension_numbers = #tpu.dot_dimension_numbers<[1], [0], [0], [1], [0, 0, 1, 1], [], []>} : vector<512x256xbf16>, vector<256x512xbf16>, vector<512x512xf32> -> vector<512x512xf32>
    %4 = vector.extract_strided_slice %3 {offsets = [0, 0], sizes = [256, 256], strides = [1, 1]} : vector<512x512xf32> to vector<256x256xf32>
    %5 = vector.extract_strided_slice %3 {offsets = [0, 256], sizes = [256, 256], strides = [1, 1]} : vector<512x512xf32> to vector<256x256xf32>
    %6 = vector.extract_strided_slice %3 {offsets = [256, 0], sizes = [256, 256], strides = [1, 1]} : vector<512x512xf32> to vector<256x256xf32>
    %7 = vector.extract_strided_slice %3 {offsets = [256, 256], sizes = [256, 256], strides = [1, 1]} : vector<512x512xf32> to vector<256x256xf32>
    %8 = arith.mulf %4, %4 : vector<256x256xf32>
    %9 = arith.mulf %5, %5 : vector<256x256xf32>
    %10 = arith.addf %8, %9 : vector<256x256xf32>
    %11 = arith.mulf %6, %6 : vector<256x256xf32>
    %12 = arith.mulf %7, %7 : vector<256x256xf32>
    %13 = arith.addf %11, %12 : vector<256x256xf32>
    %14 = math.sqrt %10 : vector<256x256xf32>
    %15 = math.sqrt %13 : vector<256x256xf32>
    %16 = arith.subf %14, %15 : vector<256x256xf32>
    %cst_4 = arith.constant 1.000000e-10 : f32
    %17 = vector.broadcast %cst_4 : f32 to vector<256x256xf32>
    %18 = arith.maximumf %10, %17 : vector<256x256xf32>
    %19 = math.log %18 : vector<256x256xf32>
    %cst_5 = arith.constant 1.000000e-10 : f32
    %20 = vector.broadcast %cst_5 : f32 to vector<256x256xf32>
    %21 = arith.maximumf %13, %20 : vector<256x256xf32>
    %22 = math.log %21 : vector<256x256xf32>
    %23 = arith.subf %19, %22 : vector<256x256xf32>
    %24 = math.absf %23 : vector<256x256xf32>
    %cst_6 = arith.constant 5.000000e-01 : f32
    %25 = vector.broadcast %cst_6 : f32 to vector<256x256xf32>
    %26 = arith.mulf %25, %24 : vector<256x256xf32>
    %27 = arith.mulf %16, %16 : vector<256x256xf32>
    %cst_7 = arith.constant dense<0.000000e+00> : vector<256xf32>
    %28 = vector.multi_reduction <add>, %27, %cst_7 [0] : vector<256x256xf32> to vector<256xf32>
    %29 = vector.shape_cast %28 : vector<256xf32> to vector<1x256xf32>
    %cst_8 = arith.constant dense<0.000000e+00> : vector<256xf32>
    %30 = vector.multi_reduction <add>, %10, %cst_8 [0] : vector<256x256xf32> to vector<256xf32>
    %31 = vector.shape_cast %30 : vector<256xf32> to vector<1x256xf32>
    %cst_9 = arith.constant dense<0.000000e+00> : vector<256xf32>
    %32 = vector.multi_reduction <add>, %26, %cst_9 [0] : vector<256x256xf32> to vector<256xf32>
    %33 = vector.shape_cast %32 : vector<256xf32> to vector<1x256xf32>
    %34 = tpu.concatenate %29, %31, %33 in 0 : vector<1x256xf32>, vector<1x256xf32>, vector<1x256xf32> -> vector<3x256xf32>
    %35 = vector.shape_cast %34 : vector<3x256xf32> to vector<1x3x256xf32>
    %c0_10 = arith.constant 0 : index
    %c0_11 = arith.constant 0 : index
    %c0_12 = arith.constant 0 : index
    %36 = vector.load %arg3[%c0_10, %c0_11, %c0_12] : memref<1x3x256xf32, #tpu.memory_space<vmem>>, vector<1x3x256xf32>
    tpu.vector_store %arg3[%c0_10, %c0_11, %c0_12], %35 {strides = array<i32>} : memref<1x3x256xf32, #tpu.memory_space<vmem>>, vector<1x3x256xf32>,
    return
  }
  func.func @transform_0(%arg0: i32) -> (i32, i32) {
    %c0_i32 = arith.constant 0 : i32
    %c0_i32_0 = arith.constant 0 : i32
    %c0_i32_1 = arith.constant 0 : i32
    return %c0_i32, %c0_i32_0 : i32, i32
  }
  func.func @transform_1(%arg0: i32) -> (i32, i32, i32) {
    %c0_i32 = arith.constant 0 : i32
    %c0_i32_0 = arith.constant 0 : i32
    %c0_i32_1 = arith.constant 0 : i32
    return %arg0, %c0_i32, %c0_i32_0 : i32, i32, i32
  }
  func.func @transform_2(%arg0: i32) -> (i32, i32, i32) {
    %c0_i32 = arith.constant 0 : i32
    %c0_i32_0 = arith.constant 0 : i32
    %c0_i32_1 = arith.constant 0 : i32
    return %arg0, %c0_i32, %c0_i32_0 : i32, i32, i32
  }
}

</mosaic_0001>

<llo_original>
// kernel: tpu_custom_call.1
$region0: #{tpu_custom_call.1}
  #allocation0 [shape = 'u32[]', space=smem, size = 0x4, offset = 0x4, fixed_abs, tag = 'smem constant byte address 0x4 - core index']
  #allocation1 [shape = 'u32[72,128]{1,0:T(1,128)}', space=vmem, size = 0x9000, scoped, tag = 'internal scratch']
  %s0 = inlined_call_operand.hbm [shape: bf16[256,512], index: 0, kind: input, shape index: {}]
  %s1 = inlined_call_operand.hbm [shape: bf16[1,512,256], index: 1, kind: input, shape index: {}]
  %s2 = inlined_call_operand.vmem [shape: f32[1,3,256], index: 2, kind: output, shape index: {}]
  %s3 = sld [smem:[#allocation0]]
  $region26: #{tpu_custom_call.1} parent=0
    _
  %s5 = ssub.s32 1, %s3
  %s6 = scalar_select 0, %s5, %s3
  $region1: #{tpu_custom_call.1} parent=0
    #allocation2 [shape = 'u8[262144]{0}', space=vmem, size = 0x40000, scoped, tag = 'input window, operand 0, single buffered']
    #allocation3 [shape = 's32[1]{0}', space=sflag, size = 0x4, scoped, tag = 'scoped memory for tpu_custom_call.1']
    #allocation4 [shape = 'u8[262144]{0}', space=vmem, size = 0x40000, scoped, tag = 'input window, operand 1, single buffered']
    #allocation5 [shape = 's32[1]{0}', space=sflag, size = 0x4, scoped, tag = 'scoped memory for tpu_custom_call.1']
    %7 = vsyncpa [#allocation3], 0
    %8 = vsyncpa [#allocation5], 0
    // Predicated region
    $region2: #{tpu_custom_call.1} parent=1 // pred_check
      _
    $region3: #{tpu_custom_call.1} parent=1 // pred_check_branch
      %10 = sbr.rel (0) target = $region5
    $region4: #{tpu_custom_call.1} parent=1 // pred_region
      %12 = vsyncadd [#allocation3], 0
      %s13 = sshll.u32 %s0, 4
      %s14 = int_to_ptr.hbm [resolvable:$true] %s13
      %s15 = sshll.u32 [#allocation2], 4
      %s16 = int_to_ptr.vmem [resolvable:$true] %s15
      %21 = dma.hbm_to_vmem [thread:$0]  %s14, 8192, %s16, [#allocation3], 256, 256, 16
    $region5: #{tpu_custom_call.1} parent=1 // pred_fallthru
      _
    // Predicated region
    $region6: #{tpu_custom_call.1} parent=1 // pred_check
      _
    $region7: #{tpu_custom_call.1} parent=1 // pred_check_branch
      %23 = sbr.rel (0) target = $region9
    $region8: #{tpu_custom_call.1} parent=1 // pred_region
      %25 = vsyncadd [#allocation5], 0
      %s26 = sshll.u32 %s1, 4
      %s27 = int_to_ptr.hbm [resolvable:$true] %s26
      %s28 = sshll.u32 [#allocation4], 4
      %s29 = int_to_ptr.vmem [resolvable:$true] %s28
      %34 = dma.hbm_to_vmem [thread:$0]  %s27, 8192, %s29, [#allocation5], 128, 128, 8
    $region9: #{tpu_custom_call.1} parent=1 // pred_fallthru
      _
    // Predicated region
    $region10: #{tpu_custom_call.1} parent=1 // pred_check
      _
    $region11: #{tpu_custom_call.1} parent=1 // pred_check_branch
      %36 = sbr.rel (0) target = $region13
    $region12: #{tpu_custom_call.1} parent=1 // pred_region
      %38 = dma.done [#allocation3], 8192
    $region13: #{tpu_custom_call.1} parent=1 // pred_fallthru
      _
    // Predicated region
    $region14: #{tpu_custom_call.1} parent=1 // pred_check
      _
    $region15: #{tpu_custom_call.1} parent=1 // pred_check_branch
      %40 = sbr.rel (0) target = $region17
    $region16: #{tpu_custom_call.1} parent=1 // pred_region
      %42 = dma.done [#allocation5], 8192
    $region17: #{tpu_custom_call.1} parent=1 // pred_fallthru
      _
    %v43 = vld [vmem:[#allocation4] sm:$0xff]
    %v44 = vld [vmem:[#allocation4 + $0x8] sm:$0xff]
    %v45 = vld [vmem:[#allocation4 + $0x10] sm:$0xff]
    %v46 = vld [vmem:[#allocation4 + $0x18] sm:$0xff]
    %v47 = vld [vmem:[#allocation4 + $0x20] sm:$0xff]
    %v48 = vld [vmem:[#allocation4 + $0x28] sm:$0xff]
    %v49 = vld [vmem:[#allocation4 + $0x30] sm:$0xff]
    %v50 = vld [vmem:[#allocation4 + $0x38] sm:$0xff]
    %v51 = vld [vmem:[#allocation4 + $0x40] sm:$0xff]
    %v52 = vld [vmem:[#allocation4 + $0x48] sm:$0xff]
    %v53 = vld [vmem:[#allocation4 + $0x50] sm:$0xff]
    %v54 = vld [vmem:[#allocation4 + $0x58] sm:$0xff]
    %v55 = vld [vmem:[#allocation4 + $0x60] sm:$0xff]
    %v56 = vld [vmem:[#allocation4 + $0x68] sm:$0xff]
    %v57 = vld [vmem:[#allocation4 + $0x70] sm:$0xff]
    %v58 = vld [vmem:[#allocation4 + $0x78] sm:$0xff]
    %v59 = vld [vmem:[#allocation4 + $0x80] sm:$0xff]
    %v60 = vld [vmem:[#allocation4 + $0x88] sm:$0xff]
    %v61 = vld [vmem:[#allocation4 + $0x90] sm:$0xff]
    %v62 = vld [vmem:[#allocation4 + $0x98] sm:$0xff]
    %v63 = vld [vmem:[#allocation4 + $0xa0] sm:$0xff]
    %v64 = vld [vmem:[#allocation4 + $0xa8] sm:$0xff]
    %v65 = vld [vmem:[#allocation4 + $0xb0] sm:$0xff]
    %v66 = vld [vmem:[#allocation4 + $0xb8] sm:$0xff]
    %v67 = vld [vmem:[#allocation4 + $0xc0] sm:$0xff]
    %v68 = vld [vmem:[#allocation4 + $0xc8] sm:$0xff]
    %v69 = vld [vmem:[#allocation4 + $0xd0] sm:$0xff]
    %v70 = vld [vmem:[#allocation4 + $0xd8] sm:$0xff]
    %v71 = vld [vmem:[#allocation4 + $0xe0] sm:$0xff]
    %v72 = vld [vmem:[#allocation4 + $0xe8] sm:$0xff]
    %v73 = vld [vmem:[#allocation4 + $0xf0] sm:$0xff]
    %v74 = vld [vmem:[#allocation4 + $0xf8] sm:$0xff]
    %v75 = vld [vmem:[#allocation4 + $0x100] sm:$0xff]
    %v76 = vld [vmem:[#allocation4 + $0x108] sm:$0xff]
    %v77 = vld [vmem:[#allocation4 + $0x110] sm:$0xff]
    %v78 = vld [vmem:[#allocation4 + $0x118] sm:$0xff]
    %v79 = vld [vmem:[#allocation4 + $0x120] sm:$0xff]
    %v80 = vld [vmem:[#allocation4 + $0x128] sm:$0xff]
    %v81 = vld [vmem:[#allocation4 + $0x130] sm:$0xff]
    %v82 = vld [vmem:[#allocation4 + $0x138] sm:$0xff]
    %v83 = vld [vmem:[#allocation4 + $0x140] sm:$0xff]
    %v84 = vld [vmem:[#allocation4 + $0x148] sm:$0xff]
    %v85 = vld [vmem:[#allocation4 + $0x150] sm:$0xff]
    %v86 = vld [vmem:[#allocation4 + $0x158] sm:$0xff]
    %v87 = vld [vmem:[#allocation4 + $0x160] sm:$0xff]
    %v88 = vld [vmem:[#allocation4 + $0x168] sm:$0xff]
    %v89 = vld [vmem:[#allocation4 + $0x170] sm:$0xff]
    %v90 = vld [vmem:[#allocation4 + $0x178] sm:$0xff]
    %v91 = vld [vmem:[#allocation4 + $0x180] sm:$0xff]
    %v92 = vld [vmem:[#allocation4 + $0x188] sm:$0xff]
    %v93 = vld [vmem:[#allocation4 + $0x190] sm:$0xff]
    %v94 = vld [vmem:[#allocation4 + $0x198] sm:$0xff]
    %v95 = vld [vmem:[#allocation4 + $0x1a0] sm:$0xff]
    %v96 = vld [vmem:[#allocation4 + $0x1a8] sm:$0xff]
    %v97 = vld [vmem:[#allocation4 + $0x1b0] sm:$0xff]
    %v98 = vld [vmem:[#allocation4 + $0x1b8] sm:$0xff]
    %v99 = vld [vmem:[#allocation4 + $0x1c0] sm:$0xff]
    %v100 = vld [vmem:[#allocation4 + $0x1c8] sm:$0xff]
    %v101 = vld [vmem:[#allocation4 + $0x1d0] sm:$0xff]
    %v102 = vld [vmem:[#allocation4 + $0x1d8] sm:$0xff]
    %v103 = vld [vmem:[#allocation4 + $0x1e0] sm:$0xff]
    %v104 = vld [vmem:[#allocation4 + $0x1e8] sm:$0xff]
    %v105 = vld [vmem:[#allocation4 + $0x1f0] sm:$0xff]
    %v106 = vld [vmem:[#allocation4 + $0x1f8] sm:$0xff]
    %v107 = vld [vmem:[#allocation2] sm:$0xff]
    %v108 = vld [vmem:[#allocation2 + $0x8] sm:$0xff]
    %v109 = vld [vmem:[#allocation2 + $0x10] sm:$0xff]
    %v110 = vld [vmem:[#allocation2 + $0x18] sm:$0xff]
    %v111 = vld [vmem:[#allocation2 + $0x20] sm:$0xff]
    %v112 = vld [vmem:[#allocation2 + $0x28] sm:$0xff]
    %v113 = vld [vmem:[#allocation2 + $0x30] sm:$0xff]
    %v114 = vld [vmem:[#allocation2 + $0x38] sm:$0xff]
    %v115 = vld [vmem:[#allocation2 + $0x40] sm:$0xff]
    %v116 = vld [vmem:[#allocation2 + $0x48] sm:$0xff]
    %v117 = vld [vmem:[#allocation2 + $0x50] sm:$0xff]
    %v118 = vld [vmem:[#allocation2 + $0x58] sm:$0xff]
    %v119 = vld [vmem:[#allocation2 + $0x60] sm:$0xff]
    %v120 = vld [vmem:[#allocation2 + $0x68] sm:$0xff]
    %v121 = vld [vmem:[#allocation2 + $0x70] sm:$0xff]
    %v122 = vld [vmem:[#allocation2 + $0x78] sm:$0xff]
    %v123 = vld [vmem:[#allocation2 + $0x80] sm:$0xff]
    %v124 = vld [vmem:[#allocation2 + $0x88] sm:$0xff]
    %v125 = vld [vmem:[#allocation2 + $0x90] sm:$0xff]
    %v126 = vld [vmem:[#allocation2 + $0x98] sm:$0xff]
    %v127 = vld [vmem:[#allocation2 + $0xa0] sm:$0xff]
    %v128 = vld [vmem:[#allocation2 + $0xa8] sm:$0xff]
    %v129 = vld [vmem:[#allocation2 + $0xb0] sm:$0xff]
    %v130 = vld [vmem:[#allocation2 + $0xb8] sm:$0xff]
    %v131 = vld [vmem:[#allocation2 + $0xc0] sm:$0xff]
    %v132 = vld [vmem:[#allocation2 + $0xc8] sm:$0xff]
    %v133 = vld [vmem:[#allocation2 + $0xd0] sm:$0xff]
    %v134 = vld [vmem:[#allocation2 + $0xd8] sm:$0xff]
    %v135 = vld [vmem:[#allocation2 + $0xe0] sm:$0xff]
    %v136 = vld [vmem:[#allocation2 + $0xe8] sm:$0xff]
    %v137 = vld [vmem:[#allocation2 + $0xf0] sm:$0xff]
    %v138 = vld [vmem:[#allocation2 + $0xf8] sm:$0xff]
    %v139 = vld [vmem:[#allocation2 + $0x100] sm:$0xff]
    %v140 = vld [vmem:[#allocation2 + $0x108] sm:$0xff]
    %v141 = vld [vmem:[#allocation2 + $0x110] sm:$0xff]
    %v142 = vld [vmem:[#allocation2 + $0x118] sm:$0xff]
    %v143 = vld [vmem:[#allocation2 + $0x120] sm:$0xff]
    %v144 = vld [vmem:[#allocation2 + $0x128] sm:$0xff]
    %v145 = vld [vmem:[#allocation2 + $0x130] sm:$0xff]
    %v146 = vld [vmem:[#allocation2 + $0x138] sm:$0xff]
    %v147 = vld [vmem:[#allocation2 + $0x140] sm:$0xff]
    %v148 = vld [vmem:[#allocation2 + $0x148] sm:$0xff]
    %v149 = vld [vmem:[#allocation2 + $0x150] sm:$0xff]
    %v150 = vld [vmem:[#allocation2 + $0x158] sm:$0xff]
    %v151 = vld [vmem:[#allocation2 + $0x160] sm:$0xff]
    %v152 = vld [vmem:[#allocation2 + $0x168] sm:$0xff]
    %v153 = vld [vmem:[#allocation2 + $0x170] sm:$0xff]
    %v154 = vld [vmem:[#allocation2 + $0x178] sm:$0xff]
    %v155 = vld [vmem:[#allocation2 + $0x180] sm:$0xff]
    %v156 = vld [vmem:[#allocation2 + $0x188] sm:$0xff]
    %v157 = vld [vmem:[#allocation2 + $0x190] sm:$0xff]
    %v158 = vld [vmem:[#allocation2 + $0x198] sm:$0xff]
    %v159 = vld [vmem:[#allocation2 + $0x1a0] sm:$0xff]
    %v160 = vld [vmem:[#allocation2 + $0x1a8] sm:$0xff]
    %v161 = vld [vmem:[#allocation2 + $0x1b0] sm:$0xff]
    %v162 = vld [vmem:[#allocation2 + $0x1b8] sm:$0xff]
    %v163 = vld [vmem:[#allocation2 + $0x1c0] sm:$0xff]
    %v164 = vld [vmem:[#allocation2 + $0x1c8] sm:$0xff]
    %v165 = vld [vmem:[#allocation2 + $0x1d0] sm:$0xff]
    %v166 = vld [vmem:[#allocation2 + $0x1d8] sm:$0xff]
    %v167 = vld [vmem:[#allocation2 + $0x1e0] sm:$0xff]
    %v168 = vld [vmem:[#allocation2 + $0x1e8] sm:$0xff]
    %v169 = vld [vmem:[#allocation2 + $0x1f0] sm:$0xff]
    %v170 = vld [vmem:[#allocation2 + $0x1f8] sm:$0xff]
    %v235 = vunpack.c.l.b16 %v43
    %v236 = vunpack.c.h.b16 %v43
    %v237 = vunpack.c.l.b16 %v44
    %v238 = vunpack.c.h.b16 %v44
    %v239 = vunpack.c.l.b16 %v45
    %v240 = vunpack.c.h.b16 %v45
    %v241 = vunpack.c.l.b16 %v46
    %v242 = vunpack.c.h.b16 %v46
    %v243 = vunpack.c.l.b16 %v47
    %v244 = vunpack.c.h.b16 %v47
    %v245 = vunpack.c.l.b16 %v48
    %v246 = vunpack.c.h.b16 %v48
    %v247 = vunpack.c.l.b16 %v49
    %v248 = vunpack.c.h.b16 %v49
    %v249 = vunpack.c.l.b16 %v50
    %v250 = vunpack.c.h.b16 %v50
    %v251 = vunpack.c.l.b16 %v51
    %v252 = vunpack.c.h.b16 %v51
    %v253 = vunpack.c.l.b16 %v52
    %v254 = vunpack.c.h.b16 %v52
    %v255 = vunpack.c.l.b16 %v53
    %v256 = vunpack.c.h.b16 %v53
    %v257 = vunpack.c.l.b16 %v54
    %v258 = vunpack.c.h.b16 %v54
    %v259 = vunpack.c.l.b16 %v55
    %v260 = vunpack.c.h.b16 %v55
    %v261 = vunpack.c.l.b16 %v56
    %v262 = vunpack.c.h.b16 %v56
    %v263 = vunpack.c.l.b16 %v57
    %v264 = vunpack.c.h.b16 %v57
    %v265 = vunpack.c.l.b16 %v58
    %v266 = vunpack.c.h.b16 %v58
    %v267 = vunpack.c.l.b16 %v59
    %v268 = vunpack.c.h.b16 %v59
    %v269 = vunpack.c.l.b16 %v60
    %v270 = vunpack.c.h.b16 %v60
    %v271 = vunpack.c.l.b16 %v61
    %v272 = vunpack.c.h.b16 %v61
    %v273 = vunpack.c.l.b16 %v62
    %v274 = vunpack.c.h.b16 %v62
    %v275 = vunpack.c.l.b16 %v63
    %v276 = vunpack.c.h.b16 %v63
    %v277 = vunpack.c.l.b16 %v64
    %v278 = vunpack.c.h.b16 %v64
    %v279 = vunpack.c.l.b16 %v65
    %v280 = vunpack.c.h.b16 %v65
    %v281 = vunpack.c.l.b16 %v66
    %v282 = vunpack.c.h.b16 %v66
    %v283 = vunpack.c.l.b16 %v67
    %v284 = vunpack.c.h.b16 %v67
    %v285 = vunpack.c.l.b16 %v68
    %v286 = vunpack.c.h.b16 %v68
    %v287 = vunpack.c.l.b16 %v69
    %v288 = vunpack.c.h.b16 %v69
    %v289 = vunpack.c.l.b16 %v70
    %v290 = vunpack.c.h.b16 %v70
    %v291 = vunpack.c.l.b16 %v71
    %v292 = vunpack.c.h.b16 %v71
    %v293 = vunpack.c.l.b16 %v72
    %v294 = vunpack.c.h.b16 %v72
    %v295 = vunpack.c.l.b16 %v73
    %v296 = vunpack.c.h.b16 %v73
    %v297 = vunpack.c.l.b16 %v74
    %v298 = vunpack.c.h.b16 %v74
    %v299 = vunpack.c.l.b16 %v75
    %v300 = vunpack.c.h.b16 %v75
    %v301 = vunpack.c.l.b16 %v76
    %v302 = vunpack.c.h.b16 %v76
    %v303 = vunpack.c.l.b16 %v77
    %v304 = vunpack.c.h.b16 %v77
    %v305 = vunpack.c.l.b16 %v78
    %v306 = vunpack.c.h.b16 %v78
    %v307 = vunpack.c.l.b16 %v79
    %v308 = vunpack.c.h.b16 %v79
    %v309 = vunpack.c.l.b16 %v80
    %v310 = vunpack.c.h.b16 %v80
    %v311 = vunpack.c.l.b16 %v81
    %v312 = vunpack.c.h.b16 %v81
    %v313 = vunpack.c.l.b16 %v82
    %v314 = vunpack.c.h.b16 %v82
    %v315 = vunpack.c.l.b16 %v83
    %v316 = vunpack.c.h.b16 %v83
    %v317 = vunpack.c.l.b16 %v84
    %v318 = vunpack.c.h.b16 %v84
    %v319 = vunpack.c.l.b16 %v85
    %v320 = vunpack.c.h.b16 %v85
    %v321 = vunpack.c.l.b16 %v86
    %v322 = vunpack.c.h.b16 %v86
    %v323 = vunpack.c.l.b16 %v87
    %v324 = vunpack.c.h.b16 %v87
    %v325 = vunpack.c.l.b16 %v88
    %v326 = vunpack.c.h.b16 %v88
    %v327 = vunpack.c.l.b16 %v89
    %v328 = vunpack.c.h.b16 %v89
    %v329 = vunpack.c.l.b16 %v90
    %v330 = vunpack.c.h.b16 %v90
    %v331 = vunpack.c.l.b16 %v91
    %v332 = vunpack.c.h.b16 %v91
    %v333 = vunpack.c.l.b16 %v92
    %v334 = vunpack.c.h.b16 %v92
    %v335 = vunpack.c.l.b16 %v93
    %v336 = vunpack.c.h.b16 %v93
    %v337 = vunpack.c.l.b16 %v94
    %v338 = vunpack.c.h.b16 %v94
    %v339 = vunpack.c.l.b16 %v95
    %v340 = vunpack.c.h.b16 %v95
    %v341 = vunpack.c.l.b16 %v96
    %v342 = vunpack.c.h.b16 %v96
    %v343 = vunpack.c.l.b16 %v97
    %v344 = vunpack.c.h.b16 %v97
    %v345 = vunpack.c.l.b16 %v98
    %v346 = vunpack.c.h.b16 %v98
    %v347 = vunpack.c.l.b16 %v99
    %v348 = vunpack.c.h.b16 %v99
    %v349 = vunpack.c.l.b16 %v100
    %v350 = vunpack.c.h.b16 %v100
    %v351 = vunpack.c.l.b16 %v101
    %v352 = vunpack.c.h.b16 %v101
    %v353 = vunpack.c.l.b16 %v102
    %v354 = vunpack.c.h.b16 %v102
    %v355 = vunpack.c.l.b16 %v103
    %v356 = vunpack.c.h.b16 %v103
    %v357 = vunpack.c.l.b16 %v104
    %v358 = vunpack.c.h.b16 %v104
    %v359 = vunpack.c.l.b16 %v105
    %v360 = vunpack.c.h.b16 %v105
    %v361 = vunpack.c.l.b16 %v106
    %v362 = vunpack.c.h.b16 %v106
    %v363 = vpack.c.b16 %v237, %v235
    %v364 = vpack.c.b16 %v238, %v236
    %v365 = vpack.c.b16 %v241, %v239
    %v366 = vpack.c.b16 %v242, %v240
    %v367 = vpack.c.b16 %v245, %v243
    %v368 = vpack.c.b16 %v246, %v244
    %v369 = vpack.c.b16 %v249, %v247
    %v370 = vpack.c.b16 %v250, %v248
    %v371 = vpack.c.b16 %v253, %v251
    %v372 = vpack.c.b16 %v254, %v252
    %v373 = vpack.c.b16 %v257, %v255
    %v374 = vpack.c.b16 %v258, %v256
    %v375 = vpack.c.b16 %v261, %v259
    %v376 = vpack.c.b16 %v262, %v260
    %v377 = vpack.c.b16 %v265, %v263
    %v378 = vpack.c.b16 %v266, %v264
    %v379 = vpack.c.b16 %v269, %v267
    %v380 = vpack.c.b16 %v270, %v268
    %v381 = vpack.c.b16 %v273, %v271
    %v382 = vpack.c.b16 %v274, %v272
    %v383 = vpack.c.b16 %v277, %v275
    %v384 = vpack.c.b16 %v278, %v276
    %v385 = vpack.c.b16 %v281, %v279
    %v386 = vpack.c.b16 %v282, %v280
    %v387 = vpack.c.b16 %v285, %v283
    %v388 = vpack.c.b16 %v286, %v284
    %v389 = vpack.c.b16 %v289, %v287
    %v390 = vpack.c.b16 %v290, %v288
    %v391 = vpack.c.b16 %v293, %v291
    %v392 = vpack.c.b16 %v294, %v292
    %v393 = vpack.c.b16 %v297, %v295
    %v394 = vpack.c.b16 %v298, %v296
    %v395 = vpack.c.b16 %v301, %v299
    %v396 = vpack.c.b16 %v302, %v300
    %v397 = vpack.c.b16 %v305, %v303
    %v398 = vpack.c.b16 %v306, %v304
    %v399 = vpack.c.b16 %v309, %v307
    %v400 = vpack.c.b16 %v310, %v308
    %v401 = vpack.c.b16 %v313, %v311
    %v402 = vpack.c.b16 %v314, %v312
    %v403 = vpack.c.b16 %v317, %v315
    %v404 = vpack.c.b16 %v318, %v316
    %v405 = vpack.c.b16 %v321, %v319
    %v406 = vpack.c.b16 %v322, %v320
    %v407 = vpack.c.b16 %v325, %v323
    %v408 = vpack.c.b16 %v326, %v324
    %v409 = vpack.c.b16 %v329, %v327
    %v410 = vpack.c.b16 %v330, %v328
    %v411 = vpack.c.b16 %v333, %v331
    %v412 = vpack.c.b16 %v334, %v332
    %v413 = vpack.c.b16 %v337, %v335
    %v414 = vpack.c.b16 %v338, %v336
    %v415 = vpack.c.b16 %v341, %v339
    %v416 = vpack.c.b16 %v342, %v340
    %v417 = vpack.c.b16 %v345, %v343
    %v418 = vpack.c.b16 %v346, %v344
    %v419 = vpack.c.b16 %v349, %v347
    %v420 = vpack.c.b16 %v350, %v348
    %v421 = vpack.c.b16 %v353, %v351
    %v422 = vpack.c.b16 %v354, %v352
    %v423 = vpack.c.b16 %v357, %v355
    %v424 = vpack.c.b16 %v358, %v356
    %v425 = vpack.c.b16 %v361, %v359
    %v426 = vpack.c.b16 %v362, %v360
    %v555 = vunpack.c.l.b16 %v107
    %v556 = vunpack.c.h.b16 %v107
    %v557 = vunpack.c.l.b16 %v108
    %v558 = vunpack.c.h.b16 %v108
    %v559 = vunpack.c.l.b16 %v109
    %v560 = vunpack.c.h.b16 %v109
    %v561 = vunpack.c.l.b16 %v110
    %v562 = vunpack.c.h.b16 %v110
    %v563 = vunpack.c.l.b16 %v111
    %v564 = vunpack.c.h.b16 %v111
    %v565 = vunpack.c.l.b16 %v112
    %v566 = vunpack.c.h.b16 %v112
    %v567 = vunpack.c.l.b16 %v113
    %v568 = vunpack.c.h.b16 %v113
    %v569 = vunpack.c.l.b16 %v114
    %v570 = vunpack.c.h.b16 %v114
    %v571 = vunpack.c.l.b16 %v115
    %v572 = vunpack.c.h.b16 %v115
    %v573 = vunpack.c.l.b16 %v116
    %v574 = vunpack.c.h.b16 %v116
    %v575 = vunpack.c.l.b16 %v117
    %v576 = vunpack.c.h.b16 %v117
    %v577 = vunpack.c.l.b16 %v118
    %v578 = vunpack.c.h.b16 %v118
    %v579 = vunpack.c.l.b16 %v119
    %v580 = vunpack.c.h.b16 %v119
    %v581 = vunpack.c.l.b16 %v120
    %v582 = vunpack.c.h.b16 %v120
    %v583 = vunpack.c.l.b16 %v121
    %v584 = vunpack.c.h.b16 %v121
    %v585 = vunpack.c.l.b16 %v122
    %v586 = vunpack.c.h.b16 %v122
    %v587 = vunpack.c.l.b16 %v123
    %v588 = vunpack.c.h.b16 %v123
    %v589 = vunpack.c.l.b16 %v124
    %v590 = vunpack.c.h.b16 %v124
    %v591 = vunpack.c.l.b16 %v125
    %v592 = vunpack.c.h.b16 %v125
    %v593 = vunpack.c.l.b16 %v126
    %v594 = vunpack.c.h.b16 %v126
    %v595 = vunpack.c.l.b16 %v127
    %v596 = vunpack.c.h.b16 %v127
    %v597 = vunpack.c.l.b16 %v128
    %v598 = vunpack.c.h.b16 %v128
    %v599 = vunpack.c.l.b16 %v129
    %v600 = vunpack.c.h.b16 %v129
    %v601 = vunpack.c.l.b16 %v130
    %v602 = vunpack.c.h.b16 %v130
    %v603 = vunpack.c.l.b16 %v131
    %v604 = vunpack.c.h.b16 %v131
    %v605 = vunpack.c.l.b16 %v132
    %v606 = vunpack.c.h.b16 %v132
    %v607 = vunpack.c.l.b16 %v133
    %v608 = vunpack.c.h.b16 %v133
    %v609 = vunpack.c.l.b16 %v134
    %v610 = vunpack.c.h.b16 %v134
    %v611 = vunpack.c.l.b16 %v135
    %v612 = vunpack.c.h.b16 %v135
    %v613 = vunpack.c.l.b16 %v136
    %v614 = vunpack.c.h.b16 %v136
    %v615 = vunpack.c.l.b16 %v137
    %v616 = vunpack.c.h.b16 %v137
    %v617 = vunpack.c.l.b16 %v138
    %v618 = vunpack.c.h.b16 %v138
    %v619 = vunpack.c.l.b16 %v139
    %v620 = vunpack.c.h.b16 %v139
    %v621 = vunpack.c.l.b16 %v140
    %v622 = vunpack.c.h.b16 %v140
    %v623 = vunpack.c.l.b16 %v141
    %v624 = vunpack.c.h.b16 %v141
    %v625 = vunpack.c.l.b16 %v142
    %v626 = vunpack.c.h.b16 %v142
    %v627 = vunpack.c.l.b16 %v143
    %v628 = vunpack.c.h.b16 %v143
    %v629 = vunpack.c.l.b16 %v144
    %v630 = vunpack.c.h.b16 %v144
    %v631 = vunpack.c.l.b16 %v145
    %v632 = vunpack.c.h.b16 %v145
    %v633 = vunpack.c.l.b16 %v146
    %v634 = vunpack.c.h.b16 %v146
    %v635 = vunpack.c.l.b16 %v147
    %v636 = vunpack.c.h.b16 %v147
    %v637 = vunpack.c.l.b16 %v148
    %v638 = vunpack.c.h.b16 %v148
    %v639 = vunpack.c.l.b16 %v149
    %v640 = vunpack.c.h.b16 %v149
    %v641 = vunpack.c.l.b16 %v150
    %v642 = vunpack.c.h.b16 %v150
    %v643 = vunpack.c.l.b16 %v151
    %v644 = vunpack.c.h.b16 %v151
    %v645 = vunpack.c.l.b16 %v152
    %v646 = vunpack.c.h.b16 %v152
    %v647 = vunpack.c.l.b16 %v153
    %v648 = vunpack.c.h.b16 %v153
    %v649 = vunpack.c.l.b16 %v154
    %v650 = vunpack.c.h.b16 %v154
    %v651 = vunpack.c.l.b16 %v155
    %v652 = vunpack.c.h.b16 %v155
    %v653 = vunpack.c.l.b16 %v156
    %v654 = vunpack.c.h.b16 %v156
    %v655 = vunpack.c.l.b16 %v157
    %v656 = vunpack.c.h.b16 %v157
    %v657 = vunpack.c.l.b16 %v158
    %v658 = vunpack.c.h.b16 %v158
    %v659 = vunpack.c.l.b16 %v159
    %v660 = vunpack.c.h.b16 %v159
    %v661 = vunpack.c.l.b16 %v160
    %v662 = vunpack.c.h.b16 %v160
    %v663 = vunpack.c.l.b16 %v161
    %v664 = vunpack.c.h.b16 %v161
    %v665 = vunpack.c.l.b16 %v162
    %v666 = vunpack.c.h.b16 %v162
    %v667 = vunpack.c.l.b16 %v163
    %v668 = vunpack.c.h.b16 %v163
    %v669 = vunpack.c.l.b16 %v164
    %v670 = vunpack.c.h.b16 %v164
    %v671 = vunpack.c.l.b16 %v165
    %v672 = vunpack.c.h.b16 %v165
    %v673 = vunpack.c.l.b16 %v166
    %v674 = vunpack.c.h.b16 %v166
    %v675 = vunpack.c.l.b16 %v167
    %v676 = vunpack.c.h.b16 %v167
    %v677 = vunpack.c.l.b16 %v168
    %v678 = vunpack.c.h.b16 %v168
    %v679 = vunpack.c.l.b16 %v169
    %v680 = vunpack.c.h.b16 %v169
    %v681 = vunpack.c.l.b16 %v170
    %v682 = vunpack.c.h.b16 %v170
    %v683 = vpack.c.b16 %v559, %v555
    %v684 = vpack.c.b16 %v560, %v556
    %v685 = vpack.c.b16 %v561, %v557
    %v686 = vpack.c.b16 %v562, %v558
    %v687 = vpack.c.b16 %v567, %v563
    %v688 = vpack.c.b16 %v568, %v564
    %v689 = vpack.c.b16 %v569, %v565
    %v690 = vpack.c.b16 %v570, %v566
    %v691 = vpack.c.b16 %v575, %v571
    %v692 = vpack.c.b16 %v576, %v572
    %v693 = vpack.c.b16 %v577, %v573
    %v694 = vpack.c.b16 %v578, %v574
    %v695 = vpack.c.b16 %v583, %v579
    %v696 = vpack.c.b16 %v584, %v580
    %v697 = vpack.c.b16 %v585, %v581
    %v698 = vpack.c.b16 %v586, %v582
    %v699 = vpack.c.b16 %v591, %v587
    %v700 = vpack.c.b16 %v592, %v588
    %v701 = vpack.c.b16 %v593, %v589
    %v702 = vpack.c.b16 %v594, %v590
    %v703 = vpack.c.b16 %v599, %v595
    %v704 = vpack.c.b16 %v600, %v596
    %v705 = vpack.c.b16 %v601, %v597
    %v706 = vpack.c.b16 %v602, %v598
    %v707 = vpack.c.b16 %v607, %v603
    %v708 = vpack.c.b16 %v608, %v604
    %v709 = vpack.c.b16 %v609, %v605
    %v710 = vpack.c.b16 %v610, %v606
    %v711 = vpack.c.b16 %v615, %v611
    %v712 = vpack.c.b16 %v616, %v612
    %v713 = vpack.c.b16 %v617, %v613
    %v714 = vpack.c.b16 %v618, %v614
    %v715 = vpack.c.b16 %v623, %v619
    %v716 = vpack.c.b16 %v624, %v620
    %v717 = vpack.c.b16 %v625, %v621
    %v718 = vpack.c.b16 %v626, %v622
    %v719 = vpack.c.b16 %v631, %v627
    %v720 = vpack.c.b16 %v632, %v628
    %v721 = vpack.c.b16 %v633, %v629
    %v722 = vpack.c.b16 %v634, %v630
    %v723 = vpack.c.b16 %v639, %v635
    %v724 = vpack.c.b16 %v640, %v636
    %v725 = vpack.c.b16 %v641, %v637
    %v726 = vpack.c.b16 %v642, %v638
    %v727 = vpack.c.b16 %v647, %v643
    %v728 = vpack.c.b16 %v648, %v644
    %v729 = vpack.c.b16 %v649, %v645
    %v730 = vpack.c.b16 %v650, %v646
    %v731 = vpack.c.b16 %v655, %v651
    %v732 = vpack.c.b16 %v656, %v652
    %v733 = vpack.c.b16 %v657, %v653
    %v734 = vpack.c.b16 %v658, %v654
    %v735 = vpack.c.b16 %v663, %v659
    %v736 = vpack.c.b16 %v664, %v660
    %v737 = vpack.c.b16 %v665, %v661
    %v738 = vpack.c.b16 %v666, %v662
    %v739 = vpack.c.b16 %v671, %v667
    %v740 = vpack.c.b16 %v672, %v668
    %v741 = vpack.c.b16 %v673, %v669
    %v742 = vpack.c.b16 %v674, %v670
    %v743 = vpack.c.b16 %v679, %v675
    %v744 = vpack.c.b16 %v680, %v676
    %v745 = vpack.c.b16 %v681, %v677
    %v746 = vpack.c.b16 %v682, %v678
    %811 = vmatpush.bf16.msra.mxu0 %v711
    %812 = vmatpush.bf16.msra.mxu0 %v707
    %813 = vmatpush.bf16.msra.mxu0 %v703
    %814 = vmatpush.bf16.msra.mxu0 %v699
    %815 = vmatpush.bf16.msra.mxu0 %v695
    %816 = vmatpush.bf16.msra.mxu0 %v691
    %817 = vmatpush.bf16.msra.mxu0 %v687
    %818 = vmatpush.bf16.msra.mxu0 %v683
    %819 = vmatmul.bf16.gmra.mxu0 %v363
    %v820 = vpop.f32.mrf.mxu0
    %v821 = vadd.f32 0.0, %v820
    %v822 = vpop.f32.mrf.mxu0
    %v823 = vadd.f32 0.0, %v822
    %824 = vmatmul.bf16.gmra.mxu0 %v365
    %v825 = vpop.f32.mrf.mxu0
    %v826 = vadd.f32 0.0, %v825
    %v827 = vpop.f32.mrf.mxu0
    %v828 = vadd.f32 0.0, %v827
    %829 = vmatmul.bf16.gmra.mxu0 %v367
    %v830 = vpop.f32.mrf.mxu0
    %v831 = vadd.f32 0.0, %v830
    %v832 = vpop.f32.mrf.mxu0
    %v833 = vadd.f32 0.0, %v832
    %834 = vmatmul.bf16.gmra.mxu0 %v369
    %v835 = vpop.f32.mrf.mxu0
    %v836 = vadd.f32 0.0, %v835
    %v837 = vpop.f32.mrf.mxu0
    %v838 = vadd.f32 0.0, %v837
    %839 = vmatmul.bf16.gmra.mxu0 %v371
    %v840 = vpop.f32.mrf.mxu0
    %v841 = vadd.f32 0.0, %v840
    %v842 = vpop.f32.mrf.mxu0
    %v843 = vadd.f32 0.0, %v842
    %844 = vmatmul.bf16.gmra.mxu0 %v373
    %v845 = vpop.f32.mrf.mxu0
    %v846 = vadd.f32 0.0, %v845
    %v847 = vpop.f32.mrf.mxu0
    %v848 = vadd.f32 0.0, %v847
    %849 = vmatmul.bf16.gmra.mxu0 %v375
    %v850 = vpop.f32.mrf.mxu0
    %v851 = vadd.f32 0.0, %v850
    %v852 = vpop.f32.mrf.mxu0
    %v853 = vadd.f32 0.0, %v852
    %854 = vmatmul.bf16.gmra.mxu0 %v377
    %v855 = vpop.f32.mrf.mxu0
    %v856 = vadd.f32 0.0, %v855
    %v857 = vpop.f32.mrf.mxu0
    %v858 = vadd.f32 0.0, %v857
    %859 = vmatmul.bf16.gmra.mxu0 %v379
    %v860 = vpop.f32.mrf.mxu0
    %v861 = vadd.f32 0.0, %v860
    %v862 = vpop.f32.mrf.mxu0
    %v863 = vadd.f32 0.0, %v862
    %864 = vmatmul.bf16.gmra.mxu0 %v381
    %v865 = vpop.f32.mrf.mxu0
    %v866 = vadd.f32 0.0, %v865
    %v867 = vpop.f32.mrf.mxu0
    %v868 = vadd.f32 0.0, %v867
    %869 = vmatmul.bf16.gmra.mxu0 %v383
    %v870 = vpop.f32.mrf.mxu0
    %v871 = vadd.f32 0.0, %v870
    %v872 = vpop.f32.mrf.mxu0
    %v873 = vadd.f32 0.0, %v872
    %874 = vmatmul.bf16.gmra.mxu0 %v385
    %v875 = vpop.f32.mrf.mxu0
    %v876 = vadd.f32 0.0, %v875
    %v877 = vpop.f32.mrf.mxu0
    %v878 = vadd.f32 0.0, %v877
    %879 = vmatmul.bf16.gmra.mxu0 %v387
    %v880 = vpop.f32.mrf.mxu0
    %v881 = vadd.f32 0.0, %v880
    %v882 = vpop.f32.mrf.mxu0
    %v883 = vadd.f32 0.0, %v882
    %884 = vmatmul.bf16.gmra.mxu0 %v389
    %v885 = vpop.f32.mrf.mxu0
    %v886 = vadd.f32 0.0, %v885
    %v887 = vpop.f32.mrf.mxu0
    %v888 = vadd.f32 0.0, %v887
    %889 = vmatmul.bf16.gmra.mxu0 %v391
    %v890 = vpop.f32.mrf.mxu0
    %v891 = vadd.f32 0.0, %v890
    %v892 = vpop.f32.mrf.mxu0
    %v893 = vadd.f32 0.0, %v892
    %894 = vmatmul.bf16.gmra.mxu0 %v393
    %v895 = vpop.f32.mrf.mxu0
    %v896 = vadd.f32 0.0, %v895
    %v897 = vpop.f32.mrf.mxu0
    %v898 = vadd.f32 0.0, %v897
    %899 = vmatmul.bf16.gmra.mxu0 %v395
    %v900 = vpop.f32.mrf.mxu0
    %v901 = vadd.f32 0.0, %v900
    %v902 = vpop.f32.mrf.mxu0
    %v903 = vadd.f32 0.0, %v902
    %904 = vmatmul.bf16.gmra.mxu0 %v397
    %v905 = vpop.f32.mrf.mxu0
    %v906 = vadd.f32 0.0, %v905
    %v907 = vpop.f32.mrf.mxu0
    %v908 = vadd.f32 0.0, %v907
    %909 = vmatmul.bf16.gmra.mxu0 %v399
    %v910 = vpop.f32.mrf.mxu0
    %v911 = vadd.f32 0.0, %v910
    %v912 = vpop.f32.mrf.mxu0
    %v913 = vadd.f32 0.0, %v912
    %914 = vmatmul.bf16.gmra.mxu0 %v401
    %v915 = vpop.f32.mrf.mxu0
    %v916 = vadd.f32 0.0, %v915
    %v917 = vpop.f32.mrf.mxu0
    %v918 = vadd.f32 0.0, %v917
    %919 = vmatmul.bf16.gmra.mxu0 %v403
    %v920 = vpop.f32.mrf.mxu0
    %v921 = vadd.f32 0.0, %v920
    %v922 = vpop.f32.mrf.mxu0
    %v923 = vadd.f32 0.0, %v922
    %924 = vmatmul.bf16.gmra.mxu0 %v405
    %v925 = vpop.f32.mrf.mxu0
    %v926 = vadd.f32 0.0, %v925
    %v927 = vpop.f32.mrf.mxu0
    %v928 = vadd.f32 0.0, %v927
    %929 = vmatmul.bf16.gmra.mxu0 %v407
    %v930 = vpop.f32.mrf.mxu0
    %v931 = vadd.f32 0.0, %v930
    %v932 = vpop.f32.mrf.mxu0
    %v933 = vadd.f32 0.0, %v932
    %934 = vmatmul.bf16.gmra.mxu0 %v409
    %v935 = vpop.f32.mrf.mxu0
    %v936 = vadd.f32 0.0, %v935
    %v937 = vpop.f32.mrf.mxu0
    %v938 = vadd.f32 0.0, %v937
    %939 = vmatmul.bf16.gmra.mxu0 %v411
    %v940 = vpop.f32.mrf.mxu0
    %v941 = vadd.f32 0.0, %v940
    %v942 = vpop.f32.mrf.mxu0
    %v943 = vadd.f32 0.0, %v942
    %944 = vmatmul.bf16.gmra.mxu0 %v413
    %v945 = vpop.f32.mrf.mxu0
    %v946 = vadd.f32 0.0, %v945
    %v947 = vpop.f32.mrf.mxu0
    %v948 = vadd.f32 0.0, %v947
    %949 = vmatmul.bf16.gmra.mxu0 %v415
    %v950 = vpop.f32.mrf.mxu0
    %v951 = vadd.f32 0.0, %v950
    %v952 = vpop.f32.mrf.mxu0
    %v953 = vadd.f32 0.0, %v952
    %954 = vmatmul.bf16.gmra.mxu0 %v417
    %v955 = vpop.f32.mrf.mxu0
    %v956 = vadd.f32 0.0, %v955
    %v957 = vpop.f32.mrf.mxu0
    %v958 = vadd.f32 0.0, %v957
    %959 = vmatmul.bf16.gmra.mxu0 %v419
    %v960 = vpop.f32.mrf.mxu0
    %v961 = vadd.f32 0.0, %v960
    %v962 = vpop.f32.mrf.mxu0
    %v963 = vadd.f32 0.0, %v962
    %964 = vmatmul.bf16.gmra.mxu0 %v421
    %v965 = vpop.f32.mrf.mxu0
    %v966 = vadd.f32 0.0, %v965
    %v967 = vpop.f32.mrf.mxu0
    %v968 = vadd.f32 0.0, %v967
    %969 = vmatmul.bf16.gmra.mxu0 %v423
    %v970 = vpop.f32.mrf.mxu0
    %v971 = vadd.f32 0.0, %v970
    %v972 = vpop.f32.mrf.mxu0
    %v973 = vadd.f32 0.0, %v972
    %974 = vmatmul.bf16.gmra.mxu0 %v425
    %v975 = vpop.f32.mrf.mxu0
    %v976 = vadd.f32 0.0, %v975
    %v977 = vpop.f32.mrf.mxu0
    %v978 = vadd.f32 0.0, %v977
    %979 = vdwg.mxu0
    %980 = vmatpush.bf16.msra.mxu0 %v743
    %981 = vmatpush.bf16.msra.mxu0 %v739
    %982 = vmatpush.bf16.msra.mxu0 %v735
    %983 = vmatpush.bf16.msra.mxu0 %v731
    %984 = vmatpush.bf16.msra.mxu0 %v727
    %985 = vmatpush.bf16.msra.mxu0 %v723
    %986 = vmatpush.bf16.msra.mxu0 %v719
    %987 = vmatpush.bf16.msra.mxu0 %v715
    %988 = vmatmul.bf16.gmra.mxu0 %v364
    %v989 = vpop.f32.mrf.mxu0
    %v990 = vadd.f32 %v821, %v989
    %v991 = vpop.f32.mrf.mxu0
    %v992 = vadd.f32 %v823, %v991
    %993 = vmatmul.bf16.gmra.mxu0 %v366
    %v994 = vpop.f32.mrf.mxu0
    %v995 = vadd.f32 %v826, %v994
    %v996 = vpop.f32.mrf.mxu0
    %v997 = vadd.f32 %v828, %v996
    %998 = vmatmul.bf16.gmra.mxu0 %v368
    %v999 = vpop.f32.mrf.mxu0
    %v1000 = vadd.f32 %v831, %v999
    %v1001 = vpop.f32.mrf.mxu0
    %v1002 = vadd.f32 %v833, %v1001
    %1003 = vmatmul.bf16.gmra.mxu0 %v370
    %v1004 = vpop.f32.mrf.mxu0
    %v1005 = vadd.f32 %v836, %v1004
    %v1006 = vpop.f32.mrf.mxu0
    %v1007 = vadd.f32 %v838, %v1006
    %1008 = vmatmul.bf16.gmra.mxu0 %v372
    %v1009 = vpop.f32.mrf.mxu0
    %v1010 = vadd.f32 %v841, %v1009
    %v1011 = vpop.f32.mrf.mxu0
    %v1012 = vadd.f32 %v843, %v1011
    %1013 = vmatmul.bf16.gmra.mxu0 %v374
    %v1014 = vpop.f32.mrf.mxu0
    %v1015 = vadd.f32 %v846, %v1014
    %v1016 = vpop.f32.mrf.mxu0
    %v1017 = vadd.f32 %v848, %v1016
    %1018 = vmatmul.bf16.gmra.mxu0 %v376
    %v1019 = vpop.f32.mrf.mxu0
    %v1020 = vadd.f32 %v851, %v1019
    %v1021 = vpop.f32.mrf.mxu0
    %v1022 = vadd.f32 %v853, %v1021
    %1023 = vmatmul.bf16.gmra.mxu0 %v378
    %v1024 = vpop.f32.mrf.mxu0
    %v1025 = vadd.f32 %v856, %v1024
    %v1026 = vpop.f32.mrf.mxu0
    %v1027 = vadd.f32 %v858, %v1026
    %1028 = vmatmul.bf16.gmra.mxu0 %v380
    %v1029 = vpop.f32.mrf.mxu0
    %v1030 = vadd.f32 %v861, %v1029
    %v1031 = vpop.f32.mrf.mxu0
    %v1032 = vadd.f32 %v863, %v1031
    %1033 = vmatmul.bf16.gmra.mxu0 %v382
    %v1034 = vpop.f32.mrf.mxu0
    %v1035 = vadd.f32 %v866, %v1034
    %v1036 = vpop.f32.mrf.mxu0
    %v1037 = vadd.f32 %v868, %v1036
    %1038 = vmatmul.bf16.gmra.mxu0 %v384
    %v1039 = vpop.f32.mrf.mxu0
    %v1040 = vadd.f32 %v871, %v1039
    %v1041 = vpop.f32.mrf.mxu0
    %v1042 = vadd.f32 %v873, %v1041
    %1043 = vmatmul.bf16.gmra.mxu0 %v386
    %v1044 = vpop.f32.mrf.mxu0
    %v1045 = vadd.f32 %v876, %v1044
    %v1046 = vpop.f32.mrf.mxu0
    %v1047 = vadd.f32 %v878, %v1046
    %1048 = vmatmul.bf16.gmra.mxu0 %v388
    %v1049 = vpop.f32.mrf.mxu0
    %v1050 = vadd.f32 %v881, %v1049
    %v1051 = vpop.f32.mrf.mxu0
    %v1052 = vadd.f32 %v883, %v1051
    %1053 = vmatmul.bf16.gmra.mxu0 %v390
    %v1054 = vpop.f32.mrf.mxu0
    %v1055 = vadd.f32 %v886, %v1054
    %v1056 = vpop.f32.mrf.mxu0
    %v1057 = vadd.f32 %v888, %v1056
    %1058 = vmatmul.bf16.gmra.mxu0 %v392
    %v1059 = vpop.f32.mrf.mxu0
    %v1060 = vadd.f32 %v891, %v1059
    %v1061 = vpop.f32.mrf.mxu0
    %v1062 = vadd.f32 %v893, %v1061
    %1063 = vmatmul.bf16.gmra.mxu0 %v394
    %v1064 = vpop.f32.mrf.mxu0
    %v1065 = vadd.f32 %v896, %v1064
    %v1066 = vpop.f32.mrf.mxu0
    %v1067 = vadd.f32 %v898, %v1066
    %1068 = vmatmul.bf16.gmra.mxu0 %v396
    %v1069 = vpop.f32.mrf.mxu0
    %v1070 = vadd.f32 %v901, %v1069
    %v1071 = vpop.f32.mrf.mxu0
    %v1072 = vadd.f32 %v903, %v1071
    %1073 = vmatmul.bf16.gmra.mxu0 %v398
    %v1074 = vpop.f32.mrf.mxu0
    %v1075 = vadd.f32 %v906, %v1074
    %v1076 = vpop.f32.mrf.mxu0
    %v1077 = vadd.f32 %v908, %v1076
    %1078 = vmatmul.bf16.gmra.mxu0 %v400
    %v1079 = vpop.f32.mrf.mxu0
    %v1080 = vadd.f32 %v911, %v1079
    %v1081 = vpop.f32.mrf.mxu0
    %v1082 = vadd.f32 %v913, %v1081
    %1083 = vmatmul.bf16.gmra.mxu0 %v402
    %v1084 = vpop.f32.mrf.mxu0
    %v1085 = vadd.f32 %v916, %v1084
    %v1086 = vpop.f32.mrf.mxu0
    %v1087 = vadd.f32 %v918, %v1086
    %1088 = vmatmul.bf16.gmra.mxu0 %v404
    %v1089 = vpop.f32.mrf.mxu0
    %v1090 = vadd.f32 %v921, %v1089
    %v1091 = vpop.f32.mrf.mxu0
    %v1092 = vadd.f32 %v923, %v1091
    %1093 = vmatmul.bf16.gmra.mxu0 %v406
    %v1094 = vpop.f32.mrf.mxu0
    %v1095 = vadd.f32 %v926, %v1094
    %v1096 = vpop.f32.mrf.mxu0
    %v1097 = vadd.f32 %v928, %v1096
    %1098 = vmatmul.bf16.gmra.mxu0 %v408
    %v1099 = vpop.f32.mrf.mxu0
    %v1100 = vadd.f32 %v931, %v1099
    %v1101 = vpop.f32.mrf.mxu0
    %v1102 = vadd.f32 %v933, %v1101
    %1103 = vmatmul.bf16.gmra.mxu0 %v410
    %v1104 = vpop.f32.mrf.mxu0
    %v1105 = vadd.f32 %v936, %v1104
    %v1106 = vpop.f32.mrf.mxu0
    %v1107 = vadd.f32 %v938, %v1106
    %1108 = vmatmul.bf16.gmra.mxu0 %v412
    %v1109 = vpop.f32.mrf.mxu0
    %v1110 = vadd.f32 %v941, %v1109
    %v1111 = vpop.f32.mrf.mxu0
    %v1112 = vadd.f32 %v943, %v1111
    %1113 = vmatmul.bf16.gmra.mxu0 %v414
    %v1114 = vpop.f32.mrf.mxu0
    %v1115 = vadd.f32 %v946, %v1114
    %v1116 = vpop.f32.mrf.mxu0
    %v1117 = vadd.f32 %v948, %v1116
    %1118 = vmatmul.bf16.gmra.mxu0 %v416
    %v1119 = vpop.f32.mrf.mxu0
    %v1120 = vadd.f32 %v951, %v1119
    %v1121 = vpop.f32.mrf.mxu0
    %v1122 = vadd.f32 %v953, %v1121
    %1123 = vmatmul.bf16.gmra.mxu0 %v418
    %v1124 = vpop.f32.mrf.mxu0
    %v1125 = vadd.f32 %v956, %v1124
    %v1126 = vpop.f32.mrf.mxu0
    %v1127 = vadd.f32 %v958, %v1126
    %1128 = vmatmul.bf16.gmra.mxu0 %v420
    %v1129 = vpop.f32.mrf.mxu0
    %v1130 = vadd.f32 %v961, %v1129
    %v1131 = vpop.f32.mrf.mxu0
    %v1132 = vadd.f32 %v963, %v1131
    %1133 = vmatmul.bf16.gmra.mxu0 %v422
    %v1134 = vpop.f32.mrf.mxu0
    %v1135 = vadd.f32 %v966, %v1134
    %v1136 = vpop.f32.mrf.mxu0
    %v1137 = vadd.f32 %v968, %v1136
    %1138 = vmatmul.bf16.gmra.mxu0 %v424
    %v1139 = vpop.f32.mrf.mxu0
    %v1140 = vadd.f32 %v971, %v1139
    %v1141 = vpop.f32.mrf.mxu0
    %v1142 = vadd.f32 %v973, %v1141
    %1143 = vmatmul.bf16.gmra.mxu0 %v426
    %v1144 = vpop.f32.mrf.mxu0
    %v1145 = vadd.f32 %v976, %v1144
    %v1146 = vpop.f32.mrf.mxu0
    %v1147 = vadd.f32 %v978, %v1146
    %1148 = vdwg.mxu0
    %1149 = vmatpush.bf16.msra.mxu0 %v712
    %1150 = vmatpush.bf16.msra.mxu0 %v708
    %1151 = vmatpush.bf16.msra.mxu0 %v704
    %1152 = vmatpush.bf16.msra.mxu0 %v700
    %1153 = vmatpush.bf16.msra.mxu0 %v696
    %1154 = vmatpush.bf16.msra.mxu0 %v692
    %1155 = vmatpush.bf16.msra.mxu0 %v688
    %1156 = vmatpush.bf16.msra.mxu0 %v684
    %1157 = vmatmul.bf16.gmra.mxu0 %v363
    %v1158 = vpop.f32.mrf.mxu0
    %v1159 = vadd.f32 0.0, %v1158
    %v1160 = vpop.f32.mrf.mxu0
    %v1161 = vadd.f32 0.0, %v1160
    %1162 = vmatmul.bf16.gmra.mxu0 %v365
    %v1163 = vpop.f32.mrf.mxu0
    %v1164 = vadd.f32 0.0, %v1163
    %v1165 = vpop.f32.mrf.mxu0
    %v1166 = vadd.f32 0.0, %v1165
    %1167 = vmatmul.bf16.gmra.mxu0 %v367
    %v1168 = vpop.f32.mrf.mxu0
    %v1169 = vadd.f32 0.0, %v1168
    %v1170 = vpop.f32.mrf.mxu0
    %v1171 = vadd.f32 0.0, %v1170
    %1172 = vmatmul.bf16.gmra.mxu0 %v369
    %v1173 = vpop.f32.mrf.mxu0
    %v1174 = vadd.f32 0.0, %v1173
    %v1175 = vpop.f32.mrf.mxu0
    %v1176 = vadd.f32 0.0, %v1175
    %1177 = vmatmul.bf16.gmra.mxu0 %v371
    %v1178 = vpop.f32.mrf.mxu0
    %v1179 = vadd.f32 0.0, %v1178
    %v1180 = vpop.f32.mrf.mxu0
    %v1181 = vadd.f32 0.0, %v1180
    %1182 = vmatmul.bf16.gmra.mxu0 %v373
    %v1183 = vpop.f32.mrf.mxu0
    %v1184 = vadd.f32 0.0, %v1183
    %v1185 = vpop.f32.mrf.mxu0
    %v1186 = vadd.f32 0.0, %v1185
    %1187 = vmatmul.bf16.gmra.mxu0 %v375
    %v1188 = vpop.f32.mrf.mxu0
    %v1189 = vadd.f32 0.0, %v1188
    %v1190 = vpop.f32.mrf.mxu0
    %v1191 = vadd.f32 0.0, %v1190
    %1192 = vmatmul.bf16.gmra.mxu0 %v377
    %v1193 = vpop.f32.mrf.mxu0
    %v1194 = vadd.f32 0.0, %v1193
    %v1195 = vpop.f32.mrf.mxu0
    %v1196 = vadd.f32 0.0, %v1195
    %1197 = vmatmul.bf16.gmra.mxu0 %v379
    %v1198 = vpop.f32.mrf.mxu0
    %v1199 = vadd.f32 0.0, %v1198
    %v1200 = vpop.f32.mrf.mxu0
    %v1201 = vadd.f32 0.0, %v1200
    %1202 = vmatmul.bf16.gmra.mxu0 %v381
    %v1203 = vpop.f32.mrf.mxu0
    %v1204 = vadd.f32 0.0, %v1203
    %v1205 = vpop.f32.mrf.mxu0
    %v1206 = vadd.f32 0.0, %v1205
    %1207 = vmatmul.bf16.gmra.mxu0 %v383
    %v1208 = vpop.f32.mrf.mxu0
    %v1209 = vadd.f32 0.0, %v1208
    %v1210 = vpop.f32.mrf.mxu0
    %v1211 = vadd.f32 0.0, %v1210
    %1212 = vmatmul.bf16.gmra.mxu0 %v385
    %v1213 = vpop.f32.mrf.mxu0
    %v1214 = vadd.f32 0.0, %v1213
    %v1215 = vpop.f32.mrf.mxu0
    %v1216 = vadd.f32 0.0, %v1215
    %1217 = vmatmul.bf16.gmra.mxu0 %v387
    %v1218 = vpop.f32.mrf.mxu0
    %v1219 = vadd.f32 0.0, %v1218
    %v1220 = vpop.f32.mrf.mxu0
    %v1221 = vadd.f32 0.0, %v1220
    %1222 = vmatmul.bf16.gmra.mxu0 %v389
    %v1223 = vpop.f32.mrf.mxu0
    %v1224 = vadd.f32 0.0, %v1223
    %v1225 = vpop.f32.mrf.mxu0
    %v1226 = vadd.f32 0.0, %v1225
    %1227 = vmatmul.bf16.gmra.mxu0 %v391
    %v1228 = vpop.f32.mrf.mxu0
    %v1229 = vadd.f32 0.0, %v1228
    %v1230 = vpop.f32.mrf.mxu0
    %v1231 = vadd.f32 0.0, %v1230
    %1232 = vmatmul.bf16.gmra.mxu0 %v393
    %v1233 = vpop.f32.mrf.mxu0
    %v1234 = vadd.f32 0.0, %v1233
    %v1235 = vpop.f32.mrf.mxu0
    %v1236 = vadd.f32 0.0, %v1235
    %1237 = vmatmul.bf16.gmra.mxu0 %v395
    %v1238 = vpop.f32.mrf.mxu0
    %v1239 = vadd.f32 0.0, %v1238
    %v1240 = vpop.f32.mrf.mxu0
    %v1241 = vadd.f32 0.0, %v1240
    %1242 = vmatmul.bf16.gmra.mxu0 %v397
    %v1243 = vpop.f32.mrf.mxu0
    %v1244 = vadd.f32 0.0, %v1243
    %v1245 = vpop.f32.mrf.mxu0
    %v1246 = vadd.f32 0.0, %v1245
    %1247 = vmatmul.bf16.gmra.mxu0 %v399
    %v1248 = vpop.f32.mrf.mxu0
    %v1249 = vadd.f32 0.0, %v1248
    %v1250 = vpop.f32.mrf.mxu0
    %v1251 = vadd.f32 0.0, %v1250
    %1252 = vmatmul.bf16.gmra.mxu0 %v401
    %v1253 = vpop.f32.mrf.mxu0
    %v1254 = vadd.f32 0.0, %v1253
    %v1255 = vpop.f32.mrf.mxu0
    %v1256 = vadd.f32 0.0, %v1255
    %1257 = vmatmul.bf16.gmra.mxu0 %v403
    %v1258 = vpop.f32.mrf.mxu0
    %v1259 = vadd.f32 0.0, %v1258
    %v1260 = vpop.f32.mrf.mxu0
    %v1261 = vadd.f32 0.0, %v1260
    %1262 = vmatmul.bf16.gmra.mxu0 %v405
    %v1263 = vpop.f32.mrf.mxu0
    %v1264 = vadd.f32 0.0, %v1263
    %v1265 = vpop.f32.mrf.mxu0
    %v1266 = vadd.f32 0.0, %v1265
    %1267 = vmatmul.bf16.gmra.mxu0 %v407
    %v1268 = vpop.f32.mrf.mxu0
    %v1269 = vadd.f32 0.0, %v1268
    %v1270 = vpop.f32.mrf.mxu0
    %v1271 = vadd.f32 0.0, %v1270
    %1272 = vmatmul.bf16.gmra.mxu0 %v409
    %v1273 = vpop.f32.mrf.mxu0
    %v1274 = vadd.f32 0.0, %v1273
    %v1275 = vpop.f32.mrf.mxu0
    %v1276 = vadd.f32 0.0, %v1275
    %1277 = vmatmul.bf16.gmra.mxu0 %v411
    %v1278 = vpop.f32.mrf.mxu0
    %v1279 = vadd.f32 0.0, %v1278
    %v1280 = vpop.f32.mrf.mxu0
    %v1281 = vadd.f32 0.0, %v1280
    %1282 = vmatmul.bf16.gmra.mxu0 %v413
    %v1283 = vpop.f32.mrf.mxu0
    %v1284 = vadd.f32 0.0, %v1283
    %v1285 = vpop.f32.mrf.mxu0
    %v1286 = vadd.f32 0.0, %v1285
    %1287 = vmatmul.bf16.gmra.mxu0 %v415
    %v1288 = vpop.f32.mrf.mxu0
    %v1289 = vadd.f32 0.0, %v1288
    %v1290 = vpop.f32.mrf.mxu0
    %v1291 = vadd.f32 0.0, %v1290
    %1292 = vmatmul.bf16.gmra.mxu0 %v417
    %v1293 = vpop.f32.mrf.mxu0
    %v1294 = vadd.f32 0.0, %v1293
    %v1295 = vpop.f32.mrf.mxu0
    %v1296 = vadd.f32 0.0, %v1295
    %1297 = vmatmul.bf16.gmra.mxu0 %v419
    %v1298 = vpop.f32.mrf.mxu0
    %v1299 = vadd.f32 0.0, %v1298
    %v1300 = vpop.f32.mrf.mxu0
    %v1301 = vadd.f32 0.0, %v1300
    %1302 = vmatmul.bf16.gmra.mxu0 %v421
    %v1303 = vpop.f32.mrf.mxu0
    %v1304 = vadd.f32 0.0, %v1303
    %v1305 = vpop.f32.mrf.mxu0
    %v1306 = vadd.f32 0.0, %v1305
    %1307 = vmatmul.bf16.gmra.mxu0 %v423
    %v1308 = vpop.f32.mrf.mxu0
    %v1309 = vadd.f32 0.0, %v1308
    %v1310 = vpop.f32.mrf.mxu0
    %v1311 = vadd.f32 0.0, %v1310
    %1312 = vmatmul.bf16.gmra.mxu0 %v425
    %v1313 = vpop.f32.mrf.mxu0
    %v1314 = vadd.f32 0.0, %v1313
    %v1315 = vpop.f32.mrf.mxu0
    %v1316 = vadd.f32 0.0, %v1315
    %1317 = vdwg.mxu0
    %1318 = vmatpush.bf16.msra.mxu0 %v744
    %1319 = vmatpush.bf16.msra.mxu0 %v740
    %1320 = vmatpush.bf16.msra.mxu0 %v736
    %1321 = vmatpush.bf16.msra.mxu0 %v732
    %1322 = vmatpush.bf16.msra.mxu0 %v728
    %1323 = vmatpush.bf16.msra.mxu0 %v724
    %1324 = vmatpush.bf16.msra.mxu0 %v720
    %1325 = vmatpush.bf16.msra.mxu0 %v716
    %1326 = vmatmul.bf16.gmra.mxu0 %v364
    %v1327 = vpop.f32.mrf.mxu0
    %v1328 = vadd.f32 %v1159, %v1327
    %v1329 = vpop.f32.mrf.mxu0
    %v1330 = vadd.f32 %v1161, %v1329
    %1331 = vmatmul.bf16.gmra.mxu0 %v366
    %v1332 = vpop.f32.mrf.mxu0
    %v1333 = vadd.f32 %v1164, %v1332
    %v1334 = vpop.f32.mrf.mxu0
    %v1335 = vadd.f32 %v1166, %v1334
    %1336 = vmatmul.bf16.gmra.mxu0 %v368
    %v1337 = vpop.f32.mrf.mxu0
    %v1338 = vadd.f32 %v1169, %v1337
    %v1339 = vpop.f32.mrf.mxu0
    %v1340 = vadd.f32 %v1171, %v1339
    %1341 = vmatmul.bf16.gmra.mxu0 %v370
    %v1342 = vpop.f32.mrf.mxu0
    %v1343 = vadd.f32 %v1174, %v1342
    %v1344 = vpop.f32.mrf.mxu0
    %v1345 = vadd.f32 %v1176, %v1344
    %1346 = vmatmul.bf16.gmra.mxu0 %v372
    %v1347 = vpop.f32.mrf.mxu0
    %v1348 = vadd.f32 %v1179, %v1347
    %v1349 = vpop.f32.mrf.mxu0
    %v1350 = vadd.f32 %v1181, %v1349
    %1351 = vmatmul.bf16.gmra.mxu0 %v374
    %v1352 = vpop.f32.mrf.mxu0
    %v1353 = vadd.f32 %v1184, %v1352
    %v1354 = vpop.f32.mrf.mxu0
    %v1355 = vadd.f32 %v1186, %v1354
    %1356 = vmatmul.bf16.gmra.mxu0 %v376
    %v1357 = vpop.f32.mrf.mxu0
    %v1358 = vadd.f32 %v1189, %v1357
    %v1359 = vpop.f32.mrf.mxu0
    %v1360 = vadd.f32 %v1191, %v1359
    %1361 = vmatmul.bf16.gmra.mxu0 %v378
    %v1362 = vpop.f32.mrf.mxu0
    %v1363 = vadd.f32 %v1194, %v1362
    %v1364 = vpop.f32.mrf.mxu0
    %v1365 = vadd.f32 %v1196, %v1364
    %1366 = vmatmul.bf16.gmra.mxu0 %v380
    %v1367 = vpop.f32.mrf.mxu0
    %v1368 = vadd.f32 %v1199, %v1367
    %v1369 = vpop.f32.mrf.mxu0
    %v1370 = vadd.f32 %v1201, %v1369
    %1371 = vmatmul.bf16.gmra.mxu0 %v382
    %v1372 = vpop.f32.mrf.mxu0
    %v1373 = vadd.f32 %v1204, %v1372
    %v1374 = vpop.f32.mrf.mxu0
    %v1375 = vadd.f32 %v1206, %v1374
    %1376 = vmatmul.bf16.gmra.mxu0 %v384
    %v1377 = vpop.f32.mrf.mxu0
    %v1378 = vadd.f32 %v1209, %v1377
    %v1379 = vpop.f32.mrf.mxu0
    %v1380 = vadd.f32 %v1211, %v1379
    %1381 = vmatmul.bf16.gmra.mxu0 %v386
    %v1382 = vpop.f32.mrf.mxu0
    %v1383 = vadd.f32 %v1214, %v1382
    %v1384 = vpop.f32.mrf.mxu0
    %v1385 = vadd.f32 %v1216, %v1384
    %1386 = vmatmul.bf16.gmra.mxu0 %v388
    %v1387 = vpop.f32.mrf.mxu0
    %v1388 = vadd.f32 %v1219, %v1387
    %v1389 = vpop.f32.mrf.mxu0
    %v1390 = vadd.f32 %v1221, %v1389
    %1391 = vmatmul.bf16.gmra.mxu0 %v390
    %v1392 = vpop.f32.mrf.mxu0
    %v1393 = vadd.f32 %v1224, %v1392
    %v1394 = vpop.f32.mrf.mxu0
    %v1395 = vadd.f32 %v1226, %v1394
    %1396 = vmatmul.bf16.gmra.mxu0 %v392
    %v1397 = vpop.f32.mrf.mxu0
    %v1398 = vadd.f32 %v1229, %v1397
    %v1399 = vpop.f32.mrf.mxu0
    %v1400 = vadd.f32 %v1231, %v1399
    %1401 = vmatmul.bf16.gmra.mxu0 %v394
    %v1402 = vpop.f32.mrf.mxu0
    %v1403 = vadd.f32 %v1234, %v1402
    %v1404 = vpop.f32.mrf.mxu0
    %v1405 = vadd.f32 %v1236, %v1404
    %1406 = vmatmul.bf16.gmra.mxu0 %v396
    %v1407 = vpop.f32.mrf.mxu0
    %v1408 = vadd.f32 %v1239, %v1407
    %v1409 = vpop.f32.mrf.mxu0
    %v1410 = vadd.f32 %v1241, %v1409
    %1411 = vmatmul.bf16.gmra.mxu0 %v398
    %v1412 = vpop.f32.mrf.mxu0
    %v1413 = vadd.f32 %v1244, %v1412
    %v1414 = vpop.f32.mrf.mxu0
    %v1415 = vadd.f32 %v1246, %v1414
    %1416 = vmatmul.bf16.gmra.mxu0 %v400
    %v1417 = vpop.f32.mrf.mxu0
    %v1418 = vadd.f32 %v1249, %v1417
    %v1419 = vpop.f32.mrf.mxu0
    %v1420 = vadd.f32 %v1251, %v1419
    %1421 = vmatmul.bf16.gmra.mxu0 %v402
    %v1422 = vpop.f32.mrf.mxu0
    %v1423 = vadd.f32 %v1254, %v1422
    %v1424 = vpop.f32.mrf.mxu0
    %v1425 = vadd.f32 %v1256, %v1424
    %1426 = vmatmul.bf16.gmra.mxu0 %v404
    %v1427 = vpop.f32.mrf.mxu0
    %v1428 = vadd.f32 %v1259, %v1427
    %v1429 = vpop.f32.mrf.mxu0
    %v1430 = vadd.f32 %v1261, %v1429
    %1431 = vmatmul.bf16.gmra.mxu0 %v406
    %v1432 = vpop.f32.mrf.mxu0
    %v1433 = vadd.f32 %v1264, %v1432
    %v1434 = vpop.f32.mrf.mxu0
    %v1435 = vadd.f32 %v1266, %v1434
    %1436 = vmatmul.bf16.gmra.mxu0 %v408
    %v1437 = vpop.f32.mrf.mxu0
    %v1438 = vadd.f32 %v1269, %v1437
    %v1439 = vpop.f32.mrf.mxu0
    %v1440 = vadd.f32 %v1271, %v1439
    %1441 = vmatmul.bf16.gmra.mxu0 %v410
    %v1442 = vpop.f32.mrf.mxu0
    %v1443 = vadd.f32 %v1274, %v1442
    %v1444 = vpop.f32.mrf.mxu0
    %v1445 = vadd.f32 %v1276, %v1444
    %1446 = vmatmul.bf16.gmra.mxu0 %v412
    %v1447 = vpop.f32.mrf.mxu0
    %v1448 = vadd.f32 %v1279, %v1447
    %v1449 = vpop.f32.mrf.mxu0
    %v1450 = vadd.f32 %v1281, %v1449
    %1451 = vmatmul.bf16.gmra.mxu0 %v414
    %v1452 = vpop.f32.mrf.mxu0
    %v1453 = vadd.f32 %v1284, %v1452
    %v1454 = vpop.f32.mrf.mxu0
    %v1455 = vadd.f32 %v1286, %v1454
    %1456 = vmatmul.bf16.gmra.mxu0 %v416
    %v1457 = vpop.f32.mrf.mxu0
    %v1458 = vadd.f32 %v1289, %v1457
    %v1459 = vpop.f32.mrf.mxu0
    %v1460 = vadd.f32 %v1291, %v1459
    %1461 = vmatmul.bf16.gmra.mxu0 %v418
    %v1462 = vpop.f32.mrf.mxu0
    %v1463 = vadd.f32 %v1294, %v1462
    %v1464 = vpop.f32.mrf.mxu0
    %v1465 = vadd.f32 %v1296, %v1464
    %1466 = vmatmul.bf16.gmra.mxu0 %v420
    %v1467 = vpop.f32.mrf.mxu0
    %v1468 = vadd.f32 %v1299, %v1467
    %v1469 = vpop.f32.mrf.mxu0
    %v1470 = vadd.f32 %v1301, %v1469
    %1471 = vmatmul.bf16.gmra.mxu0 %v422
    %v1472 = vpop.f32.mrf.mxu0
    %v1473 = vadd.f32 %v1304, %v1472
    %v1474 = vpop.f32.mrf.mxu0
    %v1475 = vadd.f32 %v1306, %v1474
    %1476 = vmatmul.bf16.gmra.mxu0 %v424
    %v1477 = vpop.f32.mrf.mxu0
    %v1478 = vadd.f32 %v1309, %v1477
    %v1479 = vpop.f32.mrf.mxu0
    %v1480 = vadd.f32 %v1311, %v1479
    %1481 = vmatmul.bf16.gmra.mxu0 %v426
    %v1482 = vpop.f32.mrf.mxu0
    %v1483 = vadd.f32 %v1314, %v1482
    %v1484 = vpop.f32.mrf.mxu0
    %v1485 = vadd.f32 %v1316, %v1484
    %1486 = vdwg.mxu0
    %1487 = vmatpush.bf16.msra.mxu0 %v713
    %1488 = vmatpush.bf16.msra.mxu0 %v709
    %1489 = vmatpush.bf16.msra.mxu0 %v705
    %1490 = vmatpush.bf16.msra.mxu0 %v701
    %1491 = vmatpush.bf16.msra.mxu0 %v697
    %1492 = vmatpush.bf16.msra.mxu0 %v693
    %1493 = vmatpush.bf16.msra.mxu0 %v689
    %1494 = vmatpush.bf16.msra.mxu0 %v685
    %1495 = vmatmul.bf16.gmra.mxu0 %v363
    %v1496 = vpop.f32.mrf.mxu0
    %v1497 = vadd.f32 0.0, %v1496
    %v1498 = vpop.f32.mrf.mxu0
    %v1499 = vadd.f32 0.0, %v1498
    %1500 = vmatmul.bf16.gmra.mxu0 %v365
    %v1501 = vpop.f32.mrf.mxu0
    %v1502 = vadd.f32 0.0, %v1501
    %v1503 = vpop.f32.mrf.mxu0
    %v1504 = vadd.f32 0.0, %v1503
    %1505 = vmatmul.bf16.gmra.mxu0 %v367
    %v1506 = vpop.f32.mrf.mxu0
    %v1507 = vadd.f32 0.0, %v1506
    %v1508 = vpop.f32.mrf.mxu0
    %v1509 = vadd.f32 0.0, %v1508
    %1510 = vmatmul.bf16.gmra.mxu0 %v369
    %v1511 = vpop.f32.mrf.mxu0
    %v1512 = vadd.f32 0.0, %v1511
    %v1513 = vpop.f32.mrf.mxu0
    %v1514 = vadd.f32 0.0, %v1513
    %1515 = vmatmul.bf16.gmra.mxu0 %v371
    %v1516 = vpop.f32.mrf.mxu0
    %v1517 = vadd.f32 0.0, %v1516
    %v1518 = vpop.f32.mrf.mxu0
    %v1519 = vadd.f32 0.0, %v1518
    %1520 = vmatmul.bf16.gmra.mxu0 %v373
    %v1521 = vpop.f32.mrf.mxu0
    %v1522 = vadd.f32 0.0, %v1521
    %v1523 = vpop.f32.mrf.mxu0
    %v1524 = vadd.f32 0.0, %v1523
    %1525 = vmatmul.bf16.gmra.mxu0 %v375
    %v1526 = vpop.f32.mrf.mxu0
    %v1527 = vadd.f32 0.0, %v1526
    %v1528 = vpop.f32.mrf.mxu0
    %v1529 = vadd.f32 0.0, %v1528
    %1530 = vmatmul.bf16.gmra.mxu0 %v377
    %v1531 = vpop.f32.mrf.mxu0
    %v1532 = vadd.f32 0.0, %v1531
    %v1533 = vpop.f32.mrf.mxu0
    %v1534 = vadd.f32 0.0, %v1533
    %1535 = vmatmul.bf16.gmra.mxu0 %v379
    %v1536 = vpop.f32.mrf.mxu0
    %v1537 = vadd.f32 0.0, %v1536
    %v1538 = vpop.f32.mrf.mxu0
    %v1539 = vadd.f32 0.0, %v1538
    %1540 = vmatmul.bf16.gmra.mxu0 %v381
    %v1541 = vpop.f32.mrf.mxu0
    %v1542 = vadd.f32 0.0, %v1541
    %v1543 = vpop.f32.mrf.mxu0
    %v1544 = vadd.f32 0.0, %v1543
    %1545 = vmatmul.bf16.gmra.mxu0 %v383
    %v1546 = vpop.f32.mrf.mxu0
    %v1547 = vadd.f32 0.0, %v1546
    %v1548 = vpop.f32.mrf.mxu0
    %v1549 = vadd.f32 0.0, %v1548
    %1550 = vmatmul.bf16.gmra.mxu0 %v385
    %v1551 = vpop.f32.mrf.mxu0
    %v1552 = vadd.f32 0.0, %v1551
    %v1553 = vpop.f32.mrf.mxu0
    %v1554 = vadd.f32 0.0, %v1553
    %1555 = vmatmul.bf16.gmra.mxu0 %v387
    %v1556 = vpop.f32.mrf.mxu0
    %v1557 = vadd.f32 0.0, %v1556
    %v1558 = vpop.f32.mrf.mxu0
    %v1559 = vadd.f32 0.0, %v1558
    %1560 = vmatmul.bf16.gmra.mxu0 %v389
    %v1561 = vpop.f32.mrf.mxu0
    %v1562 = vadd.f32 0.0, %v1561
    %v1563 = vpop.f32.mrf.mxu0
    %v1564 = vadd.f32 0.0, %v1563
    %1565 = vmatmul.bf16.gmra.mxu0 %v391
    %v1566 = vpop.f32.mrf.mxu0
    %v1567 = vadd.f32 0.0, %v1566
    %v1568 = vpop.f32.mrf.mxu0
    %v1569 = vadd.f32 0.0, %v1568
    %1570 = vmatmul.bf16.gmra.mxu0 %v393
    %v1571 = vpop.f32.mrf.mxu0
    %v1572 = vadd.f32 0.0, %v1571
    %v1573 = vpop.f32.mrf.mxu0
    %v1574 = vadd.f32 0.0, %v1573
    %1575 = vmatmul.bf16.gmra.mxu0 %v395
    %v1576 = vpop.f32.mrf.mxu0
    %v1577 = vadd.f32 0.0, %v1576
    %v1578 = vpop.f32.mrf.mxu0
    %v1579 = vadd.f32 0.0, %v1578
    %1580 = vmatmul.bf16.gmra.mxu0 %v397
    %v1581 = vpop.f32.mrf.mxu0
    %v1582 = vadd.f32 0.0, %v1581
    %v1583 = vpop.f32.mrf.mxu0
    %v1584 = vadd.f32 0.0, %v1583
    %1585 = vmatmul.bf16.gmra.mxu0 %v399
    %v1586 = vpop.f32.mrf.mxu0
    %v1587 = vadd.f32 0.0, %v1586
    %v1588 = vpop.f32.mrf.mxu0
    %v1589 = vadd.f32 0.0, %v1588
    %1590 = vmatmul.bf16.gmra.mxu0 %v401
    %v1591 = vpop.f32.mrf.mxu0
    %v1592 = vadd.f32 0.0, %v1591
    %v1593 = vpop.f32.mrf.mxu0
    %v1594 = vadd.f32 0.0, %v1593
    %1595 = vmatmul.bf16.gmra.mxu0 %v403
    %v1596 = vpop.f32.mrf.mxu0
    %v1597 = vadd.f32 0.0, %v1596
    %v1598 = vpop.f32.mrf.mxu0
    %v1599 = vadd.f32 0.0, %v1598
    %1600 = vmatmul.bf16.gmra.mxu0 %v405
    %v1601 = vpop.f32.mrf.mxu0
    %v1602 = vadd.f32 0.0, %v1601
    %v1603 = vpop.f32.mrf.mxu0
    %v1604 = vadd.f32 0.0, %v1603
    %1605 = vmatmul.bf16.gmra.mxu0 %v407
    %v1606 = vpop.f32.mrf.mxu0
    %v1607 = vadd.f32 0.0, %v1606
    %v1608 = vpop.f32.mrf.mxu0
    %v1609 = vadd.f32 0.0, %v1608
    %1610 = vmatmul.bf16.gmra.mxu0 %v409
    %v1611 = vpop.f32.mrf.mxu0
    %v1612 = vadd.f32 0.0, %v1611
    %v1613 = vpop.f32.mrf.mxu0
    %v1614 = vadd.f32 0.0, %v1613
    %1615 = vmatmul.bf16.gmra.mxu0 %v411
    %v1616 = vpop.f32.mrf.mxu0
    %v1617 = vadd.f32 0.0, %v1616
    %v1618 = vpop.f32.mrf.mxu0
    %v1619 = vadd.f32 0.0, %v1618
    %1620 = vmatmul.bf16.gmra.mxu0 %v413
    %v1621 = vpop.f32.mrf.mxu0
    %v1622 = vadd.f32 0.0, %v1621
    %v1623 = vpop.f32.mrf.mxu0
    %v1624 = vadd.f32 0.0, %v1623
    %1625 = vmatmul.bf16.gmra.mxu0 %v415
    %v1626 = vpop.f32.mrf.mxu0
    %v1627 = vadd.f32 0.0, %v1626
    %v1628 = vpop.f32.mrf.mxu0
    %v1629 = vadd.f32 0.0, %v1628
    %1630 = vmatmul.bf16.gmra.mxu0 %v417
    %v1631 = vpop.f32.mrf.mxu0
    %v1632 = vadd.f32 0.0, %v1631
    %v1633 = vpop.f32.mrf.mxu0
    %v1634 = vadd.f32 0.0, %v1633
    %1635 = vmatmul.bf16.gmra.mxu0 %v419
    %v1636 = vpop.f32.mrf.mxu0
    %v1637 = vadd.f32 0.0, %v1636
    %v1638 = vpop.f32.mrf.mxu0
    %v1639 = vadd.f32 0.0, %v1638
    %1640 = vmatmul.bf16.gmra.mxu0 %v421
    %v1641 = vpop.f32.mrf.mxu0
    %v1642 = vadd.f32 0.0, %v1641
    %v1643 = vpop.f32.mrf.mxu0
    %v1644 = vadd.f32 0.0, %v1643
    %1645 = vmatmul.bf16.gmra.mxu0 %v423
    %v1646 = vpop.f32.mrf.mxu0
    %v1647 = vadd.f32 0.0, %v1646
    %v1648 = vpop.f32.mrf.mxu0
    %v1649 = vadd.f32 0.0, %v1648
    %1650 = vmatmul.bf16.gmra.mxu0 %v425
    %v1651 = vpop.f32.mrf.mxu0
    %v1652 = vadd.f32 0.0, %v1651
    %v1653 = vpop.f32.mrf.mxu0
    %v1654 = vadd.f32 0.0, %v1653
    %1655 = vdwg.mxu0
    %1656 = vmatpush.bf16.msra.mxu0 %v745
    %1657 = vmatpush.bf16.msra.mxu0 %v741
    %1658 = vmatpush.bf16.msra.mxu0 %v737
    %1659 = vmatpush.bf16.msra.mxu0 %v733
    %1660 = vmatpush.bf16.msra.mxu0 %v729
    %1661 = vmatpush.bf16.msra.mxu0 %v725
    %1662 = vmatpush.bf16.msra.mxu0 %v721
    %1663 = vmatpush.bf16.msra.mxu0 %v717
    %1664 = vmatmul.bf16.gmra.mxu0 %v364
    %v1665 = vpop.f32.mrf.mxu0
    %v1666 = vadd.f32 %v1497, %v1665
    %v1667 = vpop.f32.mrf.mxu0
    %v1668 = vadd.f32 %v1499, %v1667
    %1669 = vmatmul.bf16.gmra.mxu0 %v366
    %v1670 = vpop.f32.mrf.mxu0
    %v1671 = vadd.f32 %v1502, %v1670
    %v1672 = vpop.f32.mrf.mxu0
    %v1673 = vadd.f32 %v1504, %v1672
    %1674 = vmatmul.bf16.gmra.mxu0 %v368
    %v1675 = vpop.f32.mrf.mxu0
    %v1676 = vadd.f32 %v1507, %v1675
    %v1677 = vpop.f32.mrf.mxu0
    %v1678 = vadd.f32 %v1509, %v1677
    %1679 = vmatmul.bf16.gmra.mxu0 %v370
    %v1680 = vpop.f32.mrf.mxu0
    %v1681 = vadd.f32 %v1512, %v1680
    %v1682 = vpop.f32.mrf.mxu0
    %v1683 = vadd.f32 %v1514, %v1682
    %1684 = vmatmul.bf16.gmra.mxu0 %v372
    %v1685 = vpop.f32.mrf.mxu0
    %v1686 = vadd.f32 %v1517, %v1685
    %v1687 = vpop.f32.mrf.mxu0
    %v1688 = vadd.f32 %v1519, %v1687
    %1689 = vmatmul.bf16.gmra.mxu0 %v374
    %v1690 = vpop.f32.mrf.mxu0
    %v1691 = vadd.f32 %v1522, %v1690
    %v1692 = vpop.f32.mrf.mxu0
    %v1693 = vadd.f32 %v1524, %v1692
    %1694 = vmatmul.bf16.gmra.mxu0 %v376
    %v1695 = vpop.f32.mrf.mxu0
    %v1696 = vadd.f32 %v1527, %v1695
    %v1697 = vpop.f32.mrf.mxu0
    %v1698 = vadd.f32 %v1529, %v1697
    %1699 = vmatmul.bf16.gmra.mxu0 %v378
    %v1700 = vpop.f32.mrf.mxu0
    %v1701 = vadd.f32 %v1532, %v1700
    %v1702 = vpop.f32.mrf.mxu0
    %v1703 = vadd.f32 %v1534, %v1702
    %1704 = vmatmul.bf16.gmra.mxu0 %v380
    %v1705 = vpop.f32.mrf.mxu0
    %v1706 = vadd.f32 %v1537, %v1705
    %v1707 = vpop.f32.mrf.mxu0
    %v1708 = vadd.f32 %v1539, %v1707
    %1709 = vmatmul.bf16.gmra.mxu0 %v382
    %v1710 = vpop.f32.mrf.mxu0
    %v1711 = vadd.f32 %v1542, %v1710
    %v1712 = vpop.f32.mrf.mxu0
    %v1713 = vadd.f32 %v1544, %v1712
    %1714 = vmatmul.bf16.gmra.mxu0 %v384
    %v1715 = vpop.f32.mrf.mxu0
    %v1716 = vadd.f32 %v1547, %v1715
    %v1717 = vpop.f32.mrf.mxu0
    %v1718 = vadd.f32 %v1549, %v1717
    %1719 = vmatmul.bf16.gmra.mxu0 %v386
    %v1720 = vpop.f32.mrf.mxu0
    %v1721 = vadd.f32 %v1552, %v1720
    %v1722 = vpop.f32.mrf.mxu0
    %v1723 = vadd.f32 %v1554, %v1722
    %1724 = vmatmul.bf16.gmra.mxu0 %v388
    %v1725 = vpop.f32.mrf.mxu0
    %v1726 = vadd.f32 %v1557, %v1725
    %v1727 = vpop.f32.mrf.mxu0
    %v1728 = vadd.f32 %v1559, %v1727
    %1729 = vmatmul.bf16.gmra.mxu0 %v390
    %v1730 = vpop.f32.mrf.mxu0
    %v1731 = vadd.f32 %v1562, %v1730
    %v1732 = vpop.f32.mrf.mxu0
    %v1733 = vadd.f32 %v1564, %v1732
    %1734 = vmatmul.bf16.gmra.mxu0 %v392
    %v1735 = vpop.f32.mrf.mxu0
    %v1736 = vadd.f32 %v1567, %v1735
    %v1737 = vpop.f32.mrf.mxu0
    %v1738 = vadd.f32 %v1569, %v1737
    %1739 = vmatmul.bf16.gmra.mxu0 %v394
    %v1740 = vpop.f32.mrf.mxu0
    %v1741 = vadd.f32 %v1572, %v1740
    %v1742 = vpop.f32.mrf.mxu0
    %v1743 = vadd.f32 %v1574, %v1742
    %1744 = vmatmul.bf16.gmra.mxu0 %v396
    %v1745 = vpop.f32.mrf.mxu0
    %v1746 = vadd.f32 %v1577, %v1745
    %v1747 = vpop.f32.mrf.mxu0
    %v1748 = vadd.f32 %v1579, %v1747
    %1749 = vmatmul.bf16.gmra.mxu0 %v398
    %v1750 = vpop.f32.mrf.mxu0
    %v1751 = vadd.f32 %v1582, %v1750
    %v1752 = vpop.f32.mrf.mxu0
    %v1753 = vadd.f32 %v1584, %v1752
    %1754 = vmatmul.bf16.gmra.mxu0 %v400
    %v1755 = vpop.f32.mrf.mxu0
    %v1756 = vadd.f32 %v1587, %v1755
    %v1757 = vpop.f32.mrf.mxu0
    %v1758 = vadd.f32 %v1589, %v1757
    %1759 = vmatmul.bf16.gmra.mxu0 %v402
    %v1760 = vpop.f32.mrf.mxu0
    %v1761 = vadd.f32 %v1592, %v1760
    %v1762 = vpop.f32.mrf.mxu0
    %v1763 = vadd.f32 %v1594, %v1762
    %1764 = vmatmul.bf16.gmra.mxu0 %v404
    %v1765 = vpop.f32.mrf.mxu0
    %v1766 = vadd.f32 %v1597, %v1765
    %v1767 = vpop.f32.mrf.mxu0
    %v1768 = vadd.f32 %v1599, %v1767
    %1769 = vmatmul.bf16.gmra.mxu0 %v406
    %v1770 = vpop.f32.mrf.mxu0
    %v1771 = vadd.f32 %v1602, %v1770
    %v1772 = vpop.f32.mrf.mxu0
    %v1773 = vadd.f32 %v1604, %v1772
    %1774 = vmatmul.bf16.gmra.mxu0 %v408
    %v1775 = vpop.f32.mrf.mxu0
    %v1776 = vadd.f32 %v1607, %v1775
    %v1777 = vpop.f32.mrf.mxu0
    %v1778 = vadd.f32 %v1609, %v1777
    %1779 = vmatmul.bf16.gmra.mxu0 %v410
    %v1780 = vpop.f32.mrf.mxu0
    %v1781 = vadd.f32 %v1612, %v1780
    %v1782 = vpop.f32.mrf.mxu0
    %v1783 = vadd.f32 %v1614, %v1782
    %1784 = vmatmul.bf16.gmra.mxu0 %v412
    %v1785 = vpop.f32.mrf.mxu0
    %v1786 = vadd.f32 %v1617, %v1785
    %v1787 = vpop.f32.mrf.mxu0
    %v1788 = vadd.f32 %v1619, %v1787
    %1789 = vmatmul.bf16.gmra.mxu0 %v414
    %v1790 = vpop.f32.mrf.mxu0
    %v1791 = vadd.f32 %v1622, %v1790
    %v1792 = vpop.f32.mrf.mxu0
    %v1793 = vadd.f32 %v1624, %v1792
    %1794 = vmatmul.bf16.gmra.mxu0 %v416
    %v1795 = vpop.f32.mrf.mxu0
    %v1796 = vadd.f32 %v1627, %v1795
    %v1797 = vpop.f32.mrf.mxu0
    %v1798 = vadd.f32 %v1629, %v1797
    %1799 = vmatmul.bf16.gmra.mxu0 %v418
    %v1800 = vpop.f32.mrf.mxu0
    %v1801 = vadd.f32 %v1632, %v1800
    %v1802 = vpop.f32.mrf.mxu0
    %v1803 = vadd.f32 %v1634, %v1802
    %1804 = vmatmul.bf16.gmra.mxu0 %v420
    %v1805 = vpop.f32.mrf.mxu0
    %v1806 = vadd.f32 %v1637, %v1805
    %v1807 = vpop.f32.mrf.mxu0
    %v1808 = vadd.f32 %v1639, %v1807
    %1809 = vmatmul.bf16.gmra.mxu0 %v422
    %v1810 = vpop.f32.mrf.mxu0
    %v1811 = vadd.f32 %v1642, %v1810
    %v1812 = vpop.f32.mrf.mxu0
    %v1813 = vadd.f32 %v1644, %v1812
    %1814 = vmatmul.bf16.gmra.mxu0 %v424
    %v1815 = vpop.f32.mrf.mxu0
    %v1816 = vadd.f32 %v1647, %v1815
    %v1817 = vpop.f32.mrf.mxu0
    %v1818 = vadd.f32 %v1649, %v1817
    %1819 = vmatmul.bf16.gmra.mxu0 %v426
    %v1820 = vpop.f32.mrf.mxu0
    %v1821 = vadd.f32 %v1652, %v1820
    %v1822 = vpop.f32.mrf.mxu0
    %v1823 = vadd.f32 %v1654, %v1822
    %1824 = vdwg.mxu0
    %1825 = vmatpush.bf16.msra.mxu0 %v714
    %1826 = vmatpush.bf16.msra.mxu0 %v710
    %1827 = vmatpush.bf16.msra.mxu0 %v706
    %1828 = vmatpush.bf16.msra.mxu0 %v702
    %1829 = vmatpush.bf16.msra.mxu0 %v698
    %1830 = vmatpush.bf16.msra.mxu0 %v694
    %1831 = vmatpush.bf16.msra.mxu0 %v690
    %1832 = vmatpush.bf16.msra.mxu0 %v686
    %1833 = vmatmul.bf16.gmra.mxu0 %v363
    %v1834 = vpop.f32.mrf.mxu0
    %v1835 = vadd.f32 0.0, %v1834
    %v1836 = vpop.f32.mrf.mxu0
    %v1837 = vadd.f32 0.0, %v1836
    %1838 = vmatmul.bf16.gmra.mxu0 %v365
    %v1839 = vpop.f32.mrf.mxu0
    %v1840 = vadd.f32 0.0, %v1839
    %v1841 = vpop.f32.mrf.mxu0
    %v1842 = vadd.f32 0.0, %v1841
    %1843 = vmatmul.bf16.gmra.mxu0 %v367
    %v1844 = vpop.f32.mrf.mxu0
    %v1845 = vadd.f32 0.0, %v1844
    %v1846 = vpop.f32.mrf.mxu0
    %v1847 = vadd.f32 0.0, %v1846
    %1848 = vmatmul.bf16.gmra.mxu0 %v369
    %v1849 = vpop.f32.mrf.mxu0
    %v1850 = vadd.f32 0.0, %v1849
    %v1851 = vpop.f32.mrf.mxu0
    %v1852 = vadd.f32 0.0, %v1851
    %1853 = vmatmul.bf16.gmra.mxu0 %v371
    %v1854 = vpop.f32.mrf.mxu0
    %v1855 = vadd.f32 0.0, %v1854
    %v1856 = vpop.f32.mrf.mxu0
    %v1857 = vadd.f32 0.0, %v1856
    %1858 = vmatmul.bf16.gmra.mxu0 %v373
    %v1859 = vpop.f32.mrf.mxu0
    %v1860 = vadd.f32 0.0, %v1859
    %v1861 = vpop.f32.mrf.mxu0
    %v1862 = vadd.f32 0.0, %v1861
    %1863 = vmatmul.bf16.gmra.mxu0 %v375
    %v1864 = vpop.f32.mrf.mxu0
    %v1865 = vadd.f32 0.0, %v1864
    %v1866 = vpop.f32.mrf.mxu0
    %v1867 = vadd.f32 0.0, %v1866
    %1868 = vmatmul.bf16.gmra.mxu0 %v377
    %v1869 = vpop.f32.mrf.mxu0
    %v1870 = vadd.f32 0.0, %v1869
    %v1871 = vpop.f32.mrf.mxu0
    %v1872 = vadd.f32 0.0, %v1871
    %1873 = vmatmul.bf16.gmra.mxu0 %v379
    %v1874 = vpop.f32.mrf.mxu0
    %v1875 = vadd.f32 0.0, %v1874
    %v1876 = vpop.f32.mrf.mxu0
    %v1877 = vadd.f32 0.0, %v1876
    %1878 = vmatmul.bf16.gmra.mxu0 %v381
    %v1879 = vpop.f32.mrf.mxu0
    %v1880 = vadd.f32 0.0, %v1879
    %v1881 = vpop.f32.mrf.mxu0
    %v1882 = vadd.f32 0.0, %v1881
    %1883 = vmatmul.bf16.gmra.mxu0 %v383
    %v1884 = vpop.f32.mrf.mxu0
    %v1885 = vadd.f32 0.0, %v1884
    %v1886 = vpop.f32.mrf.mxu0
    %v1887 = vadd.f32 0.0, %v1886
    %1888 = vmatmul.bf16.gmra.mxu0 %v385
    %v1889 = vpop.f32.mrf.mxu0
    %v1890 = vadd.f32 0.0, %v1889
    %v1891 = vpop.f32.mrf.mxu0
    %v1892 = vadd.f32 0.0, %v1891
    %1893 = vmatmul.bf16.gmra.mxu0 %v387
    %v1894 = vpop.f32.mrf.mxu0
    %v1895 = vadd.f32 0.0, %v1894
    %v1896 = vpop.f32.mrf.mxu0
    %v1897 = vadd.f32 0.0, %v1896
    %1898 = vmatmul.bf16.gmra.mxu0 %v389
    %v1899 = vpop.f32.mrf.mxu0
    %v1900 = vadd.f32 0.0, %v1899
    %v1901 = vpop.f32.mrf.mxu0
    %v1902 = vadd.f32 0.0, %v1901
    %1903 = vmatmul.bf16.gmra.mxu0 %v391
    %v1904 = vpop.f32.mrf.mxu0
    %v1905 = vadd.f32 0.0, %v1904
    %v1906 = vpop.f32.mrf.mxu0
    %v1907 = vadd.f32 0.0, %v1906
    %1908 = vmatmul.bf16.gmra.mxu0 %v393
    %v1909 = vpop.f32.mrf.mxu0
    %v1910 = vadd.f32 0.0, %v1909
    %v1911 = vpop.f32.mrf.mxu0
    %v1912 = vadd.f32 0.0, %v1911
    %1913 = vmatmul.bf16.gmra.mxu0 %v395
    %v1914 = vpop.f32.mrf.mxu0
    %v1915 = vadd.f32 0.0, %v1914
    %v1916 = vpop.f32.mrf.mxu0
    %v1917 = vadd.f32 0.0, %v1916
    %1918 = vmatmul.bf16.gmra.mxu0 %v397
    %v1919 = vpop.f32.mrf.mxu0
    %v1920 = vadd.f32 0.0, %v1919
    %v1921 = vpop.f32.mrf.mxu0
    %v1922 = vadd.f32 0.0, %v1921
    %1923 = vmatmul.bf16.gmra.mxu0 %v399
    %v1924 = vpop.f32.mrf.mxu0
    %v1925 = vadd.f32 0.0, %v1924
    %v1926 = vpop.f32.mrf.mxu0
    %v1927 = vadd.f32 0.0, %v1926
    %1928 = vmatmul.bf16.gmra.mxu0 %v401
    %v1929 = vpop.f32.mrf.mxu0
    %v1930 = vadd.f32 0.0, %v1929
    %v1931 = vpop.f32.mrf.mxu0
    %v1932 = vadd.f32 0.0, %v1931
    %1933 = vmatmul.bf16.gmra.mxu0 %v403
    %v1934 = vpop.f32.mrf.mxu0
    %v1935 = vadd.f32 0.0, %v1934
    %v1936 = vpop.f32.mrf.mxu0
    %v1937 = vadd.f32 0.0, %v1936
    %1938 = vmatmul.bf16.gmra.mxu0 %v405
    %v1939 = vpop.f32.mrf.mxu0
    %v1940 = vadd.f32 0.0, %v1939
    %v1941 = vpop.f32.mrf.mxu0
    %v1942 = vadd.f32 0.0, %v1941
    %1943 = vmatmul.bf16.gmra.mxu0 %v407
    %v1944 = vpop.f32.mrf.mxu0
    %v1945 = vadd.f32 0.0, %v1944
    %v1946 = vpop.f32.mrf.mxu0
    %v1947 = vadd.f32 0.0, %v1946
    %1948 = vmatmul.bf16.gmra.mxu0 %v409
    %v1949 = vpop.f32.mrf.mxu0
    %v1950 = vadd.f32 0.0, %v1949
    %v1951 = vpop.f32.mrf.mxu0
    %v1952 = vadd.f32 0.0, %v1951
    %1953 = vmatmul.bf16.gmra.mxu0 %v411
    %v1954 = vpop.f32.mrf.mxu0
    %v1955 = vadd.f32 0.0, %v1954
    %v1956 = vpop.f32.mrf.mxu0
    %v1957 = vadd.f32 0.0, %v1956
    %1958 = vmatmul.bf16.gmra.mxu0 %v413
    %v1959 = vpop.f32.mrf.mxu0
    %v1960 = vadd.f32 0.0, %v1959
    %v1961 = vpop.f32.mrf.mxu0
    %v1962 = vadd.f32 0.0, %v1961
    %1963 = vmatmul.bf16.gmra.mxu0 %v415
    %v1964 = vpop.f32.mrf.mxu0
    %v1965 = vadd.f32 0.0, %v1964
    %v1966 = vpop.f32.mrf.mxu0
    %v1967 = vadd.f32 0.0, %v1966
    %1968 = vmatmul.bf16.gmra.mxu0 %v417
    %v1969 = vpop.f32.mrf.mxu0
    %v1970 = vadd.f32 0.0, %v1969
    %v1971 = vpop.f32.mrf.mxu0
    %v1972 = vadd.f32 0.0, %v1971
    %1973 = vmatmul.bf16.gmra.mxu0 %v419
    %v1974 = vpop.f32.mrf.mxu0
    %v1975 = vadd.f32 0.0, %v1974
    %v1976 = vpop.f32.mrf.mxu0
    %v1977 = vadd.f32 0.0, %v1976
    %1978 = vmatmul.bf16.gmra.mxu0 %v421
    %v1979 = vpop.f32.mrf.mxu0
    %v1980 = vadd.f32 0.0, %v1979
    %v1981 = vpop.f32.mrf.mxu0
    %v1982 = vadd.f32 0.0, %v1981
    %1983 = vmatmul.bf16.gmra.mxu0 %v423
    %v1984 = vpop.f32.mrf.mxu0
    %v1985 = vadd.f32 0.0, %v1984
    %v1986 = vpop.f32.mrf.mxu0
    %v1987 = vadd.f32 0.0, %v1986
    %1988 = vmatmul.bf16.gmra.mxu0 %v425
    %v1989 = vpop.f32.mrf.mxu0
    %v1990 = vadd.f32 0.0, %v1989
    %v1991 = vpop.f32.mrf.mxu0
    %v1992 = vadd.f32 0.0, %v1991
    %1993 = vdwg.mxu0
    %1994 = vmatpush.bf16.msra.mxu0 %v746
    %1995 = vmatpush.bf16.msra.mxu0 %v742
    %1996 = vmatpush.bf16.msra.mxu0 %v738
    %1997 = vmatpush.bf16.msra.mxu0 %v734
    %1998 = vmatpush.bf16.msra.mxu0 %v730
    %1999 = vmatpush.bf16.msra.mxu0 %v726
    %2000 = vmatpush.bf16.msra.mxu0 %v722
    %2001 = vmatpush.bf16.msra.mxu0 %v718
    %2002 = vmatmul.bf16.gmra.mxu0 %v364
    %v2003 = vpop.f32.mrf.mxu0
    %v2004 = vadd.f32 %v1835, %v2003
    %v2005 = vpop.f32.mrf.mxu0
    %v2006 = vadd.f32 %v1837, %v2005
    %2007 = vmatmul.bf16.gmra.mxu0 %v366
    %v2008 = vpop.f32.mrf.mxu0
    %v2009 = vadd.f32 %v1840, %v2008
    %v2010 = vpop.f32.mrf.mxu0
    %v2011 = vadd.f32 %v1842, %v2010
    %2012 = vmatmul.bf16.gmra.mxu0 %v368
    %v2013 = vpop.f32.mrf.mxu0
    %v2014 = vadd.f32 %v1845, %v2013
    %v2015 = vpop.f32.mrf.mxu0
    %v2016 = vadd.f32 %v1847, %v2015
    %2017 = vmatmul.bf16.gmra.mxu0 %v370
    %v2018 = vpop.f32.mrf.mxu0
    %v2019 = vadd.f32 %v1850, %v2018
    %v2020 = vpop.f32.mrf.mxu0
    %v2021 = vadd.f32 %v1852, %v2020
    %2022 = vmatmul.bf16.gmra.mxu0 %v372
    %v2023 = vpop.f32.mrf.mxu0
    %v2024 = vadd.f32 %v1855, %v2023
    %v2025 = vpop.f32.mrf.mxu0
    %v2026 = vadd.f32 %v1857, %v2025
    %2027 = vmatmul.bf16.gmra.mxu0 %v374
    %v2028 = vpop.f32.mrf.mxu0
    %v2029 = vadd.f32 %v1860, %v2028
    %v2030 = vpop.f32.mrf.mxu0
    %v2031 = vadd.f32 %v1862, %v2030
    %2032 = vmatmul.bf16.gmra.mxu0 %v376
    %v2033 = vpop.f32.mrf.mxu0
    %v2034 = vadd.f32 %v1865, %v2033
    %v2035 = vpop.f32.mrf.mxu0
    %v2036 = vadd.f32 %v1867, %v2035
    %2037 = vmatmul.bf16.gmra.mxu0 %v378
    %v2038 = vpop.f32.mrf.mxu0
    %v2039 = vadd.f32 %v1870, %v2038
    %v2040 = vpop.f32.mrf.mxu0
    %v2041 = vadd.f32 %v1872, %v2040
    %2042 = vmatmul.bf16.gmra.mxu0 %v380
    %v2043 = vpop.f32.mrf.mxu0
    %v2044 = vadd.f32 %v1875, %v2043
    %v2045 = vpop.f32.mrf.mxu0
    %v2046 = vadd.f32 %v1877, %v2045
    %2047 = vmatmul.bf16.gmra.mxu0 %v382
    %v2048 = vpop.f32.mrf.mxu0
    %v2049 = vadd.f32 %v1880, %v2048
    %v2050 = vpop.f32.mrf.mxu0
    %v2051 = vadd.f32 %v1882, %v2050
    %2052 = vmatmul.bf16.gmra.mxu0 %v384
    %v2053 = vpop.f32.mrf.mxu0
    %v2054 = vadd.f32 %v1885, %v2053
    %v2055 = vpop.f32.mrf.mxu0
    %v2056 = vadd.f32 %v1887, %v2055
    %2057 = vmatmul.bf16.gmra.mxu0 %v386
    %v2058 = vpop.f32.mrf.mxu0
    %v2059 = vadd.f32 %v1890, %v2058
    %v2060 = vpop.f32.mrf.mxu0
    %v2061 = vadd.f32 %v1892, %v2060
    %2062 = vmatmul.bf16.gmra.mxu0 %v388
    %v2063 = vpop.f32.mrf.mxu0
    %v2064 = vadd.f32 %v1895, %v2063
    %v2065 = vpop.f32.mrf.mxu0
    %v2066 = vadd.f32 %v1897, %v2065
    %2067 = vmatmul.bf16.gmra.mxu0 %v390
    %v2068 = vpop.f32.mrf.mxu0
    %v2069 = vadd.f32 %v1900, %v2068
    %v2070 = vpop.f32.mrf.mxu0
    %v2071 = vadd.f32 %v1902, %v2070
    %2072 = vmatmul.bf16.gmra.mxu0 %v392
    %v2073 = vpop.f32.mrf.mxu0
    %v2074 = vadd.f32 %v1905, %v2073
    %v2075 = vpop.f32.mrf.mxu0
    %v2076 = vadd.f32 %v1907, %v2075
    %2077 = vmatmul.bf16.gmra.mxu0 %v394
    %v2078 = vpop.f32.mrf.mxu0
    %v2079 = vadd.f32 %v1910, %v2078
    %v2080 = vpop.f32.mrf.mxu0
    %v2081 = vadd.f32 %v1912, %v2080
    %2082 = vmatmul.bf16.gmra.mxu0 %v396
    %v2083 = vpop.f32.mrf.mxu0
    %v2084 = vadd.f32 %v1915, %v2083
    %v2085 = vpop.f32.mrf.mxu0
    %v2086 = vadd.f32 %v1917, %v2085
    %2087 = vmatmul.bf16.gmra.mxu0 %v398
    %v2088 = vpop.f32.mrf.mxu0
    %v2089 = vadd.f32 %v1920, %v2088
    %v2090 = vpop.f32.mrf.mxu0
    %v2091 = vadd.f32 %v1922, %v2090
    %2092 = vmatmul.bf16.gmra.mxu0 %v400
    %v2093 = vpop.f32.mrf.mxu0
    %v2094 = vadd.f32 %v1925, %v2093
    %v2095 = vpop.f32.mrf.mxu0
    %v2096 = vadd.f32 %v1927, %v2095
    %2097 = vmatmul.bf16.gmra.mxu0 %v402
    %v2098 = vpop.f32.mrf.mxu0
    %v2099 = vadd.f32 %v1930, %v2098
    %v2100 = vpop.f32.mrf.mxu0
    %v2101 = vadd.f32 %v1932, %v2100
    %2102 = vmatmul.bf16.gmra.mxu0 %v404
    %v2103 = vpop.f32.mrf.mxu0
    %v2104 = vadd.f32 %v1935, %v2103
    %v2105 = vpop.f32.mrf.mxu0
    %v2106 = vadd.f32 %v1937, %v2105
    %2107 = vmatmul.bf16.gmra.mxu0 %v406
    %v2108 = vpop.f32.mrf.mxu0
    %v2109 = vadd.f32 %v1940, %v2108
    %v2110 = vpop.f32.mrf.mxu0
    %v2111 = vadd.f32 %v1942, %v2110
    %2112 = vmatmul.bf16.gmra.mxu0 %v408
    %v2113 = vpop.f32.mrf.mxu0
    %v2114 = vadd.f32 %v1945, %v2113
    %v2115 = vpop.f32.mrf.mxu0
    %v2116 = vadd.f32 %v1947, %v2115
    %2117 = vmatmul.bf16.gmra.mxu0 %v410
    %v2118 = vpop.f32.mrf.mxu0
    %v2119 = vadd.f32 %v1950, %v2118
    %v2120 = vpop.f32.mrf.mxu0
    %v2121 = vadd.f32 %v1952, %v2120
    %2122 = vmatmul.bf16.gmra.mxu0 %v412
    %v2123 = vpop.f32.mrf.mxu0
    %v2124 = vadd.f32 %v1955, %v2123
    %v2125 = vpop.f32.mrf.mxu0
    %v2126 = vadd.f32 %v1957, %v2125
    %2127 = vmatmul.bf16.gmra.mxu0 %v414
    %v2128 = vpop.f32.mrf.mxu0
    %v2129 = vadd.f32 %v1960, %v2128
    %v2130 = vpop.f32.mrf.mxu0
    %v2131 = vadd.f32 %v1962, %v2130
    %2132 = vmatmul.bf16.gmra.mxu0 %v416
    %v2133 = vpop.f32.mrf.mxu0
    %v2134 = vadd.f32 %v1965, %v2133
    %v2135 = vpop.f32.mrf.mxu0
    %v2136 = vadd.f32 %v1967, %v2135
    %2137 = vmatmul.bf16.gmra.mxu0 %v418
    %v2138 = vpop.f32.mrf.mxu0
    %v2139 = vadd.f32 %v1970, %v2138
    %v2140 = vpop.f32.mrf.mxu0
    %v2141 = vadd.f32 %v1972, %v2140
    %2142 = vmatmul.bf16.gmra.mxu0 %v420
    %v2143 = vpop.f32.mrf.mxu0
    %v2144 = vadd.f32 %v1975, %v2143
    %v2145 = vpop.f32.mrf.mxu0
    %v2146 = vadd.f32 %v1977, %v2145
    %2147 = vmatmul.bf16.gmra.mxu0 %v422
    %v2148 = vpop.f32.mrf.mxu0
    %v2149 = vadd.f32 %v1980, %v2148
    %v2150 = vpop.f32.mrf.mxu0
    %v2151 = vadd.f32 %v1982, %v2150
    %2152 = vmatmul.bf16.gmra.mxu0 %v424
    %v2153 = vpop.f32.mrf.mxu0
    %v2154 = vadd.f32 %v1985, %v2153
    %v2155 = vpop.f32.mrf.mxu0
    %v2156 = vadd.f32 %v1987, %v2155
    %2157 = vmatmul.bf16.gmra.mxu0 %v426
    %v2158 = vpop.f32.mrf.mxu0
    %v2159 = vadd.f32 %v1990, %v2158
    %v2160 = vpop.f32.mrf.mxu0
    %v2161 = vadd.f32 %v1992, %v2160
    %2162 = vdwg.mxu0
    %v2163 = vmul.f32 %v990, %v990
    %v2164 = vmul.f32 %v1328, %v1328
    %v2165 = vmul.f32 %v992, %v992
    %v2166 = vmul.f32 %v1330, %v1330
    %v2167 = vmul.f32 %v995, %v995
    %v2168 = vmul.f32 %v1333, %v1333
    %v2169 = vmul.f32 %v997, %v997
    %v2170 = vmul.f32 %v1335, %v1335
    %v2171 = vmul.f32 %v1000, %v1000
    %v2172 = vmul.f32 %v1338, %v1338
    %v2173 = vmul.f32 %v1002, %v1002
    %v2174 = vmul.f32 %v1340, %v1340
    %v2175 = vmul.f32 %v1005, %v1005
    %v2176 = vmul.f32 %v1343, %v1343
    %v2177 = vmul.f32 %v1007, %v1007
    %v2178 = vmul.f32 %v1345, %v1345
    %v2179 = vmul.f32 %v1010, %v1010
    %v2180 = vmul.f32 %v1348, %v1348
    %v2181 = vmul.f32 %v1012, %v1012
    %v2182 = vmul.f32 %v1350, %v1350
    %v2183 = vmul.f32 %v1015, %v1015
    %v2184 = vmul.f32 %v1353, %v1353
    %v2185 = vmul.f32 %v1017, %v1017
    %v2186 = vmul.f32 %v1355, %v1355
    %v2187 = vmul.f32 %v1020, %v1020
    %v2188 = vmul.f32 %v1358, %v1358
    %v2189 = vmul.f32 %v1022, %v1022
    %v2190 = vmul.f32 %v1360, %v1360
    %v2191 = vmul.f32 %v1025, %v1025
    %v2192 = vmul.f32 %v1363, %v1363
    %v2193 = vmul.f32 %v1027, %v1027
    %v2194 = vmul.f32 %v1365, %v1365
    %v2195 = vmul.f32 %v1030, %v1030
    %v2196 = vmul.f32 %v1368, %v1368
    %v2197 = vmul.f32 %v1032, %v1032
    %v2198 = vmul.f32 %v1370, %v1370
    %v2199 = vmul.f32 %v1035, %v1035
    %v2200 = vmul.f32 %v1373, %v1373
    %v2201 = vmul.f32 %v1037, %v1037
    %v2202 = vmul.f32 %v1375, %v1375
    %v2203 = vmul.f32 %v1040, %v1040
    %v2204 = vmul.f32 %v1378, %v1378
    %v2205 = vmul.f32 %v1042, %v1042
    %v2206 = vmul.f32 %v1380, %v1380
    %v2207 = vmul.f32 %v1045, %v1045
    %v2208 = vmul.f32 %v1383, %v1383
    %v2209 = vmul.f32 %v1047, %v1047
    %v2210 = vmul.f32 %v1385, %v1385
    %v2211 = vmul.f32 %v1050, %v1050
    %v2212 = vmul.f32 %v1388, %v1388
    %v2213 = vmul.f32 %v1052, %v1052
    %v2214 = vmul.f32 %v1390, %v1390
    %v2215 = vmul.f32 %v1055, %v1055
    %v2216 = vmul.f32 %v1393, %v1393
    %v2217 = vmul.f32 %v1057, %v1057
    %v2218 = vmul.f32 %v1395, %v1395
    %v2219 = vmul.f32 %v1060, %v1060
    %v2220 = vmul.f32 %v1398, %v1398
    %v2221 = vmul.f32 %v1062, %v1062
    %v2222 = vmul.f32 %v1400, %v1400
    %v2223 = vmul.f32 %v1065, %v1065
    %v2224 = vmul.f32 %v1403, %v1403
    %v2225 = vmul.f32 %v1067, %v1067
    %v2226 = vmul.f32 %v1405, %v1405
    %v2227 = vmul.f32 %v1666, %v1666
    %v2228 = vmul.f32 %v2004, %v2004
    %v2229 = vmul.f32 %v1668, %v1668
    %v2230 = vmul.f32 %v2006, %v2006
    %v2231 = vmul.f32 %v1671, %v1671
    %v2232 = vmul.f32 %v2009, %v2009
    %v2233 = vmul.f32 %v1673, %v1673
    %v2234 = vmul.f32 %v2011, %v2011
    %v2235 = vmul.f32 %v1676, %v1676
    %v2236 = vmul.f32 %v2014, %v2014
    %v2237 = vmul.f32 %v1678, %v1678
    %v2238 = vmul.f32 %v2016, %v2016
    %v2239 = vmul.f32 %v1681, %v1681
    %v2240 = vmul.f32 %v2019, %v2019
    %v2241 = vmul.f32 %v1683, %v1683
    %v2242 = vmul.f32 %v2021, %v2021
    %v2243 = vmul.f32 %v1686, %v1686
    %v2244 = vmul.f32 %v2024, %v2024
    %v2245 = vmul.f32 %v1688, %v1688
    %v2246 = vmul.f32 %v2026, %v2026
    %v2247 = vmul.f32 %v1691, %v1691
    %v2248 = vmul.f32 %v2029, %v2029
    %v2249 = vmul.f32 %v1693, %v1693
    %v2250 = vmul.f32 %v2031, %v2031
    %v2251 = vmul.f32 %v1696, %v1696
    %v2252 = vmul.f32 %v2034, %v2034
    %v2253 = vmul.f32 %v1698, %v1698
    %v2254 = vmul.f32 %v2036, %v2036
    %v2255 = vmul.f32 %v1701, %v1701
    %v2256 = vmul.f32 %v2039, %v2039
    %v2257 = vmul.f32 %v1703, %v1703
    %v2258 = vmul.f32 %v2041, %v2041
    %v2259 = vmul.f32 %v1706, %v1706
    %v2260 = vmul.f32 %v2044, %v2044
    %v2261 = vmul.f32 %v1708, %v1708
    %v2262 = vmul.f32 %v2046, %v2046
    %v2263 = vmul.f32 %v1711, %v1711
    %v2264 = vmul.f32 %v2049, %v2049
    %v2265 = vmul.f32 %v1713, %v1713
    %v2266 = vmul.f32 %v2051, %v2051
    %v2267 = vmul.f32 %v1716, %v1716
    %v2268 = vmul.f32 %v2054, %v2054
    %v2269 = vmul.f32 %v1718, %v1718
    %v2270 = vmul.f32 %v2056, %v2056
    %v2271 = vmul.f32 %v1721, %v1721
    %v2272 = vmul.f32 %v2059, %v2059
    %v2273 = vmul.f32 %v1723, %v1723
    %v2274 = vmul.f32 %v2061, %v2061
    %v2275 = vmul.f32 %v1726, %v1726
    %v2276 = vmul.f32 %v2064, %v2064
    %v2277 = vmul.f32 %v1728, %v1728
    %v2278 = vmul.f32 %v2066, %v2066
    %v2279 = vmul.f32 %v1731, %v1731
    %v2280 = vmul.f32 %v2069, %v2069
    %v2281 = vmul.f32 %v1733, %v1733
    %v2282 = vmul.f32 %v2071, %v2071
    %v2283 = vmul.f32 %v1736, %v1736
    %v2284 = vmul.f32 %v2074, %v2074
    %v2285 = vmul.f32 %v1738, %v1738
    %v2286 = vmul.f32 %v2076, %v2076
    %v2287 = vmul.f32 %v1741, %v1741
    %v2288 = vmul.f32 %v2079, %v2079
    %v2289 = vmul.f32 %v1743, %v1743
    %v2290 = vmul.f32 %v2081, %v2081
    %v2291 = vadd.f32 %v2163, %v2227
    %v2292 = vadd.f32 %v2164, %v2228
    %v2293 = vadd.f32 %v2165, %v2229
    %v2294 = vadd.f32 %v2166, %v2230
    %v2295 = vadd.f32 %v2167, %v2231
    %v2296 = vadd.f32 %v2168, %v2232
    %v2297 = vadd.f32 %v2169, %v2233
    %v2298 = vadd.f32 %v2170, %v2234
    %v2299 = vadd.f32 %v2171, %v2235
    %v2300 = vadd.f32 %v2172, %v2236
    %v2301 = vadd.f32 %v2173, %v2237
    %v2302 = vadd.f32 %v2174, %v2238
    %v2303 = vadd.f32 %v2175, %v2239
    %v2304 = vadd.f32 %v2176, %v2240
    %v2305 = vadd.f32 %v2177, %v2241
    %v2306 = vadd.f32 %v2178, %v2242
    %v2307 = vadd.f32 %v2179, %v2243
    %v2308 = vadd.f32 %v2180, %v2244
    %v2309 = vadd.f32 %v2181, %v2245
    %v2310 = vadd.f32 %v2182, %v2246
    %v2311 = vadd.f32 %v2183, %v2247
    %v2312 = vadd.f32 %v2184, %v2248
    %v2313 = vadd.f32 %v2185, %v2249
    %v2314 = vadd.f32 %v2186, %v2250
    %v2315 = vadd.f32 %v2187, %v2251
    %v2316 = vadd.f32 %v2188, %v2252
    %v2317 = vadd.f32 %v2189, %v2253
    %v2318 = vadd.f32 %v2190, %v2254
    %v2319 = vadd.f32 %v2191, %v2255
    %v2320 = vadd.f32 %v2192, %v2256
    %v2321 = vadd.f32 %v2193, %v2257
    %v2322 = vadd.f32 %v2194, %v2258
    %v2323 = vadd.f32 %v2195, %v2259
    %v2324 = vadd.f32 %v2196, %v2260
    %v2325 = vadd.f32 %v2197, %v2261
    %v2326 = vadd.f32 %v2198, %v2262
    %v2327 = vadd.f32 %v2199, %v2263
    %v2328 = vadd.f32 %v2200, %v2264
    %v2329 = vadd.f32 %v2201, %v2265
    %v2330 = vadd.f32 %v2202, %v2266
    %v2331 = vadd.f32 %v2203, %v2267
    %v2332 = vadd.f32 %v2204, %v2268
    %v2333 = vadd.f32 %v2205, %v2269
    %v2334 = vadd.f32 %v2206, %v2270
    %v2335 = vadd.f32 %v2207, %v2271
    %v2336 = vadd.f32 %v2208, %v2272
    %v2337 = vadd.f32 %v2209, %v2273
    %v2338 = vadd.f32 %v2210, %v2274
    %v2339 = vadd.f32 %v2211, %v2275
    %v2340 = vadd.f32 %v2212, %v2276
    %v2341 = vadd.f32 %v2213, %v2277
    %v2342 = vadd.f32 %v2214, %v2278
    %v2343 = vadd.f32 %v2215, %v2279
    %v2344 = vadd.f32 %v2216, %v2280
    %v2345 = vadd.f32 %v2217, %v2281
    %v2346 = vadd.f32 %v2218, %v2282
    %v2347 = vadd.f32 %v2219, %v2283
    %v2348 = vadd.f32 %v2220, %v2284
    %v2349 = vadd.f32 %v2221, %v2285
    %v2350 = vadd.f32 %v2222, %v2286
    %v2351 = vadd.f32 %v2223, %v2287
    %v2352 = vadd.f32 %v2224, %v2288
    %v2353 = vadd.f32 %v2225, %v2289
    %v2354 = vadd.f32 %v2226, %v2290
    %v2355 = vmul.f32 %v1070, %v1070
    %v2356 = vmul.f32 %v1408, %v1408
    %v2357 = vmul.f32 %v1072, %v1072
    %v2358 = vmul.f32 %v1410, %v1410
    %v2359 = vmul.f32 %v1075, %v1075
    %v2360 = vmul.f32 %v1413, %v1413
    %v2361 = vmul.f32 %v1077, %v1077
    %v2362 = vmul.f32 %v1415, %v1415
    %v2363 = vmul.f32 %v1080, %v1080
    %v2364 = vmul.f32 %v1418, %v1418
    %v2365 = vmul.f32 %v1082, %v1082
    %v2366 = vmul.f32 %v1420, %v1420
    %v2367 = vmul.f32 %v1085, %v1085
    %v2368 = vmul.f32 %v1423, %v1423
    %v2369 = vmul.f32 %v1087, %v1087
    %v2370 = vmul.f32 %v1425, %v1425
    %v2371 = vmul.f32 %v1090, %v1090
    %v2372 = vmul.f32 %v1428, %v1428
    %v2373 = vmul.f32 %v1092, %v1092
    %v2374 = vmul.f32 %v1430, %v1430
    %v2375 = vmul.f32 %v1095, %v1095
    %v2376 = vmul.f32 %v1433, %v1433
    %v2377 = vmul.f32 %v1097, %v1097
    %v2378 = vmul.f32 %v1435, %v1435
    %v2379 = vmul.f32 %v1100, %v1100
    %v2380 = vmul.f32 %v1438, %v1438
    %v2381 = vmul.f32 %v1102, %v1102
    %v2382 = vmul.f32 %v1440, %v1440
    %v2383 = vmul.f32 %v1105, %v1105
    %v2384 = vmul.f32 %v1443, %v1443
    %v2385 = vmul.f32 %v1107, %v1107
    %v2386 = vmul.f32 %v1445, %v1445
    %v2387 = vmul.f32 %v1110, %v1110
    %v2388 = vmul.f32 %v1448, %v1448
    %v2389 = vmul.f32 %v1112, %v1112
    %v2390 = vmul.f32 %v1450, %v1450
    %v2391 = vmul.f32 %v1115, %v1115
    %v2392 = vmul.f32 %v1453, %v1453
    %v2393 = vmul.f32 %v1117, %v1117
    %v2394 = vmul.f32 %v1455, %v1455
    %v2395 = vmul.f32 %v1120, %v1120
    %v2396 = vmul.f32 %v1458, %v1458
    %v2397 = vmul.f32 %v1122, %v1122
    %v2398 = vmul.f32 %v1460, %v1460
    %v2399 = vmul.f32 %v1125, %v1125
    %v2400 = vmul.f32 %v1463, %v1463
    %v2401 = vmul.f32 %v1127, %v1127
    %v2402 = vmul.f32 %v1465, %v1465
    %v2403 = vmul.f32 %v1130, %v1130
    %v2404 = vmul.f32 %v1468, %v1468
    %v2405 = vmul.f32 %v1132, %v1132
    %v2406 = vmul.f32 %v1470, %v1470
    %v2407 = vmul.f32 %v1135, %v1135
    %v2408 = vmul.f32 %v1473, %v1473
    %v2409 = vmul.f32 %v1137, %v1137
    %v2410 = vmul.f32 %v1475, %v1475
    %v2411 = vmul.f32 %v1140, %v1140
    %v2412 = vmul.f32 %v1478, %v1478
    %v2413 = vmul.f32 %v1142, %v1142
    %v2414 = vmul.f32 %v1480, %v1480
    %v2415 = vmul.f32 %v1145, %v1145
    %v2416 = vmul.f32 %v1483, %v1483
    %v2417 = vmul.f32 %v1147, %v1147
    %v2418 = vmul.f32 %v1485, %v1485
    %v2419 = vmul.f32 %v1746, %v1746
    %v2420 = vmul.f32 %v2084, %v2084
    %v2421 = vmul.f32 %v1748, %v1748
    %v2422 = vmul.f32 %v2086, %v2086
    %v2423 = vmul.f32 %v1751, %v1751
    %v2424 = vmul.f32 %v2089, %v2089
    %v2425 = vmul.f32 %v1753, %v1753
    %v2426 = vmul.f32 %v2091, %v2091
    %v2427 = vmul.f32 %v1756, %v1756
    %v2428 = vmul.f32 %v2094, %v2094
    %v2429 = vmul.f32 %v1758, %v1758
    %v2430 = vmul.f32 %v2096, %v2096
    %v2431 = vmul.f32 %v1761, %v1761
    %v2432 = vmul.f32 %v2099, %v2099
    %v2433 = vmul.f32 %v1763, %v1763
    %v2434 = vmul.f32 %v2101, %v2101
    %v2435 = vmul.f32 %v1766, %v1766
    %v2436 = vmul.f32 %v2104, %v2104
    %v2437 = vmul.f32 %v1768, %v1768
    %v2438 = vmul.f32 %v2106, %v2106
    %v2439 = vmul.f32 %v1771, %v1771
    %v2440 = vmul.f32 %v2109, %v2109
    %v2441 = vmul.f32 %v1773, %v1773
    %v2442 = vmul.f32 %v2111, %v2111
    %v2443 = vmul.f32 %v1776, %v1776
    %v2444 = vmul.f32 %v2114, %v2114
    %v2445 = vmul.f32 %v1778, %v1778
    %v2446 = vmul.f32 %v2116, %v2116
    %v2447 = vmul.f32 %v1781, %v1781
    %v2448 = vmul.f32 %v2119, %v2119
    %v2449 = vmul.f32 %v1783, %v1783
    %v2450 = vmul.f32 %v2121, %v2121
    %v2451 = vmul.f32 %v1786, %v1786
    %v2452 = vmul.f32 %v2124, %v2124
    %v2453 = vmul.f32 %v1788, %v1788
    %v2454 = vmul.f32 %v2126, %v2126
    %v2455 = vmul.f32 %v1791, %v1791
    %v2456 = vmul.f32 %v2129, %v2129
    %v2457 = vmul.f32 %v1793, %v1793
    %v2458 = vmul.f32 %v2131, %v2131
    %v2459 = vmul.f32 %v1796, %v1796
    %v2460 = vmul.f32 %v2134, %v2134
    %v2461 = vmul.f32 %v1798, %v1798
    %v2462 = vmul.f32 %v2136, %v2136
    %v2463 = vmul.f32 %v1801, %v1801
    %v2464 = vmul.f32 %v2139, %v2139
    %v2465 = vmul.f32 %v1803, %v1803
    %v2466 = vmul.f32 %v2141, %v2141
    %v2467 = vmul.f32 %v1806, %v1806
    %v2468 = vmul.f32 %v2144, %v2144
    %v2469 = vmul.f32 %v1808, %v1808
    %v2470 = vmul.f32 %v2146, %v2146
    %v2471 = vmul.f32 %v1811, %v1811
    %v2472 = vmul.f32 %v2149, %v2149
    %v2473 = vmul.f32 %v1813, %v1813
    %v2474 = vmul.f32 %v2151, %v2151
    %v2475 = vmul.f32 %v1816, %v1816
    %v2476 = vmul.f32 %v2154, %v2154
    %v2477 = vmul.f32 %v1818, %v1818
    %v2478 = vmul.f32 %v2156, %v2156
    %v2479 = vmul.f32 %v1821, %v1821
    %v2480 = vmul.f32 %v2159, %v2159
    %v2481 = vmul.f32 %v1823, %v1823
    %v2482 = vmul.f32 %v2161, %v2161
    %v2483 = vadd.f32 %v2355, %v2419
    %v2484 = vadd.f32 %v2356, %v2420
    %v2485 = vadd.f32 %v2357, %v2421
    %v2486 = vadd.f32 %v2358, %v2422
    %v2487 = vadd.f32 %v2359, %v2423
    %v2488 = vadd.f32 %v2360, %v2424
    %v2489 = vadd.f32 %v2361, %v2425
    %v2490 = vadd.f32 %v2362, %v2426
    %v2491 = vadd.f32 %v2363, %v2427
    %v2492 = vadd.f32 %v2364, %v2428
    %v2493 = vadd.f32 %v2365, %v2429
    %v2494 = vadd.f32 %v2366, %v2430
    %v2495 = vadd.f32 %v2367, %v2431
    %v2496 = vadd.f32 %v2368, %v2432
    %v2497 = vadd.f32 %v2369, %v2433
    %v2498 = vadd.f32 %v2370, %v2434
    %v2499 = vadd.f32 %v2371, %v2435
    %v2500 = vadd.f32 %v2372, %v2436
    %v2501 = vadd.f32 %v2373, %v2437
    %v2502 = vadd.f32 %v2374, %v2438
    %v2503 = vadd.f32 %v2375, %v2439
    %v2504 = vadd.f32 %v2376, %v2440
    %v2505 = vadd.f32 %v2377, %v2441
    %v2506 = vadd.f32 %v2378, %v2442
    %v2507 = vadd.f32 %v2379, %v2443
    %v2508 = vadd.f32 %v2380, %v2444
    %v2509 = vadd.f32 %v2381, %v2445
    %v2510 = vadd.f32 %v2382, %v2446
    %v2511 = vadd.f32 %v2383, %v2447
    %v2512 = vadd.f32 %v2384, %v2448
    %v2513 = vadd.f32 %v2385, %v2449
    %v2514 = vadd.f32 %v2386, %v2450
    %v2515 = vadd.f32 %v2387, %v2451
    %v2516 = vadd.f32 %v2388, %v2452
    %v2517 = vadd.f32 %v2389, %v2453
    %v2518 = vadd.f32 %v2390, %v2454
    %v2519 = vadd.f32 %v2391, %v2455
    %v2520 = vadd.f32 %v2392, %v2456
    %v2521 = vadd.f32 %v2393, %v2457
    %v2522 = vadd.f32 %v2394, %v2458
    %v2523 = vadd.f32 %v2395, %v2459
    %v2524 = vadd.f32 %v2396, %v2460
    %v2525 = vadd.f32 %v2397, %v2461
    %v2526 = vadd.f32 %v2398, %v2462
    %v2527 = vadd.f32 %v2399, %v2463
    %v2528 = vadd.f32 %v2400, %v2464
    %v2529 = vadd.f32 %v2401, %v2465
    %v2530 = vadd.f32 %v2402, %v2466
    %v2531 = vadd.f32 %v2403, %v2467
    %v2532 = vadd.f32 %v2404, %v2468
    %v2533 = vadd.f32 %v2405, %v2469
    %v2534 = vadd.f32 %v2406, %v2470
    %v2535 = vadd.f32 %v2407, %v2471
    %v2536 = vadd.f32 %v2408, %v2472
    %v2537 = vadd.f32 %v2409, %v2473
    %v2538 = vadd.f32 %v2410, %v2474
    %v2539 = vadd.f32 %v2411, %v2475
    %v2540 = vadd.f32 %v2412, %v2476
    %v2541 = vadd.f32 %v2413, %v2477
    %v2542 = vadd.f32 %v2414, %v2478
    %v2543 = vadd.f32 %v2415, %v2479
    %v2544 = vadd.f32 %v2416, %v2480
    %v2545 = vadd.f32 %v2417, %v2481
    %v2546 = vadd.f32 %v2418, %v2482
    %v2547 = vrsqrt.pop %v2291
    %v2548 = vmul.f32 %v2547, %v2291
    %v2549 = vmul.f32 %v2548, %v2547
    %v2550 = vmul.f32 0.5, %v2549
    %v2551 = vsub.f32 1.5, %v2550
    %v2552 = vmul.f32 %v2547, %v2551
    %v2553 = vmul.f32 %v2291, %v2552
    %vm2554 = vcmp.eq.f32.partialorder %v2291, inf
    %v2555 = vsel %vm2554, %v2291, %v2553
    %vm2556 = vcmp.eq.f32.partialorder %v2291, 0.0
    %v2557 = vand.u32 %v2291, 2147483648
    %v2558 = vsel %vm2556, %v2557, %v2555
    %v2559 = vrsqrt.pop %v2292
    %v2560 = vmul.f32 %v2559, %v2292
    %v2561 = vmul.f32 %v2560, %v2559
    %v2562 = vmul.f32 0.5, %v2561
    %v2563 = vsub.f32 1.5, %v2562
    %v2564 = vmul.f32 %v2559, %v2563
    %v2565 = vmul.f32 %v2292, %v2564
    %vm2566 = vcmp.eq.f32.partialorder %v2292, inf
    %v2567 = vsel %vm2566, %v2292, %v2565
    %vm2568 = vcmp.eq.f32.partialorder %v2292, 0.0
    %v2569 = vand.u32 %v2292, 2147483648
    %v2570 = vsel %vm2568, %v2569, %v2567
    %v2571 = vrsqrt.pop %v2293
    %v2572 = vmul.f32 %v2571, %v2293
    %v2573 = vmul.f32 %v2572, %v2571
    %v2574 = vmul.f32 0.5, %v2573
    %v2575 = vsub.f32 1.5, %v2574
    %v2576 = vmul.f32 %v2571, %v2575
    %v2577 = vmul.f32 %v2293, %v2576
    %vm2578 = vcmp.eq.f32.partialorder %v2293, inf
    %v2579 = vsel %vm2578, %v2293, %v2577
    %vm2580 = vcmp.eq.f32.partialorder %v2293, 0.0
    %v2581 = vand.u32 %v2293, 2147483648
    %v2582 = vsel %vm2580, %v2581, %v2579
    %v2583 = vrsqrt.pop %v2294
    %v2584 = vmul.f32 %v2583, %v2294
    %v2585 = vmul.f32 %v2584, %v2583
    %v2586 = vmul.f32 0.5, %v2585
    %v2587 = vsub.f32 1.5, %v2586
    %v2588 = vmul.f32 %v2583, %v2587
    %v2589 = vmul.f32 %v2294, %v2588
    %vm2590 = vcmp.eq.f32.partialorder %v2294, inf
    %v2591 = vsel %vm2590, %v2294, %v2589
    %vm2592 = vcmp.eq.f32.partialorder %v2294, 0.0
    %v2593 = vand.u32 %v2294, 2147483648
    %v2594 = vsel %vm2592, %v2593, %v2591
    %v2595 = vrsqrt.pop %v2295
    %v2596 = vmul.f32 %v2595, %v2295
    %v2597 = vmul.f32 %v2596, %v2595
    %v2598 = vmul.f32 0.5, %v2597
    %v2599 = vsub.f32 1.5, %v2598
    %v2600 = vmul.f32 %v2595, %v2599
    %v2601 = vmul.f32 %v2295, %v2600
    %vm2602 = vcmp.eq.f32.partialorder %v2295, inf
    %v2603 = vsel %vm2602, %v2295, %v2601
    %vm2604 = vcmp.eq.f32.partialorder %v2295, 0.0
    %v2605 = vand.u32 %v2295, 2147483648
    %v2606 = vsel %vm2604, %v2605, %v2603
    %v2607 = vrsqrt.pop %v2296
    %v2608 = vmul.f32 %v2607, %v2296
    %v2609 = vmul.f32 %v2608, %v2607
    %v2610 = vmul.f32 0.5, %v2609
    %v2611 = vsub.f32 1.5, %v2610
    %v2612 = vmul.f32 %v2607, %v2611
    %v2613 = vmul.f32 %v2296, %v2612
    %vm2614 = vcmp.eq.f32.partialorder %v2296, inf
    %v2615 = vsel %vm2614, %v2296, %v2613
    %vm2616 = vcmp.eq.f32.partialorder %v2296, 0.0
    %v2617 = vand.u32 %v2296, 2147483648
    %v2618 = vsel %vm2616, %v2617, %v2615
    %v2619 = vrsqrt.pop %v2297
    %v2620 = vmul.f32 %v2619, %v2297
    %v2621 = vmul.f32 %v2620, %v2619
    %v2622 = vmul.f32 0.5, %v2621
    %v2623 = vsub.f32 1.5, %v2622
    %v2624 = vmul.f32 %v2619, %v2623
    %v2625 = vmul.f32 %v2297, %v2624
    %vm2626 = vcmp.eq.f32.partialorder %v2297, inf
    %v2627 = vsel %vm2626, %v2297, %v2625
    %vm2628 = vcmp.eq.f32.partialorder %v2297, 0.0
    %v2629 = vand.u32 %v2297, 2147483648
    %v2630 = vsel %vm2628, %v2629, %v2627
    %v2631 = vrsqrt.pop %v2298
    %v2632 = vmul.f32 %v2631, %v2298
    %v2633 = vmul.f32 %v2632, %v2631
    %v2634 = vmul.f32 0.5, %v2633
    %v2635 = vsub.f32 1.5, %v2634
    %v2636 = vmul.f32 %v2631, %v2635
    %v2637 = vmul.f32 %v2298, %v2636
    %vm2638 = vcmp.eq.f32.partialorder %v2298, inf
    %v2639 = vsel %vm2638, %v2298, %v2637
    %vm2640 = vcmp.eq.f32.partialorder %v2298, 0.0
    %v2641 = vand.u32 %v2298, 2147483648
    %v2642 = vsel %vm2640, %v2641, %v2639
    %v2643 = vrsqrt.pop %v2299
    %v2644 = vmul.f32 %v2643, %v2299
    %v2645 = vmul.f32 %v2644, %v2643
    %v2646 = vmul.f32 0.5, %v2645
    %v2647 = vsub.f32 1.5, %v2646
    %v2648 = vmul.f32 %v2643, %v2647
    %v2649 = vmul.f32 %v2299, %v2648
    %vm2650 = vcmp.eq.f32.partialorder %v2299, inf
    %v2651 = vsel %vm2650, %v2299, %v2649
    %vm2652 = vcmp.eq.f32.partialorder %v2299, 0.0
    %v2653 = vand.u32 %v2299, 2147483648
    %v2654 = vsel %vm2652, %v2653, %v2651
    %v2655 = vrsqrt.pop %v2300
    %v2656 = vmul.f32 %v2655, %v2300
    %v2657 = vmul.f32 %v2656, %v2655
    %v2658 = vmul.f32 0.5, %v2657
    %v2659 = vsub.f32 1.5, %v2658
    %v2660 = vmul.f32 %v2655, %v2659
    %v2661 = vmul.f32 %v2300, %v2660
    %vm2662 = vcmp.eq.f32.partialorder %v2300, inf
    %v2663 = vsel %vm2662, %v2300, %v2661
    %vm2664 = vcmp.eq.f32.partialorder %v2300, 0.0
    %v2665 = vand.u32 %v2300, 2147483648
    %v2666 = vsel %vm2664, %v2665, %v2663
    %v2667 = vrsqrt.pop %v2301
    %v2668 = vmul.f32 %v2667, %v2301
    %v2669 = vmul.f32 %v2668, %v2667
    %v2670 = vmul.f32 0.5, %v2669
    %v2671 = vsub.f32 1.5, %v2670
    %v2672 = vmul.f32 %v2667, %v2671
    %v2673 = vmul.f32 %v2301, %v2672
    %vm2674 = vcmp.eq.f32.partialorder %v2301, inf
    %v2675 = vsel %vm2674, %v2301, %v2673
    %vm2676 = vcmp.eq.f32.partialorder %v2301, 0.0
    %v2677 = vand.u32 %v2301, 2147483648
    %v2678 = vsel %vm2676, %v2677, %v2675
    %v2679 = vrsqrt.pop %v2302
    %v2680 = vmul.f32 %v2679, %v2302
    %v2681 = vmul.f32 %v2680, %v2679
    %v2682 = vmul.f32 0.5, %v2681
    %v2683 = vsub.f32 1.5, %v2682
    %v2684 = vmul.f32 %v2679, %v2683
    %v2685 = vmul.f32 %v2302, %v2684
    %vm2686 = vcmp.eq.f32.partialorder %v2302, inf
    %v2687 = vsel %vm2686, %v2302, %v2685
    %vm2688 = vcmp.eq.f32.partialorder %v2302, 0.0
    %v2689 = vand.u32 %v2302, 2147483648
    %v2690 = vsel %vm2688, %v2689, %v2687
    %v2691 = vrsqrt.pop %v2303
    %v2692 = vmul.f32 %v2691, %v2303
    %v2693 = vmul.f32 %v2692, %v2691
    %v2694 = vmul.f32 0.5, %v2693
    %v2695 = vsub.f32 1.5, %v2694
    %v2696 = vmul.f32 %v2691, %v2695
    %v2697 = vmul.f32 %v2303, %v2696
    %vm2698 = vcmp.eq.f32.partialorder %v2303, inf
    %v2699 = vsel %vm2698, %v2303, %v2697
    %vm2700 = vcmp.eq.f32.partialorder %v2303, 0.0
    %v2701 = vand.u32 %v2303, 2147483648
    %v2702 = vsel %vm2700, %v2701, %v2699
    %v2703 = vrsqrt.pop %v2304
    %v2704 = vmul.f32 %v2703, %v2304
    %v2705 = vmul.f32 %v2704, %v2703
    %v2706 = vmul.f32 0.5, %v2705
    %v2707 = vsub.f32 1.5, %v2706
    %v2708 = vmul.f32 %v2703, %v2707
    %v2709 = vmul.f32 %v2304, %v2708
    %vm2710 = vcmp.eq.f32.partialorder %v2304, inf
    %v2711 = vsel %vm2710, %v2304, %v2709
    %vm2712 = vcmp.eq.f32.partialorder %v2304, 0.0
    %v2713 = vand.u32 %v2304, 2147483648
    %v2714 = vsel %vm2712, %v2713, %v2711
    %v2715 = vrsqrt.pop %v2305
    %v2716 = vmul.f32 %v2715, %v2305
    %v2717 = vmul.f32 %v2716, %v2715
    %v2718 = vmul.f32 0.5, %v2717
    %v2719 = vsub.f32 1.5, %v2718
    %v2720 = vmul.f32 %v2715, %v2719
    %v2721 = vmul.f32 %v2305, %v2720
    %vm2722 = vcmp.eq.f32.partialorder %v2305, inf
    %v2723 = vsel %vm2722, %v2305, %v2721
    %vm2724 = vcmp.eq.f32.partialorder %v2305, 0.0
    %v2725 = vand.u32 %v2305, 2147483648
    %v2726 = vsel %vm2724, %v2725, %v2723
    %v2727 = vrsqrt.pop %v2306
    %v2728 = vmul.f32 %v2727, %v2306
    %v2729 = vmul.f32 %v2728, %v2727
    %v2730 = vmul.f32 0.5, %v2729
    %v2731 = vsub.f32 1.5, %v2730
    %v2732 = vmul.f32 %v2727, %v2731
    %v2733 = vmul.f32 %v2306, %v2732
    %vm2734 = vcmp.eq.f32.partialorder %v2306, inf
    %v2735 = vsel %vm2734, %v2306, %v2733
    %vm2736 = vcmp.eq.f32.partialorder %v2306, 0.0
    %v2737 = vand.u32 %v2306, 2147483648
    %v2738 = vsel %vm2736, %v2737, %v2735
    %v2739 = vrsqrt.pop %v2307
    %v2740 = vmul.f32 %v2739, %v2307
    %v2741 = vmul.f32 %v2740, %v2739
    %v2742 = vmul.f32 0.5, %v2741
    %v2743 = vsub.f32 1.5, %v2742
    %v2744 = vmul.f32 %v2739, %v2743
    %v2745 = vmul.f32 %v2307, %v2744
    %vm2746 = vcmp.eq.f32.partialorder %v2307, inf
    %v2747 = vsel %vm2746, %v2307, %v2745
    %vm2748 = vcmp.eq.f32.partialorder %v2307, 0.0
    %v2749 = vand.u32 %v2307, 2147483648
    %v2750 = vsel %vm2748, %v2749, %v2747
    %v2751 = vrsqrt.pop %v2308
    %v2752 = vmul.f32 %v2751, %v2308
    %v2753 = vmul.f32 %v2752, %v2751
    %v2754 = vmul.f32 0.5, %v2753
    %v2755 = vsub.f32 1.5, %v2754
    %v2756 = vmul.f32 %v2751, %v2755
    %v2757 = vmul.f32 %v2308, %v2756
    %vm2758 = vcmp.eq.f32.partialorder %v2308, inf
    %v2759 = vsel %vm2758, %v2308, %v2757
    %vm2760 = vcmp.eq.f32.partialorder %v2308, 0.0
    %v2761 = vand.u32 %v2308, 2147483648
    %v2762 = vsel %vm2760, %v2761, %v2759
    %v2763 = vrsqrt.pop %v2309
    %v2764 = vmul.f32 %v2763, %v2309
    %v2765 = vmul.f32 %v2764, %v2763
    %v2766 = vmul.f32 0.5, %v2765
    %v2767 = vsub.f32 1.5, %v2766
    %v2768 = vmul.f32 %v2763, %v2767
    %v2769 = vmul.f32 %v2309, %v2768
    %vm2770 = vcmp.eq.f32.partialorder %v2309, inf
    %v2771 = vsel %vm2770, %v2309, %v2769
    %vm2772 = vcmp.eq.f32.partialorder %v2309, 0.0
    %v2773 = vand.u32 %v2309, 2147483648
    %v2774 = vsel %vm2772, %v2773, %v2771
    %v2775 = vrsqrt.pop %v2310
    %v2776 = vmul.f32 %v2775, %v2310
    %v2777 = vmul.f32 %v2776, %v2775
    %v2778 = vmul.f32 0.5, %v2777
    %v2779 = vsub.f32 1.5, %v2778
    %v2780 = vmul.f32 %v2775, %v2779
    %v2781 = vmul.f32 %v2310, %v2780
    %vm2782 = vcmp.eq.f32.partialorder %v2310, inf
    %v2783 = vsel %vm2782, %v2310, %v2781
    %vm2784 = vcmp.eq.f32.partialorder %v2310, 0.0
    %v2785 = vand.u32 %v2310, 2147483648
    %v2786 = vsel %vm2784, %v2785, %v2783
    %v2787 = vrsqrt.pop %v2311
    %v2788 = vmul.f32 %v2787, %v2311
    %v2789 = vmul.f32 %v2788, %v2787
    %v2790 = vmul.f32 0.5, %v2789
    %v2791 = vsub.f32 1.5, %v2790
    %v2792 = vmul.f32 %v2787, %v2791
    %v2793 = vmul.f32 %v2311, %v2792
    %vm2794 = vcmp.eq.f32.partialorder %v2311, inf
    %v2795 = vsel %vm2794, %v2311, %v2793
    %vm2796 = vcmp.eq.f32.partialorder %v2311, 0.0
    %v2797 = vand.u32 %v2311, 2147483648
    %v2798 = vsel %vm2796, %v2797, %v2795
    %v2799 = vrsqrt.pop %v2312
    %v2800 = vmul.f32 %v2799, %v2312
    %v2801 = vmul.f32 %v2800, %v2799
    %v2802 = vmul.f32 0.5, %v2801
    %v2803 = vsub.f32 1.5, %v2802
    %v2804 = vmul.f32 %v2799, %v2803
    %v2805 = vmul.f32 %v2312, %v2804
    %vm2806 = vcmp.eq.f32.partialorder %v2312, inf
    %v2807 = vsel %vm2806, %v2312, %v2805
    %vm2808 = vcmp.eq.f32.partialorder %v2312, 0.0
    %v2809 = vand.u32 %v2312, 2147483648
    %v2810 = vsel %vm2808, %v2809, %v2807
    %v2811 = vrsqrt.pop %v2313
    %v2812 = vmul.f32 %v2811, %v2313
    %v2813 = vmul.f32 %v2812, %v2811
    %v2814 = vmul.f32 0.5, %v2813
    %v2815 = vsub.f32 1.5, %v2814
    %v2816 = vmul.f32 %v2811, %v2815
    %v2817 = vmul.f32 %v2313, %v2816
    %vm2818 = vcmp.eq.f32.partialorder %v2313, inf
    %v2819 = vsel %vm2818, %v2313, %v2817
    %vm2820 = vcmp.eq.f32.partialorder %v2313, 0.0
    %v2821 = vand.u32 %v2313, 2147483648
    %v2822 = vsel %vm2820, %v2821, %v2819
    %v2823 = vrsqrt.pop %v2314
    %v2824 = vmul.f32 %v2823, %v2314
    %v2825 = vmul.f32 %v2824, %v2823
    %v2826 = vmul.f32 0.5, %v2825
    %v2827 = vsub.f32 1.5, %v2826
    %v2828 = vmul.f32 %v2823, %v2827
    %v2829 = vmul.f32 %v2314, %v2828
    %vm2830 = vcmp.eq.f32.partialorder %v2314, inf
    %v2831 = vsel %vm2830, %v2314, %v2829
    %vm2832 = vcmp.eq.f32.partialorder %v2314, 0.0
    %v2833 = vand.u32 %v2314, 2147483648
    %v2834 = vsel %vm2832, %v2833, %v2831
    %v2835 = vrsqrt.pop %v2315
    %v2836 = vmul.f32 %v2835, %v2315
    %v2837 = vmul.f32 %v2836, %v2835
    %v2838 = vmul.f32 0.5, %v2837
    %v2839 = vsub.f32 1.5, %v2838
    %v2840 = vmul.f32 %v2835, %v2839
    %v2841 = vmul.f32 %v2315, %v2840
    %vm2842 = vcmp.eq.f32.partialorder %v2315, inf
    %v2843 = vsel %vm2842, %v2315, %v2841
    %vm2844 = vcmp.eq.f32.partialorder %v2315, 0.0
    %v2845 = vand.u32 %v2315, 2147483648
    %v2846 = vsel %vm2844, %v2845, %v2843
    %v2847 = vrsqrt.pop %v2316
    %v2848 = vmul.f32 %v2847, %v2316
    %v2849 = vmul.f32 %v2848, %v2847
    %v2850 = vmul.f32 0.5, %v2849
    %v2851 = vsub.f32 1.5, %v2850
    %v2852 = vmul.f32 %v2847, %v2851
    %v2853 = vmul.f32 %v2316, %v2852
    %vm2854 = vcmp.eq.f32.partialorder %v2316, inf
    %v2855 = vsel %vm2854, %v2316, %v2853
    %vm2856 = vcmp.eq.f32.partialorder %v2316, 0.0
    %v2857 = vand.u32 %v2316, 2147483648
    %v2858 = vsel %vm2856, %v2857, %v2855
    %v2859 = vrsqrt.pop %v2317
    %v2860 = vmul.f32 %v2859, %v2317
    %v2861 = vmul.f32 %v2860, %v2859
    %v2862 = vmul.f32 0.5, %v2861
    %v2863 = vsub.f32 1.5, %v2862
    %v2864 = vmul.f32 %v2859, %v2863
    %v2865 = vmul.f32 %v2317, %v2864
    %vm2866 = vcmp.eq.f32.partialorder %v2317, inf
    %v2867 = vsel %vm2866, %v2317, %v2865
    %vm2868 = vcmp.eq.f32.partialorder %v2317, 0.0
    %v2869 = vand.u32 %v2317, 2147483648
    %v2870 = vsel %vm2868, %v2869, %v2867
    %v2871 = vrsqrt.pop %v2318
    %v2872 = vmul.f32 %v2871, %v2318
    %v2873 = vmul.f32 %v2872, %v2871
    %v2874 = vmul.f32 0.5, %v2873
    %v2875 = vsub.f32 1.5, %v2874
    %v2876 = vmul.f32 %v2871, %v2875
    %v2877 = vmul.f32 %v2318, %v2876
    %vm2878 = vcmp.eq.f32.partialorder %v2318, inf
    %v2879 = vsel %vm2878, %v2318, %v2877
    %vm2880 = vcmp.eq.f32.partialorder %v2318, 0.0
    %v2881 = vand.u32 %v2318, 2147483648
    %v2882 = vsel %vm2880, %v2881, %v2879
    %v2883 = vrsqrt.pop %v2319
    %v2884 = vmul.f32 %v2883, %v2319
    %v2885 = vmul.f32 %v2884, %v2883
    %v2886 = vmul.f32 0.5, %v2885
    %v2887 = vsub.f32 1.5, %v2886
    %v2888 = vmul.f32 %v2883, %v2887
    %v2889 = vmul.f32 %v2319, %v2888
    %vm2890 = vcmp.eq.f32.partialorder %v2319, inf
    %v2891 = vsel %vm2890, %v2319, %v2889
    %vm2892 = vcmp.eq.f32.partialorder %v2319, 0.0
    %v2893 = vand.u32 %v2319, 2147483648
    %v2894 = vsel %vm2892, %v2893, %v2891
    %v2895 = vrsqrt.pop %v2320
    %v2896 = vmul.f32 %v2895, %v2320
    %v2897 = vmul.f32 %v2896, %v2895
    %v2898 = vmul.f32 0.5, %v2897
    %v2899 = vsub.f32 1.5, %v2898
    %v2900 = vmul.f32 %v2895, %v2899
    %v2901 = vmul.f32 %v2320, %v2900
    %vm2902 = vcmp.eq.f32.partialorder %v2320, inf
    %v2903 = vsel %vm2902, %v2320, %v2901
    %vm2904 = vcmp.eq.f32.partialorder %v2320, 0.0
    %v2905 = vand.u32 %v2320, 2147483648
    %v2906 = vsel %vm2904, %v2905, %v2903
    %v2907 = vrsqrt.pop %v2321
    %v2908 = vmul.f32 %v2907, %v2321
    %v2909 = vmul.f32 %v2908, %v2907
    %v2910 = vmul.f32 0.5, %v2909
    %v2911 = vsub.f32 1.5, %v2910
    %v2912 = vmul.f32 %v2907, %v2911
    %v2913 = vmul.f32 %v2321, %v2912
    %vm2914 = vcmp.eq.f32.partialorder %v2321, inf
    %v2915 = vsel %vm2914, %v2321, %v2913
    %vm2916 = vcmp.eq.f32.partialorder %v2321, 0.0
    %v2917 = vand.u32 %v2321, 2147483648
    %v2918 = vsel %vm2916, %v2917, %v2915
    %v2919 = vrsqrt.pop %v2322
    %v2920 = vmul.f32 %v2919, %v2322
    %v2921 = vmul.f32 %v2920, %v2919
    %v2922 = vmul.f32 0.5, %v2921
    %v2923 = vsub.f32 1.5, %v2922
    %v2924 = vmul.f32 %v2919, %v2923
    %v2925 = vmul.f32 %v2322, %v2924
    %vm2926 = vcmp.eq.f32.partialorder %v2322, inf
    %v2927 = vsel %vm2926, %v2322, %v2925
    %vm2928 = vcmp.eq.f32.partialorder %v2322, 0.0
    %v2929 = vand.u32 %v2322, 2147483648
    %v2930 = vsel %vm2928, %v2929, %v2927
    %v2931 = vrsqrt.pop %v2323
    %v2932 = vmul.f32 %v2931, %v2323
    %v2933 = vmul.f32 %v2932, %v2931
    %v2934 = vmul.f32 0.5, %v2933
    %v2935 = vsub.f32 1.5, %v2934
    %v2936 = vmul.f32 %v2931, %v2935
    %v2937 = vmul.f32 %v2323, %v2936
    %vm2938 = vcmp.eq.f32.partialorder %v2323, inf
    %v2939 = vsel %vm2938, %v2323, %v2937
    %vm2940 = vcmp.eq.f32.partialorder %v2323, 0.0
    %v2941 = vand.u32 %v2323, 2147483648
    %v2942 = vsel %vm2940, %v2941, %v2939
    %v2943 = vrsqrt.pop %v2324
    %v2944 = vmul.f32 %v2943, %v2324
    %v2945 = vmul.f32 %v2944, %v2943
    %v2946 = vmul.f32 0.5, %v2945
    %v2947 = vsub.f32 1.5, %v2946
    %v2948 = vmul.f32 %v2943, %v2947
    %v2949 = vmul.f32 %v2324, %v2948
    %vm2950 = vcmp.eq.f32.partialorder %v2324, inf
    %v2951 = vsel %vm2950, %v2324, %v2949
    %vm2952 = vcmp.eq.f32.partialorder %v2324, 0.0
    %v2953 = vand.u32 %v2324, 2147483648
    %v2954 = vsel %vm2952, %v2953, %v2951
    %v2955 = vrsqrt.pop %v2325
    %v2956 = vmul.f32 %v2955, %v2325
    %v2957 = vmul.f32 %v2956, %v2955
    %v2958 = vmul.f32 0.5, %v2957
    %v2959 = vsub.f32 1.5, %v2958
    %v2960 = vmul.f32 %v2955, %v2959
    %v2961 = vmul.f32 %v2325, %v2960
    %vm2962 = vcmp.eq.f32.partialorder %v2325, inf
    %v2963 = vsel %vm2962, %v2325, %v2961
    %vm2964 = vcmp.eq.f32.partialorder %v2325, 0.0
    %v2965 = vand.u32 %v2325, 2147483648
    %v2966 = vsel %vm2964, %v2965, %v2963
    %v2967 = vrsqrt.pop %v2326
    %v2968 = vmul.f32 %v2967, %v2326
    %v2969 = vmul.f32 %v2968, %v2967
    %v2970 = vmul.f32 0.5, %v2969
    %v2971 = vsub.f32 1.5, %v2970
    %v2972 = vmul.f32 %v2967, %v2971
    %v2973 = vmul.f32 %v2326, %v2972
    %vm2974 = vcmp.eq.f32.partialorder %v2326, inf
    %v2975 = vsel %vm2974, %v2326, %v2973
    %vm2976 = vcmp.eq.f32.partialorder %v2326, 0.0
    %v2977 = vand.u32 %v2326, 2147483648
    %v2978 = vsel %vm2976, %v2977, %v2975
    %v2979 = vrsqrt.pop %v2327
    %v2980 = vmul.f32 %v2979, %v2327
    %v2981 = vmul.f32 %v2980, %v2979
    %v2982 = vmul.f32 0.5, %v2981
    %v2983 = vsub.f32 1.5, %v2982
    %v2984 = vmul.f32 %v2979, %v2983
    %v2985 = vmul.f32 %v2327, %v2984
    %vm2986 = vcmp.eq.f32.partialorder %v2327, inf
    %v2987 = vsel %vm2986, %v2327, %v2985
    %vm2988 = vcmp.eq.f32.partialorder %v2327, 0.0
    %v2989 = vand.u32 %v2327, 2147483648
    %v2990 = vsel %vm2988, %v2989, %v2987
    %v2991 = vrsqrt.pop %v2328
    %v2992 = vmul.f32 %v2991, %v2328
    %v2993 = vmul.f32 %v2992, %v2991
    %v2994 = vmul.f32 0.5, %v2993
    %v2995 = vsub.f32 1.5, %v2994
    %v2996 = vmul.f32 %v2991, %v2995
    %v2997 = vmul.f32 %v2328, %v2996
    %vm2998 = vcmp.eq.f32.partialorder %v2328, inf
    %v2999 = vsel %vm2998, %v2328, %v2997
    %vm3000 = vcmp.eq.f32.partialorder %v2328, 0.0
    %v3001 = vand.u32 %v2328, 2147483648
    %v3002 = vsel %vm3000, %v3001, %v2999
    %v3003 = vrsqrt.pop %v2329
    %v3004 = vmul.f32 %v3003, %v2329
    %v3005 = vmul.f32 %v3004, %v3003
    %v3006 = vmul.f32 0.5, %v3005
    %v3007 = vsub.f32 1.5, %v3006
    %v3008 = vmul.f32 %v3003, %v3007
    %v3009 = vmul.f32 %v2329, %v3008
    %vm3010 = vcmp.eq.f32.partialorder %v2329, inf
    %v3011 = vsel %vm3010, %v2329, %v3009
    %vm3012 = vcmp.eq.f32.partialorder %v2329, 0.0
    %v3013 = vand.u32 %v2329, 2147483648
    %v3014 = vsel %vm3012, %v3013, %v3011
    %v3015 = vrsqrt.pop %v2330
    %v3016 = vmul.f32 %v3015, %v2330
    %v3017 = vmul.f32 %v3016, %v3015
    %v3018 = vmul.f32 0.5, %v3017
    %v3019 = vsub.f32 1.5, %v3018
    %v3020 = vmul.f32 %v3015, %v3019
    %v3021 = vmul.f32 %v2330, %v3020
    %vm3022 = vcmp.eq.f32.partialorder %v2330, inf
    %v3023 = vsel %vm3022, %v2330, %v3021
    %vm3024 = vcmp.eq.f32.partialorder %v2330, 0.0
    %v3025 = vand.u32 %v2330, 2147483648
    %v3026 = vsel %vm3024, %v3025, %v3023
    %v3027 = vrsqrt.pop %v2331
    %v3028 = vmul.f32 %v3027, %v2331
    %v3029 = vmul.f32 %v3028, %v3027
    %v3030 = vmul.f32 0.5, %v3029
    %v3031 = vsub.f32 1.5, %v3030
    %v3032 = vmul.f32 %v3027, %v3031
    %v3033 = vmul.f32 %v2331, %v3032
    %vm3034 = vcmp.eq.f32.partialorder %v2331, inf
    %v3035 = vsel %vm3034, %v2331, %v3033
    %vm3036 = vcmp.eq.f32.partialorder %v2331, 0.0
    %v3037 = vand.u32 %v2331, 2147483648
    %v3038 = vsel %vm3036, %v3037, %v3035
    %v3039 = vrsqrt.pop %v2332
    %v3040 = vmul.f32 %v3039, %v2332
    %v3041 = vmul.f32 %v3040, %v3039
    %v3042 = vmul.f32 0.5, %v3041
    %v3043 = vsub.f32 1.5, %v3042
    %v3044 = vmul.f32 %v3039, %v3043
    %v3045 = vmul.f32 %v2332, %v3044
    %vm3046 = vcmp.eq.f32.partialorder %v2332, inf
    %v3047 = vsel %vm3046, %v2332, %v3045
    %vm3048 = vcmp.eq.f32.partialorder %v2332, 0.0
    %v3049 = vand.u32 %v2332, 2147483648
    %v3050 = vsel %vm3048, %v3049, %v3047
    %v3051 = vrsqrt.pop %v2333
    %v3052 = vmul.f32 %v3051, %v2333
    %v3053 = vmul.f32 %v3052, %v3051
    %v3054 = vmul.f32 0.5, %v3053
    %v3055 = vsub.f32 1.5, %v3054
    %v3056 = vmul.f32 %v3051, %v3055
    %v3057 = vmul.f32 %v2333, %v3056
    %vm3058 = vcmp.eq.f32.partialorder %v2333, inf
    %v3059 = vsel %vm3058, %v2333, %v3057
    %vm3060 = vcmp.eq.f32.partialorder %v2333, 0.0
    %v3061 = vand.u32 %v2333, 2147483648
    %v3062 = vsel %vm3060, %v3061, %v3059
    %v3063 = vrsqrt.pop %v2334
    %v3064 = vmul.f32 %v3063, %v2334
    %v3065 = vmul.f32 %v3064, %v3063
    %v3066 = vmul.f32 0.5, %v3065
    %v3067 = vsub.f32 1.5, %v3066
    %v3068 = vmul.f32 %v3063, %v3067
    %v3069 = vmul.f32 %v2334, %v3068
    %vm3070 = vcmp.eq.f32.partialorder %v2334, inf
    %v3071 = vsel %vm3070, %v2334, %v3069
    %vm3072 = vcmp.eq.f32.partialorder %v2334, 0.0
    %v3073 = vand.u32 %v2334, 2147483648
    %v3074 = vsel %vm3072, %v3073, %v3071
    %v3075 = vrsqrt.pop %v2335
    %v3076 = vmul.f32 %v3075, %v2335
    %v3077 = vmul.f32 %v3076, %v3075
    %v3078 = vmul.f32 0.5, %v3077
    %v3079 = vsub.f32 1.5, %v3078
    %v3080 = vmul.f32 %v3075, %v3079
    %v3081 = vmul.f32 %v2335, %v3080
    %vm3082 = vcmp.eq.f32.partialorder %v2335, inf
    %v3083 = vsel %vm3082, %v2335, %v3081
    %vm3084 = vcmp.eq.f32.partialorder %v2335, 0.0
    %v3085 = vand.u32 %v2335, 2147483648
    %v3086 = vsel %vm3084, %v3085, %v3083
    %v3087 = vrsqrt.pop %v2336
    %v3088 = vmul.f32 %v3087, %v2336
    %v3089 = vmul.f32 %v3088, %v3087
    %v3090 = vmul.f32 0.5, %v3089
    %v3091 = vsub.f32 1.5, %v3090
    %v3092 = vmul.f32 %v3087, %v3091
    %v3093 = vmul.f32 %v2336, %v3092
    %vm3094 = vcmp.eq.f32.partialorder %v2336, inf
    %v3095 = vsel %vm3094, %v2336, %v3093
    %vm3096 = vcmp.eq.f32.partialorder %v2336, 0.0
    %v3097 = vand.u32 %v2336, 2147483648
    %v3098 = vsel %vm3096, %v3097, %v3095
    %v3099 = vrsqrt.pop %v2337
    %v3100 = vmul.f32 %v3099, %v2337
    %v3101 = vmul.f32 %v3100, %v3099
    %v3102 = vmul.f32 0.5, %v3101
    %v3103 = vsub.f32 1.5, %v3102
    %v3104 = vmul.f32 %v3099, %v3103
    %v3105 = vmul.f32 %v2337, %v3104
    %vm3106 = vcmp.eq.f32.partialorder %v2337, inf
    %v3107 = vsel %vm3106, %v2337, %v3105
    %vm3108 = vcmp.eq.f32.partialorder %v2337, 0.0
    %v3109 = vand.u32 %v2337, 2147483648
    %v3110 = vsel %vm3108, %v3109, %v3107
    %v3111 = vrsqrt.pop %v2338
    %v3112 = vmul.f32 %v3111, %v2338
    %v3113 = vmul.f32 %v3112, %v3111
    %v3114 = vmul.f32 0.5, %v3113
    %v3115 = vsub.f32 1.5, %v3114
    %v3116 = vmul.f32 %v3111, %v3115
    %v3117 = vmul.f32 %v2338, %v3116
    %vm3118 = vcmp.eq.f32.partialorder %v2338, inf
    %v3119 = vsel %vm3118, %v2338, %v3117
    %vm3120 = vcmp.eq.f32.partialorder %v2338, 0.0
    %v3121 = vand.u32 %v2338, 2147483648
    %v3122 = vsel %vm3120, %v3121, %v3119
    %v3123 = vrsqrt.pop %v2339
    %v3124 = vmul.f32 %v3123, %v2339
    %v3125 = vmul.f32 %v3124, %v3123
    %v3126 = vmul.f32 0.5, %v3125
    %v3127 = vsub.f32 1.5, %v3126
    %v3128 = vmul.f32 %v3123, %v3127
    %v3129 = vmul.f32 %v2339, %v3128
    %vm3130 = vcmp.eq.f32.partialorder %v2339, inf
    %v3131 = vsel %vm3130, %v2339, %v3129
    %vm3132 = vcmp.eq.f32.partialorder %v2339, 0.0
    %v3133 = vand.u32 %v2339, 2147483648
    %v3134 = vsel %vm3132, %v3133, %v3131
    %v3135 = vrsqrt.pop %v2340
    %v3136 = vmul.f32 %v3135, %v2340
    %v3137 = vmul.f32 %v3136, %v3135
    %v3138 = vmul.f32 0.5, %v3137
    %v3139 = vsub.f32 1.5, %v3138
    %v3140 = vmul.f32 %v3135, %v3139
    %v3141 = vmul.f32 %v2340, %v3140
    %vm3142 = vcmp.eq.f32.partialorder %v2340, inf
    %v3143 = vsel %vm3142, %v2340, %v3141
    %vm3144 = vcmp.eq.f32.partialorder %v2340, 0.0
    %v3145 = vand.u32 %v2340, 2147483648
    %v3146 = vsel %vm3144, %v3145, %v3143
    %v3147 = vrsqrt.pop %v2341
    %v3148 = vmul.f32 %v3147, %v2341
    %v3149 = vmul.f32 %v3148, %v3147
    %v3150 = vmul.f32 0.5, %v3149
    %v3151 = vsub.f32 1.5, %v3150
    %v3152 = vmul.f32 %v3147, %v3151
    %v3153 = vmul.f32 %v2341, %v3152
    %vm3154 = vcmp.eq.f32.partialorder %v2341, inf
    %v3155 = vsel %vm3154, %v2341, %v3153
    %vm3156 = vcmp.eq.f32.partialorder %v2341, 0.0
    %v3157 = vand.u32 %v2341, 2147483648
    %v3158 = vsel %vm3156, %v3157, %v3155
    %v3159 = vrsqrt.pop %v2342
    %v3160 = vmul.f32 %v3159, %v2342
    %v3161 = vmul.f32 %v3160, %v3159
    %v3162 = vmul.f32 0.5, %v3161
    %v3163 = vsub.f32 1.5, %v3162
    %v3164 = vmul.f32 %v3159, %v3163
    %v3165 = vmul.f32 %v2342, %v3164
    %vm3166 = vcmp.eq.f32.partialorder %v2342, inf
    %v3167 = vsel %vm3166, %v2342, %v3165
    %vm3168 = vcmp.eq.f32.partialorder %v2342, 0.0
    %v3169 = vand.u32 %v2342, 2147483648
    %v3170 = vsel %vm3168, %v3169, %v3167
    %v3171 = vrsqrt.pop %v2343
    %v3172 = vmul.f32 %v3171, %v2343
    %v3173 = vmul.f32 %v3172, %v3171
    %v3174 = vmul.f32 0.5, %v3173
    %v3175 = vsub.f32 1.5, %v3174
    %v3176 = vmul.f32 %v3171, %v3175
    %v3177 = vmul.f32 %v2343, %v3176
    %vm3178 = vcmp.eq.f32.partialorder %v2343, inf
    %v3179 = vsel %vm3178, %v2343, %v3177
    %vm3180 = vcmp.eq.f32.partialorder %v2343, 0.0
    %v3181 = vand.u32 %v2343, 2147483648
    %v3182 = vsel %vm3180, %v3181, %v3179
    %v3183 = vrsqrt.pop %v2344
    %v3184 = vmul.f32 %v3183, %v2344
    %v3185 = vmul.f32 %v3184, %v3183
    %v3186 = vmul.f32 0.5, %v3185
    %v3187 = vsub.f32 1.5, %v3186
    %v3188 = vmul.f32 %v3183, %v3187
    %v3189 = vmul.f32 %v2344, %v3188
    %vm3190 = vcmp.eq.f32.partialorder %v2344, inf
    %v3191 = vsel %vm3190, %v2344, %v3189
    %vm3192 = vcmp.eq.f32.partialorder %v2344, 0.0
    %v3193 = vand.u32 %v2344, 2147483648
    %v3194 = vsel %vm3192, %v3193, %v3191
    %v3195 = vrsqrt.pop %v2345
    %v3196 = vmul.f32 %v3195, %v2345
    %v3197 = vmul.f32 %v3196, %v3195
    %v3198 = vmul.f32 0.5, %v3197
    %v3199 = vsub.f32 1.5, %v3198
    %v3200 = vmul.f32 %v3195, %v3199
    %v3201 = vmul.f32 %v2345, %v3200
    %vm3202 = vcmp.eq.f32.partialorder %v2345, inf
    %v3203 = vsel %vm3202, %v2345, %v3201
    %vm3204 = vcmp.eq.f32.partialorder %v2345, 0.0
    %v3205 = vand.u32 %v2345, 2147483648
    %v3206 = vsel %vm3204, %v3205, %v3203
    %v3207 = vrsqrt.pop %v2346
    %v3208 = vmul.f32 %v3207, %v2346
    %v3209 = vmul.f32 %v3208, %v3207
    %v3210 = vmul.f32 0.5, %v3209
    %v3211 = vsub.f32 1.5, %v3210
    %v3212 = vmul.f32 %v3207, %v3211
    %v3213 = vmul.f32 %v2346, %v3212
    %vm3214 = vcmp.eq.f32.partialorder %v2346, inf
    %v3215 = vsel %vm3214, %v2346, %v3213
    %vm3216 = vcmp.eq.f32.partialorder %v2346, 0.0
    %v3217 = vand.u32 %v2346, 2147483648
    %v3218 = vsel %vm3216, %v3217, %v3215
    %v3219 = vrsqrt.pop %v2347
    %v3220 = vmul.f32 %v3219, %v2347
    %v3221 = vmul.f32 %v3220, %v3219
    %v3222 = vmul.f32 0.5, %v3221
    %v3223 = vsub.f32 1.5, %v3222
    %v3224 = vmul.f32 %v3219, %v3223
    %v3225 = vmul.f32 %v2347, %v3224
    %vm3226 = vcmp.eq.f32.partialorder %v2347, inf
    %v3227 = vsel %vm3226, %v2347, %v3225
    %vm3228 = vcmp.eq.f32.partialorder %v2347, 0.0
    %v3229 = vand.u32 %v2347, 2147483648
    %v3230 = vsel %vm3228, %v3229, %v3227
    %v3231 = vrsqrt.pop %v2348
    %v3232 = vmul.f32 %v3231, %v2348
    %v3233 = vmul.f32 %v3232, %v3231
    %v3234 = vmul.f32 0.5, %v3233
    %v3235 = vsub.f32 1.5, %v3234
    %v3236 = vmul.f32 %v3231, %v3235
    %v3237 = vmul.f32 %v2348, %v3236
    %vm3238 = vcmp.eq.f32.partialorder %v2348, inf
    %v3239 = vsel %vm3238, %v2348, %v3237
    %vm3240 = vcmp.eq.f32.partialorder %v2348, 0.0
    %v3241 = vand.u32 %v2348, 2147483648
    %v3242 = vsel %vm3240, %v3241, %v3239
    %v3243 = vrsqrt.pop %v2349
    %v3244 = vmul.f32 %v3243, %v2349
    %v3245 = vmul.f32 %v3244, %v3243
    %v3246 = vmul.f32 0.5, %v3245
    %v3247 = vsub.f32 1.5, %v3246
    %v3248 = vmul.f32 %v3243, %v3247
    %v3249 = vmul.f32 %v2349, %v3248
    %vm3250 = vcmp.eq.f32.partialorder %v2349, inf
    %v3251 = vsel %vm3250, %v2349, %v3249
    %vm3252 = vcmp.eq.f32.partialorder %v2349, 0.0
    %v3253 = vand.u32 %v2349, 2147483648
    %v3254 = vsel %vm3252, %v3253, %v3251
    %v3255 = vrsqrt.pop %v2350
    %v3256 = vmul.f32 %v3255, %v2350
    %v3257 = vmul.f32 %v3256, %v3255
    %v3258 = vmul.f32 0.5, %v3257
    %v3259 = vsub.f32 1.5, %v3258
    %v3260 = vmul.f32 %v3255, %v3259
    %v3261 = vmul.f32 %v2350, %v3260
    %vm3262 = vcmp.eq.f32.partialorder %v2350, inf
    %v3263 = vsel %vm3262, %v2350, %v3261
    %vm3264 = vcmp.eq.f32.partialorder %v2350, 0.0
    %v3265 = vand.u32 %v2350, 2147483648
    %v3266 = vsel %vm3264, %v3265, %v3263
    %v3267 = vrsqrt.pop %v2351
    %v3268 = vmul.f32 %v3267, %v2351
    %v3269 = vmul.f32 %v3268, %v3267
    %v3270 = vmul.f32 0.5, %v3269
    %v3271 = vsub.f32 1.5, %v3270
    %v3272 = vmul.f32 %v3267, %v3271
    %v3273 = vmul.f32 %v2351, %v3272
    %vm3274 = vcmp.eq.f32.partialorder %v2351, inf
    %v3275 = vsel %vm3274, %v2351, %v3273
    %vm3276 = vcmp.eq.f32.partialorder %v2351, 0.0
    %v3277 = vand.u32 %v2351, 2147483648
    %v3278 = vsel %vm3276, %v3277, %v3275
    %v3279 = vrsqrt.pop %v2352
    %v3280 = vmul.f32 %v3279, %v2352
    %v3281 = vmul.f32 %v3280, %v3279
    %v3282 = vmul.f32 0.5, %v3281
    %v3283 = vsub.f32 1.5, %v3282
    %v3284 = vmul.f32 %v3279, %v3283
    %v3285 = vmul.f32 %v2352, %v3284
    %vm3286 = vcmp.eq.f32.partialorder %v2352, inf
    %v3287 = vsel %vm3286, %v2352, %v3285
    %vm3288 = vcmp.eq.f32.partialorder %v2352, 0.0
    %v3289 = vand.u32 %v2352, 2147483648
    %v3290 = vsel %vm3288, %v3289, %v3287
    %v3291 = vrsqrt.pop %v2353
    %v3292 = vmul.f32 %v3291, %v2353
    %v3293 = vmul.f32 %v3292, %v3291
    %v3294 = vmul.f32 0.5, %v3293
    %v3295 = vsub.f32 1.5, %v3294
    %v3296 = vmul.f32 %v3291, %v3295
    %v3297 = vmul.f32 %v2353, %v3296
    %vm3298 = vcmp.eq.f32.partialorder %v2353, inf
    %v3299 = vsel %vm3298, %v2353, %v3297
    %vm3300 = vcmp.eq.f32.partialorder %v2353, 0.0
    %v3301 = vand.u32 %v2353, 2147483648
    %v3302 = vsel %vm3300, %v3301, %v3299
    %v3303 = vrsqrt.pop %v2354
    %v3304 = vmul.f32 %v3303, %v2354
    %v3305 = vmul.f32 %v3304, %v3303
    %v3306 = vmul.f32 0.5, %v3305
    %v3307 = vsub.f32 1.5, %v3306
    %v3308 = vmul.f32 %v3303, %v3307
    %v3309 = vmul.f32 %v2354, %v3308
    %vm3310 = vcmp.eq.f32.partialorder %v2354, inf
    %v3311 = vsel %vm3310, %v2354, %v3309
    %vm3312 = vcmp.eq.f32.partialorder %v2354, 0.0
    %v3313 = vand.u32 %v2354, 2147483648
    %v3314 = vsel %vm3312, %v3313, %v3311
    %v3315 = vrsqrt.pop %v2483
    %v3316 = vmul.f32 %v3315, %v2483
    %v3317 = vmul.f32 %v3316, %v3315
    %v3318 = vmul.f32 0.5, %v3317
    %v3319 = vsub.f32 1.5, %v3318
    %v3320 = vmul.f32 %v3315, %v3319
    %v3321 = vmul.f32 %v2483, %v3320
    %vm3322 = vcmp.eq.f32.partialorder %v2483, inf
    %v3323 = vsel %vm3322, %v2483, %v3321
    %vm3324 = vcmp.eq.f32.partialorder %v2483, 0.0
    %v3325 = vand.u32 %v2483, 2147483648
    %v3326 = vsel %vm3324, %v3325, %v3323
    %v3327 = vrsqrt.pop %v2484
    %v3328 = vmul.f32 %v3327, %v2484
    %v3329 = vmul.f32 %v3328, %v3327
    %v3330 = vmul.f32 0.5, %v3329
    %v3331 = vsub.f32 1.5, %v3330
    %v3332 = vmul.f32 %v3327, %v3331
    %v3333 = vmul.f32 %v2484, %v3332
    %vm3334 = vcmp.eq.f32.partialorder %v2484, inf
    %v3335 = vsel %vm3334, %v2484, %v3333
    %vm3336 = vcmp.eq.f32.partialorder %v2484, 0.0
    %v3337 = vand.u32 %v2484, 2147483648
    %v3338 = vsel %vm3336, %v3337, %v3335
    %v3339 = vrsqrt.pop %v2485
    %v3340 = vmul.f32 %v3339, %v2485
    %v3341 = vmul.f32 %v3340, %v3339
    %v3342 = vmul.f32 0.5, %v3341
    %v3343 = vsub.f32 1.5, %v3342
    %v3344 = vmul.f32 %v3339, %v3343
    %v3345 = vmul.f32 %v2485, %v3344
    %vm3346 = vcmp.eq.f32.partialorder %v2485, inf
    %v3347 = vsel %vm3346, %v2485, %v3345
    %vm3348 = vcmp.eq.f32.partialorder %v2485, 0.0
    %v3349 = vand.u32 %v2485, 2147483648
    %v3350 = vsel %vm3348, %v3349, %v3347
    %v3351 = vrsqrt.pop %v2486
    %v3352 = vmul.f32 %v3351, %v2486
    %v3353 = vmul.f32 %v3352, %v3351
    %v3354 = vmul.f32 0.5, %v3353
    %v3355 = vsub.f32 1.5, %v3354
    %v3356 = vmul.f32 %v3351, %v3355
    %v3357 = vmul.f32 %v2486, %v3356
    %vm3358 = vcmp.eq.f32.partialorder %v2486, inf
    %v3359 = vsel %vm3358, %v2486, %v3357
    %vm3360 = vcmp.eq.f32.partialorder %v2486, 0.0
    %v3361 = vand.u32 %v2486, 2147483648
    %v3362 = vsel %vm3360, %v3361, %v3359
    %v3363 = vrsqrt.pop %v2487
    %v3364 = vmul.f32 %v3363, %v2487
    %v3365 = vmul.f32 %v3364, %v3363
    %v3366 = vmul.f32 0.5, %v3365
    %v3367 = vsub.f32 1.5, %v3366
    %v3368 = vmul.f32 %v3363, %v3367
    %v3369 = vmul.f32 %v2487, %v3368
    %vm3370 = vcmp.eq.f32.partialorder %v2487, inf
    %v3371 = vsel %vm3370, %v2487, %v3369
    %vm3372 = vcmp.eq.f32.partialorder %v2487, 0.0
    %v3373 = vand.u32 %v2487, 2147483648
    %v3374 = vsel %vm3372, %v3373, %v3371
    %v3375 = vrsqrt.pop %v2488
    %v3376 = vmul.f32 %v3375, %v2488
    %v3377 = vmul.f32 %v3376, %v3375
    %v3378 = vmul.f32 0.5, %v3377
    %v3379 = vsub.f32 1.5, %v3378
    %v3380 = vmul.f32 %v3375, %v3379
    %v3381 = vmul.f32 %v2488, %v3380
    %vm3382 = vcmp.eq.f32.partialorder %v2488, inf
    %v3383 = vsel %vm3382, %v2488, %v3381
    %vm3384 = vcmp.eq.f32.partialorder %v2488, 0.0
    %v3385 = vand.u32 %v2488, 2147483648
    %v3386 = vsel %vm3384, %v3385, %v3383
    %v3387 = vrsqrt.pop %v2489
    %v3388 = vmul.f32 %v3387, %v2489
    %v3389 = vmul.f32 %v3388, %v3387
    %v3390 = vmul.f32 0.5, %v3389
    %v3391 = vsub.f32 1.5, %v3390
    %v3392 = vmul.f32 %v3387, %v3391
    %v3393 = vmul.f32 %v2489, %v3392
    %vm3394 = vcmp.eq.f32.partialorder %v2489, inf
    %v3395 = vsel %vm3394, %v2489, %v3393
    %vm3396 = vcmp.eq.f32.partialorder %v2489, 0.0
    %v3397 = vand.u32 %v2489, 2147483648
    %v3398 = vsel %vm3396, %v3397, %v3395
    %v3399 = vrsqrt.pop %v2490
    %v3400 = vmul.f32 %v3399, %v2490
    %v3401 = vmul.f32 %v3400, %v3399
    %v3402 = vmul.f32 0.5, %v3401
    %v3403 = vsub.f32 1.5, %v3402
    %v3404 = vmul.f32 %v3399, %v3403
    %v3405 = vmul.f32 %v2490, %v3404
    %vm3406 = vcmp.eq.f32.partialorder %v2490, inf
    %v3407 = vsel %vm3406, %v2490, %v3405
    %vm3408 = vcmp.eq.f32.partialorder %v2490, 0.0
    %v3409 = vand.u32 %v2490, 2147483648
    %v3410 = vsel %vm3408, %v3409, %v3407
    %v3411 = vrsqrt.pop %v2491
    %v3412 = vmul.f32 %v3411, %v2491
    %v3413 = vmul.f32 %v3412, %v3411
    %v3414 = vmul.f32 0.5, %v3413
    %v3415 = vsub.f32 1.5, %v3414
    %v3416 = vmul.f32 %v3411, %v3415
    %v3417 = vmul.f32 %v2491, %v3416
    %vm3418 = vcmp.eq.f32.partialorder %v2491, inf
    %v3419 = vsel %vm3418, %v2491, %v3417
    %vm3420 = vcmp.eq.f32.partialorder %v2491, 0.0
    %v3421 = vand.u32 %v2491, 2147483648
    %v3422 = vsel %vm3420, %v3421, %v3419
    %v3423 = vrsqrt.pop %v2492
    %v3424 = vmul.f32 %v3423, %v2492
    %v3425 = vmul.f32 %v3424, %v3423
    %v3426 = vmul.f32 0.5, %v3425
    %v3427 = vsub.f32 1.5, %v3426
    %v3428 = vmul.f32 %v3423, %v3427
    %v3429 = vmul.f32 %v2492, %v3428
    %vm3430 = vcmp.eq.f32.partialorder %v2492, inf
    %v3431 = vsel %vm3430, %v2492, %v3429
    %vm3432 = vcmp.eq.f32.partialorder %v2492, 0.0
    %v3433 = vand.u32 %v2492, 2147483648
    %v3434 = vsel %vm3432, %v3433, %v3431
    %v3435 = vrsqrt.pop %v2493
    %v3436 = vmul.f32 %v3435, %v2493
    %v3437 = vmul.f32 %v3436, %v3435
    %v3438 = vmul.f32 0.5, %v3437
    %v3439 = vsub.f32 1.5, %v3438
    %v3440 = vmul.f32 %v3435, %v3439
    %v3441 = vmul.f32 %v2493, %v3440
    %vm3442 = vcmp.eq.f32.partialorder %v2493, inf
    %v3443 = vsel %vm3442, %v2493, %v3441
    %vm3444 = vcmp.eq.f32.partialorder %v2493, 0.0
    %v3445 = vand.u32 %v2493, 2147483648
    %v3446 = vsel %vm3444, %v3445, %v3443
    %v3447 = vrsqrt.pop %v2494
    %v3448 = vmul.f32 %v3447, %v2494
    %v3449 = vmul.f32 %v3448, %v3447
    %v3450 = vmul.f32 0.5, %v3449
    %v3451 = vsub.f32 1.5, %v3450
    %v3452 = vmul.f32 %v3447, %v3451
    %v3453 = vmul.f32 %v2494, %v3452
    %vm3454 = vcmp.eq.f32.partialorder %v2494, inf
    %v3455 = vsel %vm3454, %v2494, %v3453
    %vm3456 = vcmp.eq.f32.partialorder %v2494, 0.0
    %v3457 = vand.u32 %v2494, 2147483648
    %v3458 = vsel %vm3456, %v3457, %v3455
    %v3459 = vrsqrt.pop %v2495
    %v3460 = vmul.f32 %v3459, %v2495
    %v3461 = vmul.f32 %v3460, %v3459
    %v3462 = vmul.f32 0.5, %v3461
    %v3463 = vsub.f32 1.5, %v3462
    %v3464 = vmul.f32 %v3459, %v3463
    %v3465 = vmul.f32 %v2495, %v3464
    %vm3466 = vcmp.eq.f32.partialorder %v2495, inf
    %v3467 = vsel %vm3466, %v2495, %v3465
    %vm3468 = vcmp.eq.f32.partialorder %v2495, 0.0
    %v3469 = vand.u32 %v2495, 2147483648
    %v3470 = vsel %vm3468, %v3469, %v3467
    %v3471 = vrsqrt.pop %v2496
    %v3472 = vmul.f32 %v3471, %v2496
    %v3473 = vmul.f32 %v3472, %v3471
    %v3474 = vmul.f32 0.5, %v3473
    %v3475 = vsub.f32 1.5, %v3474
    %v3476 = vmul.f32 %v3471, %v3475
    %v3477 = vmul.f32 %v2496, %v3476
    %vm3478 = vcmp.eq.f32.partialorder %v2496, inf
    %v3479 = vsel %vm3478, %v2496, %v3477
    %vm3480 = vcmp.eq.f32.partialorder %v2496, 0.0
    %v3481 = vand.u32 %v2496, 2147483648
    %v3482 = vsel %vm3480, %v3481, %v3479
    %v3483 = vrsqrt.pop %v2497
    %v3484 = vmul.f32 %v3483, %v2497
    %v3485 = vmul.f32 %v3484, %v3483
    %v3486 = vmul.f32 0.5, %v3485
    %v3487 = vsub.f32 1.5, %v3486
    %v3488 = vmul.f32 %v3483, %v3487
    %v3489 = vmul.f32 %v2497, %v3488
    %vm3490 = vcmp.eq.f32.partialorder %v2497, inf
    %v3491 = vsel %vm3490, %v2497, %v3489
    %vm3492 = vcmp.eq.f32.partialorder %v2497, 0.0
    %v3493 = vand.u32 %v2497, 2147483648
    %v3494 = vsel %vm3492, %v3493, %v3491
    %v3495 = vrsqrt.pop %v2498
    %v3496 = vmul.f32 %v3495, %v2498
    %v3497 = vmul.f32 %v3496, %v3495
    %v3498 = vmul.f32 0.5, %v3497
    %v3499 = vsub.f32 1.5, %v3498
    %v3500 = vmul.f32 %v3495, %v3499
    %v3501 = vmul.f32 %v2498, %v3500
    %vm3502 = vcmp.eq.f32.partialorder %v2498, inf
    %v3503 = vsel %vm3502, %v2498, %v3501
    %vm3504 = vcmp.eq.f32.partialorder %v2498, 0.0
    %v3505 = vand.u32 %v2498, 2147483648
    %v3506 = vsel %vm3504, %v3505, %v3503
    %v3507 = vrsqrt.pop %v2499
    %v3508 = vmul.f32 %v3507, %v2499
    %v3509 = vmul.f32 %v3508, %v3507
    %v3510 = vmul.f32 0.5, %v3509
    %v3511 = vsub.f32 1.5, %v3510
    %v3512 = vmul.f32 %v3507, %v3511
    %v3513 = vmul.f32 %v2499, %v3512
    %vm3514 = vcmp.eq.f32.partialorder %v2499, inf
    %v3515 = vsel %vm3514, %v2499, %v3513
    %vm3516 = vcmp.eq.f32.partialorder %v2499, 0.0
    %v3517 = vand.u32 %v2499, 2147483648
    %v3518 = vsel %vm3516, %v3517, %v3515
    %v3519 = vrsqrt.pop %v2500
    %v3520 = vmul.f32 %v3519, %v2500
    %v3521 = vmul.f32 %v3520, %v3519
    %v3522 = vmul.f32 0.5, %v3521
    %v3523 = vsub.f32 1.5, %v3522
    %v3524 = vmul.f32 %v3519, %v3523
    %v3525 = vmul.f32 %v2500, %v3524
    %vm3526 = vcmp.eq.f32.partialorder %v2500, inf
    %v3527 = vsel %vm3526, %v2500, %v3525
    %vm3528 = vcmp.eq.f32.partialorder %v2500, 0.0
    %v3529 = vand.u32 %v2500, 2147483648
    %v3530 = vsel %vm3528, %v3529, %v3527
    %v3531 = vrsqrt.pop %v2501
    %v3532 = vmul.f32 %v3531, %v2501
    %v3533 = vmul.f32 %v3532, %v3531
    %v3534 = vmul.f32 0.5, %v3533
    %v3535 = vsub.f32 1.5, %v3534
    %v3536 = vmul.f32 %v3531, %v3535
    %v3537 = vmul.f32 %v2501, %v3536
    %vm3538 = vcmp.eq.f32.partialorder %v2501, inf
    %v3539 = vsel %vm3538, %v2501, %v3537
    %vm3540 = vcmp.eq.f32.partialorder %v2501, 0.0
    %v3541 = vand.u32 %v2501, 2147483648
    %v3542 = vsel %vm3540, %v3541, %v3539
    %v3543 = vrsqrt.pop %v2502
    %v3544 = vmul.f32 %v3543, %v2502
    %v3545 = vmul.f32 %v3544, %v3543
    %v3546 = vmul.f32 0.5, %v3545
    %v3547 = vsub.f32 1.5, %v3546
    %v3548 = vmul.f32 %v3543, %v3547
    %v3549 = vmul.f32 %v2502, %v3548
    %vm3550 = vcmp.eq.f32.partialorder %v2502, inf
    %v3551 = vsel %vm3550, %v2502, %v3549
    %vm3552 = vcmp.eq.f32.partialorder %v2502, 0.0
    %v3553 = vand.u32 %v2502, 2147483648
    %v3554 = vsel %vm3552, %v3553, %v3551
    %v3555 = vrsqrt.pop %v2503
    %v3556 = vmul.f32 %v3555, %v2503
    %v3557 = vmul.f32 %v3556, %v3555
    %v3558 = vmul.f32 0.5, %v3557
    %v3559 = vsub.f32 1.5, %v3558
    %v3560 = vmul.f32 %v3555, %v3559
    %v3561 = vmul.f32 %v2503, %v3560
    %vm3562 = vcmp.eq.f32.partialorder %v2503, inf
    %v3563 = vsel %vm3562, %v2503, %v3561
    %vm3564 = vcmp.eq.f32.partialorder %v2503, 0.0
    %v3565 = vand.u32 %v2503, 2147483648
    %v3566 = vsel %vm3564, %v3565, %v3563
    %v3567 = vrsqrt.pop %v2504
    %v3568 = vmul.f32 %v3567, %v2504
    %v3569 = vmul.f32 %v3568, %v3567
    %v3570 = vmul.f32 0.5, %v3569
    %v3571 = vsub.f32 1.5, %v3570
    %v3572 = vmul.f32 %v3567, %v3571
    %v3573 = vmul.f32 %v2504, %v3572
    %vm3574 = vcmp.eq.f32.partialorder %v2504, inf
    %v3575 = vsel %vm3574, %v2504, %v3573
    %vm3576 = vcmp.eq.f32.partialorder %v2504, 0.0
    %v3577 = vand.u32 %v2504, 2147483648
    %v3578 = vsel %vm3576, %v3577, %v3575
    %v3579 = vrsqrt.pop %v2505
    %v3580 = vmul.f32 %v3579, %v2505
    %v3581 = vmul.f32 %v3580, %v3579
    %v3582 = vmul.f32 0.5, %v3581
    %v3583 = vsub.f32 1.5, %v3582
    %v3584 = vmul.f32 %v3579, %v3583
    %v3585 = vmul.f32 %v2505, %v3584
    %vm3586 = vcmp.eq.f32.partialorder %v2505, inf
    %v3587 = vsel %vm3586, %v2505, %v3585
    %vm3588 = vcmp.eq.f32.partialorder %v2505, 0.0
    %v3589 = vand.u32 %v2505, 2147483648
    %v3590 = vsel %vm3588, %v3589, %v3587
    %v3591 = vrsqrt.pop %v2506
    %v3592 = vmul.f32 %v3591, %v2506
    %v3593 = vmul.f32 %v3592, %v3591
    %v3594 = vmul.f32 0.5, %v3593
    %v3595 = vsub.f32 1.5, %v3594
    %v3596 = vmul.f32 %v3591, %v3595
    %v3597 = vmul.f32 %v2506, %v3596
    %vm3598 = vcmp.eq.f32.partialorder %v2506, inf
    %v3599 = vsel %vm3598, %v2506, %v3597
    %vm3600 = vcmp.eq.f32.partialorder %v2506, 0.0
    %v3601 = vand.u32 %v2506, 2147483648
    %v3602 = vsel %vm3600, %v3601, %v3599
    %v3603 = vrsqrt.pop %v2507
    %v3604 = vmul.f32 %v3603, %v2507
    %v3605 = vmul.f32 %v3604, %v3603
    %v3606 = vmul.f32 0.5, %v3605
    %v3607 = vsub.f32 1.5, %v3606
    %v3608 = vmul.f32 %v3603, %v3607
    %v3609 = vmul.f32 %v2507, %v3608
    %vm3610 = vcmp.eq.f32.partialorder %v2507, inf
    %v3611 = vsel %vm3610, %v2507, %v3609
    %vm3612 = vcmp.eq.f32.partialorder %v2507, 0.0
    %v3613 = vand.u32 %v2507, 2147483648
    %v3614 = vsel %vm3612, %v3613, %v3611
    %v3615 = vrsqrt.pop %v2508
    %v3616 = vmul.f32 %v3615, %v2508
    %v3617 = vmul.f32 %v3616, %v3615
    %v3618 = vmul.f32 0.5, %v3617
    %v3619 = vsub.f32 1.5, %v3618
    %v3620 = vmul.f32 %v3615, %v3619
    %v3621 = vmul.f32 %v2508, %v3620
    %vm3622 = vcmp.eq.f32.partialorder %v2508, inf
    %v3623 = vsel %vm3622, %v2508, %v3621
    %vm3624 = vcmp.eq.f32.partialorder %v2508, 0.0
    %v3625 = vand.u32 %v2508, 2147483648
    %v3626 = vsel %vm3624, %v3625, %v3623
    %v3627 = vrsqrt.pop %v2509
    %v3628 = vmul.f32 %v3627, %v2509
    %v3629 = vmul.f32 %v3628, %v3627
    %v3630 = vmul.f32 0.5, %v3629
    %v3631 = vsub.f32 1.5, %v3630
    %v3632 = vmul.f32 %v3627, %v3631
    %v3633 = vmul.f32 %v2509, %v3632
    %vm3634 = vcmp.eq.f32.partialorder %v2509, inf
    %v3635 = vsel %vm3634, %v2509, %v3633
    %vm3636 = vcmp.eq.f32.partialorder %v2509, 0.0
    %v3637 = vand.u32 %v2509, 2147483648
    %v3638 = vsel %vm3636, %v3637, %v3635
    %v3639 = vrsqrt.pop %v2510
    %v3640 = vmul.f32 %v3639, %v2510
    %v3641 = vmul.f32 %v3640, %v3639
    %v3642 = vmul.f32 0.5, %v3641
    %v3643 = vsub.f32 1.5, %v3642
    %v3644 = vmul.f32 %v3639, %v3643
    %v3645 = vmul.f32 %v2510, %v3644
    %vm3646 = vcmp.eq.f32.partialorder %v2510, inf
    %v3647 = vsel %vm3646, %v2510, %v3645
    %vm3648 = vcmp.eq.f32.partialorder %v2510, 0.0
    %v3649 = vand.u32 %v2510, 2147483648
    %v3650 = vsel %vm3648, %v3649, %v3647
    %v3651 = vrsqrt.pop %v2511
    %v3652 = vmul.f32 %v3651, %v2511
    %v3653 = vmul.f32 %v3652, %v3651
    %v3654 = vmul.f32 0.5, %v3653
    %v3655 = vsub.f32 1.5, %v3654
    %v3656 = vmul.f32 %v3651, %v3655
    %v3657 = vmul.f32 %v2511, %v3656
    %vm3658 = vcmp.eq.f32.partialorder %v2511, inf
    %v3659 = vsel %vm3658, %v2511, %v3657
    %vm3660 = vcmp.eq.f32.partialorder %v2511, 0.0
    %v3661 = vand.u32 %v2511, 2147483648
    %v3662 = vsel %vm3660, %v3661, %v3659
    %v3663 = vrsqrt.pop %v2512
    %v3664 = vmul.f32 %v3663, %v2512
    %v3665 = vmul.f32 %v3664, %v3663
    %v3666 = vmul.f32 0.5, %v3665
    %v3667 = vsub.f32 1.5, %v3666
    %v3668 = vmul.f32 %v3663, %v3667
    %v3669 = vmul.f32 %v2512, %v3668
    %vm3670 = vcmp.eq.f32.partialorder %v2512, inf
    %v3671 = vsel %vm3670, %v2512, %v3669
    %vm3672 = vcmp.eq.f32.partialorder %v2512, 0.0
    %v3673 = vand.u32 %v2512, 2147483648
    %v3674 = vsel %vm3672, %v3673, %v3671
    %v3675 = vrsqrt.pop %v2513
    %v3676 = vmul.f32 %v3675, %v2513
    %v3677 = vmul.f32 %v3676, %v3675
    %v3678 = vmul.f32 0.5, %v3677
    %v3679 = vsub.f32 1.5, %v3678
    %v3680 = vmul.f32 %v3675, %v3679
    %v3681 = vmul.f32 %v2513, %v3680
    %vm3682 = vcmp.eq.f32.partialorder %v2513, inf
    %v3683 = vsel %vm3682, %v2513, %v3681
    %vm3684 = vcmp.eq.f32.partialorder %v2513, 0.0
    %v3685 = vand.u32 %v2513, 2147483648
    %v3686 = vsel %vm3684, %v3685, %v3683
    %v3687 = vrsqrt.pop %v2514
    %v3688 = vmul.f32 %v3687, %v2514
    %v3689 = vmul.f32 %v3688, %v3687
    %v3690 = vmul.f32 0.5, %v3689
    %v3691 = vsub.f32 1.5, %v3690
    %v3692 = vmul.f32 %v3687, %v3691
    %v3693 = vmul.f32 %v2514, %v3692
    %vm3694 = vcmp.eq.f32.partialorder %v2514, inf
    %v3695 = vsel %vm3694, %v2514, %v3693
    %vm3696 = vcmp.eq.f32.partialorder %v2514, 0.0
    %v3697 = vand.u32 %v2514, 2147483648
    %v3698 = vsel %vm3696, %v3697, %v3695
    %v3699 = vrsqrt.pop %v2515
    %v3700 = vmul.f32 %v3699, %v2515
    %v3701 = vmul.f32 %v3700, %v3699
    %v3702 = vmul.f32 0.5, %v3701
    %v3703 = vsub.f32 1.5, %v3702
    %v3704 = vmul.f32 %v3699, %v3703
    %v3705 = vmul.f32 %v2515, %v3704
    %vm3706 = vcmp.eq.f32.partialorder %v2515, inf
    %v3707 = vsel %vm3706, %v2515, %v3705
    %vm3708 = vcmp.eq.f32.partialorder %v2515, 0.0
    %v3709 = vand.u32 %v2515, 2147483648
    %v3710 = vsel %vm3708, %v3709, %v3707
    %v3711 = vrsqrt.pop %v2516
    %v3712 = vmul.f32 %v3711, %v2516
    %v3713 = vmul.f32 %v3712, %v3711
    %v3714 = vmul.f32 0.5, %v3713
    %v3715 = vsub.f32 1.5, %v3714
    %v3716 = vmul.f32 %v3711, %v3715
    %v3717 = vmul.f32 %v2516, %v3716
    %vm3718 = vcmp.eq.f32.partialorder %v2516, inf
    %v3719 = vsel %vm3718, %v2516, %v3717
    %vm3720 = vcmp.eq.f32.partialorder %v2516, 0.0
    %v3721 = vand.u32 %v2516, 2147483648
    %v3722 = vsel %vm3720, %v3721, %v3719
    %v3723 = vrsqrt.pop %v2517
    %v3724 = vmul.f32 %v3723, %v2517
    %v3725 = vmul.f32 %v3724, %v3723
    %v3726 = vmul.f32 0.5, %v3725
    %v3727 = vsub.f32 1.5, %v3726
    %v3728 = vmul.f32 %v3723, %v3727
    %v3729 = vmul.f32 %v2517, %v3728
    %vm3730 = vcmp.eq.f32.partialorder %v2517, inf
    %v3731 = vsel %vm3730, %v2517, %v3729
    %vm3732 = vcmp.eq.f32.partialorder %v2517, 0.0
    %v3733 = vand.u32 %v2517, 2147483648
    %v3734 = vsel %vm3732, %v3733, %v3731
    %v3735 = vrsqrt.pop %v2518
    %v3736 = vmul.f32 %v3735, %v2518
    %v3737 = vmul.f32 %v3736, %v3735
    %v3738 = vmul.f32 0.5, %v3737
    %v3739 = vsub.f32 1.5, %v3738
    %v3740 = vmul.f32 %v3735, %v3739
    %v3741 = vmul.f32 %v2518, %v3740
    %vm3742 = vcmp.eq.f32.partialorder %v2518, inf
    %v3743 = vsel %vm3742, %v2518, %v3741
    %vm3744 = vcmp.eq.f32.partialorder %v2518, 0.0
    %v3745 = vand.u32 %v2518, 2147483648
    %v3746 = vsel %vm3744, %v3745, %v3743
    %v3747 = vrsqrt.pop %v2519
    %v3748 = vmul.f32 %v3747, %v2519
    %v3749 = vmul.f32 %v3748, %v3747
    %v3750 = vmul.f32 0.5, %v3749
    %v3751 = vsub.f32 1.5, %v3750
    %v3752 = vmul.f32 %v3747, %v3751
    %v3753 = vmul.f32 %v2519, %v3752
    %vm3754 = vcmp.eq.f32.partialorder %v2519, inf
    %v3755 = vsel %vm3754, %v2519, %v3753
    %vm3756 = vcmp.eq.f32.partialorder %v2519, 0.0
    %v3757 = vand.u32 %v2519, 2147483648
    %v3758 = vsel %vm3756, %v3757, %v3755
    %v3759 = vrsqrt.pop %v2520
    %v3760 = vmul.f32 %v3759, %v2520
    %v3761 = vmul.f32 %v3760, %v3759
    %v3762 = vmul.f32 0.5, %v3761
    %v3763 = vsub.f32 1.5, %v3762
    %v3764 = vmul.f32 %v3759, %v3763
    %v3765 = vmul.f32 %v2520, %v3764
    %vm3766 = vcmp.eq.f32.partialorder %v2520, inf
    %v3767 = vsel %vm3766, %v2520, %v3765
    %vm3768 = vcmp.eq.f32.partialorder %v2520, 0.0
    %v3769 = vand.u32 %v2520, 2147483648
    %v3770 = vsel %vm3768, %v3769, %v3767
    %v3771 = vrsqrt.pop %v2521
    %v3772 = vmul.f32 %v3771, %v2521
    %v3773 = vmul.f32 %v3772, %v3771
    %v3774 = vmul.f32 0.5, %v3773
    %v3775 = vsub.f32 1.5, %v3774
    %v3776 = vmul.f32 %v3771, %v3775
    %v3777 = vmul.f32 %v2521, %v3776
    %vm3778 = vcmp.eq.f32.partialorder %v2521, inf
    %v3779 = vsel %vm3778, %v2521, %v3777
    %vm3780 = vcmp.eq.f32.partialorder %v2521, 0.0
    %v3781 = vand.u32 %v2521, 2147483648
    %v3782 = vsel %vm3780, %v3781, %v3779
    %v3783 = vrsqrt.pop %v2522
    %v3784 = vmul.f32 %v3783, %v2522
    %v3785 = vmul.f32 %v3784, %v3783
    %v3786 = vmul.f32 0.5, %v3785
    %v3787 = vsub.f32 1.5, %v3786
    %v3788 = vmul.f32 %v3783, %v3787
    %v3789 = vmul.f32 %v2522, %v3788
    %vm3790 = vcmp.eq.f32.partialorder %v2522, inf
    %v3791 = vsel %vm3790, %v2522, %v3789
    %vm3792 = vcmp.eq.f32.partialorder %v2522, 0.0
    %v3793 = vand.u32 %v2522, 2147483648
    %v3794 = vsel %vm3792, %v3793, %v3791
    %v3795 = vrsqrt.pop %v2523
    %v3796 = vmul.f32 %v3795, %v2523
    %v3797 = vmul.f32 %v3796, %v3795
    %v3798 = vmul.f32 0.5, %v3797
    %v3799 = vsub.f32 1.5, %v3798
    %v3800 = vmul.f32 %v3795, %v3799
    %v3801 = vmul.f32 %v2523, %v3800
    %vm3802 = vcmp.eq.f32.partialorder %v2523, inf
    %v3803 = vsel %vm3802, %v2523, %v3801
    %vm3804 = vcmp.eq.f32.partialorder %v2523, 0.0
    %v3805 = vand.u32 %v2523, 2147483648
    %v3806 = vsel %vm3804, %v3805, %v3803
    %v3807 = vrsqrt.pop %v2524
    %v3808 = vmul.f32 %v3807, %v2524
    %v3809 = vmul.f32 %v3808, %v3807
    %v3810 = vmul.f32 0.5, %v3809
    %v3811 = vsub.f32 1.5, %v3810
    %v3812 = vmul.f32 %v3807, %v3811
    %v3813 = vmul.f32 %v2524, %v3812
    %vm3814 = vcmp.eq.f32.partialorder %v2524, inf
    %v3815 = vsel %vm3814, %v2524, %v3813
    %vm3816 = vcmp.eq.f32.partialorder %v2524, 0.0
    %v3817 = vand.u32 %v2524, 2147483648
    %v3818 = vsel %vm3816, %v3817, %v3815
    %v3819 = vrsqrt.pop %v2525
    %v3820 = vmul.f32 %v3819, %v2525
    %v3821 = vmul.f32 %v3820, %v3819
    %v3822 = vmul.f32 0.5, %v3821
    %v3823 = vsub.f32 1.5, %v3822
    %v3824 = vmul.f32 %v3819, %v3823
    %v3825 = vmul.f32 %v2525, %v3824
    %vm3826 = vcmp.eq.f32.partialorder %v2525, inf
    %v3827 = vsel %vm3826, %v2525, %v3825
    %vm3828 = vcmp.eq.f32.partialorder %v2525, 0.0
    %v3829 = vand.u32 %v2525, 2147483648
    %v3830 = vsel %vm3828, %v3829, %v3827
    %v3831 = vrsqrt.pop %v2526
    %v3832 = vmul.f32 %v3831, %v2526
    %v3833 = vmul.f32 %v3832, %v3831
    %v3834 = vmul.f32 0.5, %v3833
    %v3835 = vsub.f32 1.5, %v3834
    %v3836 = vmul.f32 %v3831, %v3835
    %v3837 = vmul.f32 %v2526, %v3836
    %vm3838 = vcmp.eq.f32.partialorder %v2526, inf
    %v3839 = vsel %vm3838, %v2526, %v3837
    %vm3840 = vcmp.eq.f32.partialorder %v2526, 0.0
    %v3841 = vand.u32 %v2526, 2147483648
    %v3842 = vsel %vm3840, %v3841, %v3839
    %v3843 = vrsqrt.pop %v2527
    %v3844 = vmul.f32 %v3843, %v2527
    %v3845 = vmul.f32 %v3844, %v3843
    %v3846 = vmul.f32 0.5, %v3845
    %v3847 = vsub.f32 1.5, %v3846
    %v3848 = vmul.f32 %v3843, %v3847
    %v3849 = vmul.f32 %v2527, %v3848
    %vm3850 = vcmp.eq.f32.partialorder %v2527, inf
    %v3851 = vsel %vm3850, %v2527, %v3849
    %vm3852 = vcmp.eq.f32.partialorder %v2527, 0.0
    %v3853 = vand.u32 %v2527, 2147483648
    %v3854 = vsel %vm3852, %v3853, %v3851
    %v3855 = vrsqrt.pop %v2528
    %v3856 = vmul.f32 %v3855, %v2528
    %v3857 = vmul.f32 %v3856, %v3855
    %v3858 = vmul.f32 0.5, %v3857
    %v3859 = vsub.f32 1.5, %v3858
    %v3860 = vmul.f32 %v3855, %v3859
    %v3861 = vmul.f32 %v2528, %v3860
    %vm3862 = vcmp.eq.f32.partialorder %v2528, inf
    %v3863 = vsel %vm3862, %v2528, %v3861
    %vm3864 = vcmp.eq.f32.partialorder %v2528, 0.0
    %v3865 = vand.u32 %v2528, 2147483648
    %v3866 = vsel %vm3864, %v3865, %v3863
    %v3867 = vrsqrt.pop %v2529
    %v3868 = vmul.f32 %v3867, %v2529
    %v3869 = vmul.f32 %v3868, %v3867
    %v3870 = vmul.f32 0.5, %v3869
    %v3871 = vsub.f32 1.5, %v3870
    %v3872 = vmul.f32 %v3867, %v3871
    %v3873 = vmul.f32 %v2529, %v3872
    %vm3874 = vcmp.eq.f32.partialorder %v2529, inf
    %v3875 = vsel %vm3874, %v2529, %v3873
    %vm3876 = vcmp.eq.f32.partialorder %v2529, 0.0
    %v3877 = vand.u32 %v2529, 2147483648
    %v3878 = vsel %vm3876, %v3877, %v3875
    %v3879 = vrsqrt.pop %v2530
    %v3880 = vmul.f32 %v3879, %v2530
    %v3881 = vmul.f32 %v3880, %v3879
    %v3882 = vmul.f32 0.5, %v3881
    %v3883 = vsub.f32 1.5, %v3882
    %v3884 = vmul.f32 %v3879, %v3883
    %v3885 = vmul.f32 %v2530, %v3884
    %vm3886 = vcmp.eq.f32.partialorder %v2530, inf
    %v3887 = vsel %vm3886, %v2530, %v3885
    %vm3888 = vcmp.eq.f32.partialorder %v2530, 0.0
    %v3889 = vand.u32 %v2530, 2147483648
    %v3890 = vsel %vm3888, %v3889, %v3887
    %v3891 = vrsqrt.pop %v2531
    %v3892 = vmul.f32 %v3891, %v2531
    %v3893 = vmul.f32 %v3892, %v3891
    %v3894 = vmul.f32 0.5, %v3893
    %v3895 = vsub.f32 1.5, %v3894
    %v3896 = vmul.f32 %v3891, %v3895
    %v3897 = vmul.f32 %v2531, %v3896
    %vm3898 = vcmp.eq.f32.partialorder %v2531, inf
    %v3899 = vsel %vm3898, %v2531, %v3897
    %vm3900 = vcmp.eq.f32.partialorder %v2531, 0.0
    %v3901 = vand.u32 %v2531, 2147483648
    %v3902 = vsel %vm3900, %v3901, %v3899
    %v3903 = vrsqrt.pop %v2532
    %v3904 = vmul.f32 %v3903, %v2532
    %v3905 = vmul.f32 %v3904, %v3903
    %v3906 = vmul.f32 0.5, %v3905
    %v3907 = vsub.f32 1.5, %v3906
    %v3908 = vmul.f32 %v3903, %v3907
    %v3909 = vmul.f32 %v2532, %v3908
    %vm3910 = vcmp.eq.f32.partialorder %v2532, inf
    %v3911 = vsel %vm3910, %v2532, %v3909
    %vm3912 = vcmp.eq.f32.partialorder %v2532, 0.0
    %v3913 = vand.u32 %v2532, 2147483648
    %v3914 = vsel %vm3912, %v3913, %v3911
    %v3915 = vrsqrt.pop %v2533
    %v3916 = vmul.f32 %v3915, %v2533
    %v3917 = vmul.f32 %v3916, %v3915
    %v3918 = vmul.f32 0.5, %v3917
    %v3919 = vsub.f32 1.5, %v3918
    %v3920 = vmul.f32 %v3915, %v3919
    %v3921 = vmul.f32 %v2533, %v3920
    %vm3922 = vcmp.eq.f32.partialorder %v2533, inf
    %v3923 = vsel %vm3922, %v2533, %v3921
    %vm3924 = vcmp.eq.f32.partialorder %v2533, 0.0
    %v3925 = vand.u32 %v2533, 2147483648
    %v3926 = vsel %vm3924, %v3925, %v3923
    %v3927 = vrsqrt.pop %v2534
    %v3928 = vmul.f32 %v3927, %v2534
    %v3929 = vmul.f32 %v3928, %v3927
    %v3930 = vmul.f32 0.5, %v3929
    %v3931 = vsub.f32 1.5, %v3930
    %v3932 = vmul.f32 %v3927, %v3931
    %v3933 = vmul.f32 %v2534, %v3932
    %vm3934 = vcmp.eq.f32.partialorder %v2534, inf
    %v3935 = vsel %vm3934, %v2534, %v3933
    %vm3936 = vcmp.eq.f32.partialorder %v2534, 0.0
    %v3937 = vand.u32 %v2534, 2147483648
    %v3938 = vsel %vm3936, %v3937, %v3935
    %v3939 = vrsqrt.pop %v2535
    %v3940 = vmul.f32 %v3939, %v2535
    %v3941 = vmul.f32 %v3940, %v3939
    %v3942 = vmul.f32 0.5, %v3941
    %v3943 = vsub.f32 1.5, %v3942
    %v3944 = vmul.f32 %v3939, %v3943
    %v3945 = vmul.f32 %v2535, %v3944
    %vm3946 = vcmp.eq.f32.partialorder %v2535, inf
    %v3947 = vsel %vm3946, %v2535, %v3945
    %vm3948 = vcmp.eq.f32.partialorder %v2535, 0.0
    %v3949 = vand.u32 %v2535, 2147483648
    %v3950 = vsel %vm3948, %v3949, %v3947
    %v3951 = vrsqrt.pop %v2536
    %v3952 = vmul.f32 %v3951, %v2536
    %v3953 = vmul.f32 %v3952, %v3951
    %v3954 = vmul.f32 0.5, %v3953
    %v3955 = vsub.f32 1.5, %v3954
    %v3956 = vmul.f32 %v3951, %v3955
    %v3957 = vmul.f32 %v2536, %v3956
    %vm3958 = vcmp.eq.f32.partialorder %v2536, inf
    %v3959 = vsel %vm3958, %v2536, %v3957
    %vm3960 = vcmp.eq.f32.partialorder %v2536, 0.0
    %v3961 = vand.u32 %v2536, 2147483648
    %v3962 = vsel %vm3960, %v3961, %v3959
    %v3963 = vrsqrt.pop %v2537
    %v3964 = vmul.f32 %v3963, %v2537
    %v3965 = vmul.f32 %v3964, %v3963
    %v3966 = vmul.f32 0.5, %v3965
    %v3967 = vsub.f32 1.5, %v3966
    %v3968 = vmul.f32 %v3963, %v3967
    %v3969 = vmul.f32 %v2537, %v3968
    %vm3970 = vcmp.eq.f32.partialorder %v2537, inf
    %v3971 = vsel %vm3970, %v2537, %v3969
    %vm3972 = vcmp.eq.f32.partialorder %v2537, 0.0
    %v3973 = vand.u32 %v2537, 2147483648
    %v3974 = vsel %vm3972, %v3973, %v3971
    %v3975 = vrsqrt.pop %v2538
    %v3976 = vmul.f32 %v3975, %v2538
    %v3977 = vmul.f32 %v3976, %v3975
    %v3978 = vmul.f32 0.5, %v3977
    %v3979 = vsub.f32 1.5, %v3978
    %v3980 = vmul.f32 %v3975, %v3979
    %v3981 = vmul.f32 %v2538, %v3980
    %vm3982 = vcmp.eq.f32.partialorder %v2538, inf
    %v3983 = vsel %vm3982, %v2538, %v3981
    %vm3984 = vcmp.eq.f32.partialorder %v2538, 0.0
    %v3985 = vand.u32 %v2538, 2147483648
    %v3986 = vsel %vm3984, %v3985, %v3983
    %v3987 = vrsqrt.pop %v2539
    %v3988 = vmul.f32 %v3987, %v2539
    %v3989 = vmul.f32 %v3988, %v3987
    %v3990 = vmul.f32 0.5, %v3989
    %v3991 = vsub.f32 1.5, %v3990
    %v3992 = vmul.f32 %v3987, %v3991
    %v3993 = vmul.f32 %v2539, %v3992
    %vm3994 = vcmp.eq.f32.partialorder %v2539, inf
    %v3995 = vsel %vm3994, %v2539, %v3993
    %vm3996 = vcmp.eq.f32.partialorder %v2539, 0.0
    %v3997 = vand.u32 %v2539, 2147483648
    %v3998 = vsel %vm3996, %v3997, %v3995
    %v3999 = vrsqrt.pop %v2540
    %v4000 = vmul.f32 %v3999, %v2540
    %v4001 = vmul.f32 %v4000, %v3999
    %v4002 = vmul.f32 0.5, %v4001
    %v4003 = vsub.f32 1.5, %v4002
    %v4004 = vmul.f32 %v3999, %v4003
    %v4005 = vmul.f32 %v2540, %v4004
    %vm4006 = vcmp.eq.f32.partialorder %v2540, inf
    %v4007 = vsel %vm4006, %v2540, %v4005
    %vm4008 = vcmp.eq.f32.partialorder %v2540, 0.0
    %v4009 = vand.u32 %v2540, 2147483648
    %v4010 = vsel %vm4008, %v4009, %v4007
    %v4011 = vrsqrt.pop %v2541
    %v4012 = vmul.f32 %v4011, %v2541
    %v4013 = vmul.f32 %v4012, %v4011
    %v4014 = vmul.f32 0.5, %v4013
    %v4015 = vsub.f32 1.5, %v4014
    %v4016 = vmul.f32 %v4011, %v4015
    %v4017 = vmul.f32 %v2541, %v4016
    %vm4018 = vcmp.eq.f32.partialorder %v2541, inf
    %v4019 = vsel %vm4018, %v2541, %v4017
    %vm4020 = vcmp.eq.f32.partialorder %v2541, 0.0
    %v4021 = vand.u32 %v2541, 2147483648
    %v4022 = vsel %vm4020, %v4021, %v4019
    %v4023 = vrsqrt.pop %v2542
    %v4024 = vmul.f32 %v4023, %v2542
    %v4025 = vmul.f32 %v4024, %v4023
    %v4026 = vmul.f32 0.5, %v4025
    %v4027 = vsub.f32 1.5, %v4026
    %v4028 = vmul.f32 %v4023, %v4027
    %v4029 = vmul.f32 %v2542, %v4028
    %vm4030 = vcmp.eq.f32.partialorder %v2542, inf
    %v4031 = vsel %vm4030, %v2542, %v4029
    %vm4032 = vcmp.eq.f32.partialorder %v2542, 0.0
    %v4033 = vand.u32 %v2542, 2147483648
    %v4034 = vsel %vm4032, %v4033, %v4031
    %v4035 = vrsqrt.pop %v2543
    %v4036 = vmul.f32 %v4035, %v2543
    %v4037 = vmul.f32 %v4036, %v4035
    %v4038 = vmul.f32 0.5, %v4037
    %v4039 = vsub.f32 1.5, %v4038
    %v4040 = vmul.f32 %v4035, %v4039
    %v4041 = vmul.f32 %v2543, %v4040
    %vm4042 = vcmp.eq.f32.partialorder %v2543, inf
    %v4043 = vsel %vm4042, %v2543, %v4041
    %vm4044 = vcmp.eq.f32.partialorder %v2543, 0.0
    %v4045 = vand.u32 %v2543, 2147483648
    %v4046 = vsel %vm4044, %v4045, %v4043
    %v4047 = vrsqrt.pop %v2544
    %v4048 = vmul.f32 %v4047, %v2544
    %v4049 = vmul.f32 %v4048, %v4047
    %v4050 = vmul.f32 0.5, %v4049
    %v4051 = vsub.f32 1.5, %v4050
    %v4052 = vmul.f32 %v4047, %v4051
    %v4053 = vmul.f32 %v2544, %v4052
    %vm4054 = vcmp.eq.f32.partialorder %v2544, inf
    %v4055 = vsel %vm4054, %v2544, %v4053
    %vm4056 = vcmp.eq.f32.partialorder %v2544, 0.0
    %v4057 = vand.u32 %v2544, 2147483648
    %v4058 = vsel %vm4056, %v4057, %v4055
    %v4059 = vrsqrt.pop %v2545
    %v4060 = vmul.f32 %v4059, %v2545
    %v4061 = vmul.f32 %v4060, %v4059
    %v4062 = vmul.f32 0.5, %v4061
    %v4063 = vsub.f32 1.5, %v4062
    %v4064 = vmul.f32 %v4059, %v4063
    %v4065 = vmul.f32 %v2545, %v4064
    %vm4066 = vcmp.eq.f32.partialorder %v2545, inf
    %v4067 = vsel %vm4066, %v2545, %v4065
    %vm4068 = vcmp.eq.f32.partialorder %v2545, 0.0
    %v4069 = vand.u32 %v2545, 2147483648
    %v4070 = vsel %vm4068, %v4069, %v4067
    %v4071 = vrsqrt.pop %v2546
    %v4072 = vmul.f32 %v4071, %v2546
    %v4073 = vmul.f32 %v4072, %v4071
    %v4074 = vmul.f32 0.5, %v4073
    %v4075 = vsub.f32 1.5, %v4074
    %v4076 = vmul.f32 %v4071, %v4075
    %v4077 = vmul.f32 %v2546, %v4076
    %vm4078 = vcmp.eq.f32.partialorder %v2546, inf
    %v4079 = vsel %vm4078, %v2546, %v4077
    %vm4080 = vcmp.eq.f32.partialorder %v2546, 0.0
    %v4081 = vand.u32 %v2546, 2147483648
    %v4082 = vsel %vm4080, %v4081, %v4079
    %v4083 = vsub.f32 %v2558, %v3326
    %v4084 = vsub.f32 %v2570, %v3338
    %v4085 = vsub.f32 %v2582, %v3350
    %v4086 = vsub.f32 %v2594, %v3362
    %v4087 = vsub.f32 %v2606, %v3374
    %v4088 = vsub.f32 %v2618, %v3386
    %v4089 = vsub.f32 %v2630, %v3398
    %v4090 = vsub.f32 %v2642, %v3410
    %v4091 = vsub.f32 %v2654, %v3422
    %v4092 = vsub.f32 %v2666, %v3434
    %v4093 = vsub.f32 %v2678, %v3446
    %v4094 = vsub.f32 %v2690, %v3458
    %v4095 = vsub.f32 %v2702, %v3470
    %v4096 = vsub.f32 %v2714, %v3482
    %v4097 = vsub.f32 %v2726, %v3494
    %v4098 = vsub.f32 %v2738, %v3506
    %v4099 = vsub.f32 %v2750, %v3518
    %v4100 = vsub.f32 %v2762, %v3530
    %v4101 = vsub.f32 %v2774, %v3542
    %v4102 = vsub.f32 %v2786, %v3554
    %v4103 = vsub.f32 %v2798, %v3566
    %v4104 = vsub.f32 %v2810, %v3578
    %v4105 = vsub.f32 %v2822, %v3590
    %v4106 = vsub.f32 %v2834, %v3602
    %v4107 = vsub.f32 %v2846, %v3614
    %v4108 = vsub.f32 %v2858, %v3626
    %v4109 = vsub.f32 %v2870, %v3638
    %v4110 = vsub.f32 %v2882, %v3650
    %v4111 = vsub.f32 %v2894, %v3662
    %v4112 = vsub.f32 %v2906, %v3674
    %v4113 = vsub.f32 %v2918, %v3686
    %v4114 = vsub.f32 %v2930, %v3698
    %v4115 = vsub.f32 %v2942, %v3710
    %v4116 = vsub.f32 %v2954, %v3722
    %v4117 = vsub.f32 %v2966, %v3734
    %v4118 = vsub.f32 %v2978, %v3746
    %v4119 = vsub.f32 %v2990, %v3758
    %v4120 = vsub.f32 %v3002, %v3770
    %v4121 = vsub.f32 %v3014, %v3782
    %v4122 = vsub.f32 %v3026, %v3794
    %v4123 = vsub.f32 %v3038, %v3806
    %v4124 = vsub.f32 %v3050, %v3818
    %v4125 = vsub.f32 %v3062, %v3830
    %v4126 = vsub.f32 %v3074, %v3842
    %v4127 = vsub.f32 %v3086, %v3854
    %v4128 = vsub.f32 %v3098, %v3866
    %v4129 = vsub.f32 %v3110, %v3878
    %v4130 = vsub.f32 %v3122, %v3890
    %v4131 = vsub.f32 %v3134, %v3902
    %v4132 = vsub.f32 %v3146, %v3914
    %v4133 = vsub.f32 %v3158, %v3926
    %v4134 = vsub.f32 %v3170, %v3938
    %v4135 = vsub.f32 %v3182, %v3950
    %v4136 = vsub.f32 %v3194, %v3962
    %v4137 = vsub.f32 %v3206, %v3974
    %v4138 = vsub.f32 %v3218, %v3986
    %v4139 = vsub.f32 %v3230, %v3998
    %v4140 = vsub.f32 %v3242, %v4010
    %v4141 = vsub.f32 %v3254, %v4022
    %v4142 = vsub.f32 %v3266, %v4034
    %v4143 = vsub.f32 %v3278, %v4046
    %v4144 = vsub.f32 %v3290, %v4058
    %v4145 = vsub.f32 %v3302, %v4070
    %v4146 = vsub.f32 %v3314, %v4082
    %v4147 = vmax.f32 %v2291, 1e-10
    %v4148 = vmax.f32 %v2292, 1e-10
    %v4149 = vmax.f32 %v2293, 1e-10
    %v4150 = vmax.f32 %v2294, 1e-10
    %v4151 = vmax.f32 %v2295, 1e-10
    %v4152 = vmax.f32 %v2296, 1e-10
    %v4153 = vmax.f32 %v2297, 1e-10
    %v4154 = vmax.f32 %v2298, 1e-10
    %v4155 = vmax.f32 %v2299, 1e-10
    %v4156 = vmax.f32 %v2300, 1e-10
    %v4157 = vmax.f32 %v2301, 1e-10
    %v4158 = vmax.f32 %v2302, 1e-10
    %v4159 = vmax.f32 %v2303, 1e-10
    %v4160 = vmax.f32 %v2304, 1e-10
    %v4161 = vmax.f32 %v2305, 1e-10
    %v4162 = vmax.f32 %v2306, 1e-10
    %v4163 = vmax.f32 %v2307, 1e-10
    %v4164 = vmax.f32 %v2308, 1e-10
    %v4165 = vmax.f32 %v2309, 1e-10
    %v4166 = vmax.f32 %v2310, 1e-10
    %v4167 = vmax.f32 %v2311, 1e-10
    %v4168 = vmax.f32 %v2312, 1e-10
    %v4169 = vmax.f32 %v2313, 1e-10
    %v4170 = vmax.f32 %v2314, 1e-10
    %v4171 = vmax.f32 %v2315, 1e-10
    %v4172 = vmax.f32 %v2316, 1e-10
    %v4173 = vmax.f32 %v2317, 1e-10
    %v4174 = vmax.f32 %v2318, 1e-10
    %v4175 = vmax.f32 %v2319, 1e-10
    %v4176 = vmax.f32 %v2320, 1e-10
    %v4177 = vmax.f32 %v2321, 1e-10
    %v4178 = vmax.f32 %v2322, 1e-10
    %v4179 = vmax.f32 %v2323, 1e-10
    %v4180 = vmax.f32 %v2324, 1e-10
    %v4181 = vmax.f32 %v2325, 1e-10
    %v4182 = vmax.f32 %v2326, 1e-10
    %v4183 = vmax.f32 %v2327, 1e-10
    %v4184 = vmax.f32 %v2328, 1e-10
    %v4185 = vmax.f32 %v2329, 1e-10
    %v4186 = vmax.f32 %v2330, 1e-10
    %v4187 = vmax.f32 %v2331, 1e-10
    %v4188 = vmax.f32 %v2332, 1e-10
    %v4189 = vmax.f32 %v2333, 1e-10
    %v4190 = vmax.f32 %v2334, 1e-10
    %v4191 = vmax.f32 %v2335, 1e-10
    %v4192 = vmax.f32 %v2336, 1e-10
    %v4193 = vmax.f32 %v2337, 1e-10
    %v4194 = vmax.f32 %v2338, 1e-10
    %v4195 = vmax.f32 %v2339, 1e-10
    %v4196 = vmax.f32 %v2340, 1e-10
    %v4197 = vmax.f32 %v2341, 1e-10
    %v4198 = vmax.f32 %v2342, 1e-10
    %v4199 = vmax.f32 %v2343, 1e-10
    %v4200 = vmax.f32 %v2344, 1e-10
    %v4201 = vmax.f32 %v2345, 1e-10
    %v4202 = vmax.f32 %v2346, 1e-10
    %v4203 = vmax.f32 %v2347, 1e-10
    %v4204 = vmax.f32 %v2348, 1e-10
    %v4205 = vmax.f32 %v2349, 1e-10
    %v4206 = vmax.f32 %v2350, 1e-10
    %v4207 = vmax.f32 %v2351, 1e-10
    %v4208 = vmax.f32 %v2352, 1e-10
    %v4209 = vmax.f32 %v2353, 1e-10
    %v4210 = vmax.f32 %v2354, 1e-10
    %v4211 = vlog2.pop %v4147
    %v4212 = vmul.f32 %v4211, 0.6931472
    %v4213 = vlog2.pop %v4148
    %v4214 = vmul.f32 %v4213, 0.6931472
    %v4215 = vlog2.pop %v4149
    %v4216 = vmul.f32 %v4215, 0.6931472
    %v4217 = vlog2.pop %v4150
    %v4218 = vmul.f32 %v4217, 0.6931472
    %v4219 = vlog2.pop %v4151
    %v4220 = vmul.f32 %v4219, 0.6931472
    %v4221 = vlog2.pop %v4152
    %v4222 = vmul.f32 %v4221, 0.6931472
    %v4223 = vlog2.pop %v4153
    %v4224 = vmul.f32 %v4223, 0.6931472
    %v4225 = vlog2.pop %v4154
    %v4226 = vmul.f32 %v4225, 0.6931472
    %v4227 = vlog2.pop %v4155
    %v4228 = vmul.f32 %v4227, 0.6931472
    %v4229 = vlog2.pop %v4156
    %v4230 = vmul.f32 %v4229, 0.6931472
    %v4231 = vlog2.pop %v4157
    %v4232 = vmul.f32 %v4231, 0.6931472
    %v4233 = vlog2.pop %v4158
    %v4234 = vmul.f32 %v4233, 0.6931472
    %v4235 = vlog2.pop %v4159
    %v4236 = vmul.f32 %v4235, 0.6931472
    %v4237 = vlog2.pop %v4160
    %v4238 = vmul.f32 %v4237, 0.6931472
    %v4239 = vlog2.pop %v4161
    %v4240 = vmul.f32 %v4239, 0.6931472
    %v4241 = vlog2.pop %v4162
    %v4242 = vmul.f32 %v4241, 0.6931472
    %v4243 = vlog2.pop %v4163
    %v4244 = vmul.f32 %v4243, 0.6931472
    %v4245 = vlog2.pop %v4164
    %v4246 = vmul.f32 %v4245, 0.6931472
    %v4247 = vlog2.pop %v4165
    %v4248 = vmul.f32 %v4247, 0.6931472
    %v4249 = vlog2.pop %v4166
    %v4250 = vmul.f32 %v4249, 0.6931472
    %v4251 = vlog2.pop %v4167
    %v4252 = vmul.f32 %v4251, 0.6931472
    %v4253 = vlog2.pop %v4168
    %v4254 = vmul.f32 %v4253, 0.6931472
    %v4255 = vlog2.pop %v4169
    %v4256 = vmul.f32 %v4255, 0.6931472
    %v4257 = vlog2.pop %v4170
    %v4258 = vmul.f32 %v4257, 0.6931472
    %v4259 = vlog2.pop %v4171
    %v4260 = vmul.f32 %v4259, 0.6931472
    %v4261 = vlog2.pop %v4172
    %v4262 = vmul.f32 %v4261, 0.6931472
    %v4263 = vlog2.pop %v4173
    %v4264 = vmul.f32 %v4263, 0.6931472
    %v4265 = vlog2.pop %v4174
    %v4266 = vmul.f32 %v4265, 0.6931472
    %v4267 = vlog2.pop %v4175
    %v4268 = vmul.f32 %v4267, 0.6931472
    %v4269 = vlog2.pop %v4176
    %v4270 = vmul.f32 %v4269, 0.6931472
    %v4271 = vlog2.pop %v4177
    %v4272 = vmul.f32 %v4271, 0.6931472
    %v4273 = vlog2.pop %v4178
    %v4274 = vmul.f32 %v4273, 0.6931472
    %v4275 = vlog2.pop %v4179
    %v4276 = vmul.f32 %v4275, 0.6931472
    %v4277 = vlog2.pop %v4180
    %v4278 = vmul.f32 %v4277, 0.6931472
    %v4279 = vlog2.pop %v4181
    %v4280 = vmul.f32 %v4279, 0.6931472
    %v4281 = vlog2.pop %v4182
    %v4282 = vmul.f32 %v4281, 0.6931472
    %v4283 = vlog2.pop %v4183
    %v4284 = vmul.f32 %v4283, 0.6931472
    %v4285 = vlog2.pop %v4184
    %v4286 = vmul.f32 %v4285, 0.6931472
    %v4287 = vlog2.pop %v4185
    %v4288 = vmul.f32 %v4287, 0.6931472
    %v4289 = vlog2.pop %v4186
    %v4290 = vmul.f32 %v4289, 0.6931472
    %v4291 = vlog2.pop %v4187
    %v4292 = vmul.f32 %v4291, 0.6931472
    %v4293 = vlog2.pop %v4188
    %v4294 = vmul.f32 %v4293, 0.6931472
    %v4295 = vlog2.pop %v4189
    %v4296 = vmul.f32 %v4295, 0.6931472
    %v4297 = vlog2.pop %v4190
    %v4298 = vmul.f32 %v4297, 0.6931472
    %v4299 = vlog2.pop %v4191
    %v4300 = vmul.f32 %v4299, 0.6931472
    %v4301 = vlog2.pop %v4192
    %v4302 = vmul.f32 %v4301, 0.6931472
    %v4303 = vlog2.pop %v4193
    %v4304 = vmul.f32 %v4303, 0.6931472
    %v4305 = vlog2.pop %v4194
    %v4306 = vmul.f32 %v4305, 0.6931472
    %v4307 = vlog2.pop %v4195
    %v4308 = vmul.f32 %v4307, 0.6931472
    %v4309 = vlog2.pop %v4196
    %v4310 = vmul.f32 %v4309, 0.6931472
    %v4311 = vlog2.pop %v4197
    %v4312 = vmul.f32 %v4311, 0.6931472
    %v4313 = vlog2.pop %v4198
    %v4314 = vmul.f32 %v4313, 0.6931472
    %v4315 = vlog2.pop %v4199
    %v4316 = vmul.f32 %v4315, 0.6931472
    %v4317 = vlog2.pop %v4200
    %v4318 = vmul.f32 %v4317, 0.6931472
    %v4319 = vlog2.pop %v4201
    %v4320 = vmul.f32 %v4319, 0.6931472
    %v4321 = vlog2.pop %v4202
    %v4322 = vmul.f32 %v4321, 0.6931472
    %v4323 = vlog2.pop %v4203
    %v4324 = vmul.f32 %v4323, 0.6931472
    %v4325 = vlog2.pop %v4204
    %v4326 = vmul.f32 %v4325, 0.6931472
    %v4327 = vlog2.pop %v4205
    %v4328 = vmul.f32 %v4327, 0.6931472
    %v4329 = vlog2.pop %v4206
    %v4330 = vmul.f32 %v4329, 0.6931472
    %v4331 = vlog2.pop %v4207
    %v4332 = vmul.f32 %v4331, 0.6931472
    %v4333 = vlog2.pop %v4208
    %v4334 = vmul.f32 %v4333, 0.6931472
    %v4335 = vlog2.pop %v4209
    %v4336 = vmul.f32 %v4335, 0.6931472
    %v4337 = vlog2.pop %v4210
    %v4338 = vmul.f32 %v4337, 0.6931472
    %v4339 = vmax.f32 %v2483, 1e-10
    %v4340 = vmax.f32 %v2484, 1e-10
    %v4341 = vmax.f32 %v2485, 1e-10
    %v4342 = vmax.f32 %v2486, 1e-10
    %v4343 = vmax.f32 %v2487, 1e-10
    %v4344 = vmax.f32 %v2488, 1e-10
    %v4345 = vmax.f32 %v2489, 1e-10
    %v4346 = vmax.f32 %v2490, 1e-10
    %v4347 = vmax.f32 %v2491, 1e-10
    %v4348 = vmax.f32 %v2492, 1e-10
    %v4349 = vmax.f32 %v2493, 1e-10
    %v4350 = vmax.f32 %v2494, 1e-10
    %v4351 = vmax.f32 %v2495, 1e-10
    %v4352 = vmax.f32 %v2496, 1e-10
    %v4353 = vmax.f32 %v2497, 1e-10
    %v4354 = vmax.f32 %v2498, 1e-10
    %v4355 = vmax.f32 %v2499, 1e-10
    %v4356 = vmax.f32 %v2500, 1e-10
    %v4357 = vmax.f32 %v2501, 1e-10
    %v4358 = vmax.f32 %v2502, 1e-10
    %v4359 = vmax.f32 %v2503, 1e-10
    %v4360 = vmax.f32 %v2504, 1e-10
    %v4361 = vmax.f32 %v2505, 1e-10
    %v4362 = vmax.f32 %v2506, 1e-10
    %v4363 = vmax.f32 %v2507, 1e-10
    %v4364 = vmax.f32 %v2508, 1e-10
    %v4365 = vmax.f32 %v2509, 1e-10
    %v4366 = vmax.f32 %v2510, 1e-10
    %v4367 = vmax.f32 %v2511, 1e-10
    %v4368 = vmax.f32 %v2512, 1e-10
    %v4369 = vmax.f32 %v2513, 1e-10
    %v4370 = vmax.f32 %v2514, 1e-10
    %v4371 = vmax.f32 %v2515, 1e-10
    %v4372 = vmax.f32 %v2516, 1e-10
    %v4373 = vmax.f32 %v2517, 1e-10
    %v4374 = vmax.f32 %v2518, 1e-10
    %v4375 = vmax.f32 %v2519, 1e-10
    %v4376 = vmax.f32 %v2520, 1e-10
    %v4377 = vmax.f32 %v2521, 1e-10
    %v4378 = vmax.f32 %v2522, 1e-10
    %v4379 = vmax.f32 %v2523, 1e-10
    %v4380 = vmax.f32 %v2524, 1e-10
    %v4381 = vmax.f32 %v2525, 1e-10
    %v4382 = vmax.f32 %v2526, 1e-10
    %v4383 = vmax.f32 %v2527, 1e-10
    %v4384 = vmax.f32 %v2528, 1e-10
    %v4385 = vmax.f32 %v2529, 1e-10
    %v4386 = vmax.f32 %v2530, 1e-10
    %v4387 = vmax.f32 %v2531, 1e-10
    %v4388 = vmax.f32 %v2532, 1e-10
    %v4389 = vmax.f32 %v2533, 1e-10
    %v4390 = vmax.f32 %v2534, 1e-10
    %v4391 = vmax.f32 %v2535, 1e-10
    %v4392 = vmax.f32 %v2536, 1e-10
    %v4393 = vmax.f32 %v2537, 1e-10
    %v4394 = vmax.f32 %v2538, 1e-10
    %v4395 = vmax.f32 %v2539, 1e-10
    %v4396 = vmax.f32 %v2540, 1e-10
    %v4397 = vmax.f32 %v2541, 1e-10
    %v4398 = vmax.f32 %v2542, 1e-10
    %v4399 = vmax.f32 %v2543, 1e-10
    %v4400 = vmax.f32 %v2544, 1e-10
    %v4401 = vmax.f32 %v2545, 1e-10
    %v4402 = vmax.f32 %v2546, 1e-10
    %v4403 = vlog2.pop %v4339
    %v4404 = vmul.f32 %v4403, 0.6931472
    %v4405 = vlog2.pop %v4340
    %v4406 = vmul.f32 %v4405, 0.6931472
    %v4407 = vlog2.pop %v4341
    %v4408 = vmul.f32 %v4407, 0.6931472
    %v4409 = vlog2.pop %v4342
    %v4410 = vmul.f32 %v4409, 0.6931472
    %v4411 = vlog2.pop %v4343
    %v4412 = vmul.f32 %v4411, 0.6931472
    %v4413 = vlog2.pop %v4344
    %v4414 = vmul.f32 %v4413, 0.6931472
    %v4415 = vlog2.pop %v4345
    %v4416 = vmul.f32 %v4415, 0.6931472
    %v4417 = vlog2.pop %v4346
    %v4418 = vmul.f32 %v4417, 0.6931472
    %v4419 = vlog2.pop %v4347
    %v4420 = vmul.f32 %v4419, 0.6931472
    %v4421 = vlog2.pop %v4348
    %v4422 = vmul.f32 %v4421, 0.6931472
    %v4423 = vlog2.pop %v4349
    %v4424 = vmul.f32 %v4423, 0.6931472
    %v4425 = vlog2.pop %v4350
    %v4426 = vmul.f32 %v4425, 0.6931472
    %v4427 = vlog2.pop %v4351
    %v4428 = vmul.f32 %v4427, 0.6931472
    %v4429 = vlog2.pop %v4352
    %v4430 = vmul.f32 %v4429, 0.6931472
    %v4431 = vlog2.pop %v4353
    %v4432 = vmul.f32 %v4431, 0.6931472
    %v4433 = vlog2.pop %v4354
    %v4434 = vmul.f32 %v4433, 0.6931472
    %v4435 = vlog2.pop %v4355
    %v4436 = vmul.f32 %v4435, 0.6931472
    %v4437 = vlog2.pop %v4356
    %v4438 = vmul.f32 %v4437, 0.6931472
    %v4439 = vlog2.pop %v4357
    %v4440 = vmul.f32 %v4439, 0.6931472
    %v4441 = vlog2.pop %v4358
    %v4442 = vmul.f32 %v4441, 0.6931472
    %v4443 = vlog2.pop %v4359
    %v4444 = vmul.f32 %v4443, 0.6931472
    %v4445 = vlog2.pop %v4360
    %v4446 = vmul.f32 %v4445, 0.6931472
    %v4447 = vlog2.pop %v4361
    %v4448 = vmul.f32 %v4447, 0.6931472
    %v4449 = vlog2.pop %v4362
    %v4450 = vmul.f32 %v4449, 0.6931472
    %v4451 = vlog2.pop %v4363
    %v4452 = vmul.f32 %v4451, 0.6931472
    %v4453 = vlog2.pop %v4364
    %v4454 = vmul.f32 %v4453, 0.6931472
    %v4455 = vlog2.pop %v4365
    %v4456 = vmul.f32 %v4455, 0.6931472
    %v4457 = vlog2.pop %v4366
    %v4458 = vmul.f32 %v4457, 0.6931472
    %v4459 = vlog2.pop %v4367
    %v4460 = vmul.f32 %v4459, 0.6931472
    %v4461 = vlog2.pop %v4368
    %v4462 = vmul.f32 %v4461, 0.6931472
    %v4463 = vlog2.pop %v4369
    %v4464 = vmul.f32 %v4463, 0.6931472
    %v4465 = vlog2.pop %v4370
    %v4466 = vmul.f32 %v4465, 0.6931472
    %v4467 = vlog2.pop %v4371
    %v4468 = vmul.f32 %v4467, 0.6931472
    %v4469 = vlog2.pop %v4372
    %v4470 = vmul.f32 %v4469, 0.6931472
    %v4471 = vlog2.pop %v4373
    %v4472 = vmul.f32 %v4471, 0.6931472
    %v4473 = vlog2.pop %v4374
    %v4474 = vmul.f32 %v4473, 0.6931472
    %v4475 = vlog2.pop %v4375
    %v4476 = vmul.f32 %v4475, 0.6931472
    %v4477 = vlog2.pop %v4376
    %v4478 = vmul.f32 %v4477, 0.6931472
    %v4479 = vlog2.pop %v4377
    %v4480 = vmul.f32 %v4479, 0.6931472
    %v4481 = vlog2.pop %v4378
    %v4482 = vmul.f32 %v4481, 0.6931472
    %v4483 = vlog2.pop %v4379
    %v4484 = vmul.f32 %v4483, 0.6931472
    %v4485 = vlog2.pop %v4380
    %v4486 = vmul.f32 %v4485, 0.6931472
    %v4487 = vlog2.pop %v4381
    %v4488 = vmul.f32 %v4487, 0.6931472
    %v4489 = vlog2.pop %v4382
    %v4490 = vmul.f32 %v4489, 0.6931472
    %v4491 = vlog2.pop %v4383
    %v4492 = vmul.f32 %v4491, 0.6931472
    %v4493 = vlog2.pop %v4384
    %v4494 = vmul.f32 %v4493, 0.6931472
    %v4495 = vlog2.pop %v4385
    %v4496 = vmul.f32 %v4495, 0.6931472
    %v4497 = vlog2.pop %v4386
    %v4498 = vmul.f32 %v4497, 0.6931472
    %v4499 = vlog2.pop %v4387
    %v4500 = vmul.f32 %v4499, 0.6931472
    %v4501 = vlog2.pop %v4388
    %v4502 = vmul.f32 %v4501, 0.6931472
    %v4503 = vlog2.pop %v4389
    %v4504 = vmul.f32 %v4503, 0.6931472
    %v4505 = vlog2.pop %v4390
    %v4506 = vmul.f32 %v4505, 0.6931472
    %v4507 = vlog2.pop %v4391
    %v4508 = vmul.f32 %v4507, 0.6931472
    %v4509 = vlog2.pop %v4392
    %v4510 = vmul.f32 %v4509, 0.6931472
    %v4511 = vlog2.pop %v4393
    %v4512 = vmul.f32 %v4511, 0.6931472
    %v4513 = vlog2.pop %v4394
    %v4514 = vmul.f32 %v4513, 0.6931472
    %v4515 = vlog2.pop %v4395
    %v4516 = vmul.f32 %v4515, 0.6931472
    %v4517 = vlog2.pop %v4396
    %v4518 = vmul.f32 %v4517, 0.6931472
    %v4519 = vlog2.pop %v4397
    %v4520 = vmul.f32 %v4519, 0.6931472
    %v4521 = vlog2.pop %v4398
    %v4522 = vmul.f32 %v4521, 0.6931472
    %v4523 = vlog2.pop %v4399
    %v4524 = vmul.f32 %v4523, 0.6931472
    %v4525 = vlog2.pop %v4400
    %v4526 = vmul.f32 %v4525, 0.6931472
    %v4527 = vlog2.pop %v4401
    %v4528 = vmul.f32 %v4527, 0.6931472
    %v4529 = vlog2.pop %v4402
    %v4530 = vmul.f32 %v4529, 0.6931472
    %v4531 = vsub.f32 %v4212, %v4404
    %v4532 = vsub.f32 %v4214, %v4406
    %v4533 = vsub.f32 %v4216, %v4408
    %v4534 = vsub.f32 %v4218, %v4410
    %v4535 = vsub.f32 %v4220, %v4412
    %v4536 = vsub.f32 %v4222, %v4414
    %v4537 = vsub.f32 %v4224, %v4416
    %v4538 = vsub.f32 %v4226, %v4418
    %v4539 = vsub.f32 %v4228, %v4420
    %v4540 = vsub.f32 %v4230, %v4422
    %v4541 = vsub.f32 %v4232, %v4424
    %v4542 = vsub.f32 %v4234, %v4426
    %v4543 = vsub.f32 %v4236, %v4428
    %v4544 = vsub.f32 %v4238, %v4430
    %v4545 = vsub.f32 %v4240, %v4432
    %v4546 = vsub.f32 %v4242, %v4434
    %v4547 = vsub.f32 %v4244, %v4436
    %v4548 = vsub.f32 %v4246, %v4438
    %v4549 = vsub.f32 %v4248, %v4440
    %v4550 = vsub.f32 %v4250, %v4442
    %v4551 = vsub.f32 %v4252, %v4444
    %v4552 = vsub.f32 %v4254, %v4446
    %v4553 = vsub.f32 %v4256, %v4448
    %v4554 = vsub.f32 %v4258, %v4450
    %v4555 = vsub.f32 %v4260, %v4452
    %v4556 = vsub.f32 %v4262, %v4454
    %v4557 = vsub.f32 %v4264, %v4456
    %v4558 = vsub.f32 %v4266, %v4458
    %v4559 = vsub.f32 %v4268, %v4460
    %v4560 = vsub.f32 %v4270, %v4462
    %v4561 = vsub.f32 %v4272, %v4464
    %v4562 = vsub.f32 %v4274, %v4466
    %v4563 = vsub.f32 %v4276, %v4468
    %v4564 = vsub.f32 %v4278, %v4470
    %v4565 = vsub.f32 %v4280, %v4472
    %v4566 = vsub.f32 %v4282, %v4474
    %v4567 = vsub.f32 %v4284, %v4476
    %v4568 = vsub.f32 %v4286, %v4478
    %v4569 = vsub.f32 %v4288, %v4480
    %v4570 = vsub.f32 %v4290, %v4482
    %v4571 = vsub.f32 %v4292, %v4484
    %v4572 = vsub.f32 %v4294, %v4486
    %v4573 = vsub.f32 %v4296, %v4488
    %v4574 = vsub.f32 %v4298, %v4490
    %v4575 = vsub.f32 %v4300, %v4492
    %v4576 = vsub.f32 %v4302, %v4494
    %v4577 = vsub.f32 %v4304, %v4496
    %v4578 = vsub.f32 %v4306, %v4498
    %v4579 = vsub.f32 %v4308, %v4500
    %v4580 = vsub.f32 %v4310, %v4502
    %v4581 = vsub.f32 %v4312, %v4504
    %v4582 = vsub.f32 %v4314, %v4506
    %v4583 = vsub.f32 %v4316, %v4508
    %v4584 = vsub.f32 %v4318, %v4510
    %v4585 = vsub.f32 %v4320, %v4512
    %v4586 = vsub.f32 %v4322, %v4514
    %v4587 = vsub.f32 %v4324, %v4516
    %v4588 = vsub.f32 %v4326, %v4518
    %v4589 = vsub.f32 %v4328, %v4520
    %v4590 = vsub.f32 %v4330, %v4522
    %v4591 = vsub.f32 %v4332, %v4524
    %v4592 = vsub.f32 %v4334, %v4526
    %v4593 = vsub.f32 %v4336, %v4528
    %v4594 = vsub.f32 %v4338, %v4530
    %v4595 = vand.u32 2147483647, %v4531
    %v4596 = vand.u32 2147483647, %v4532
    %v4597 = vand.u32 2147483647, %v4533
    %v4598 = vand.u32 2147483647, %v4534
    %v4599 = vand.u32 2147483647, %v4535
    %v4600 = vand.u32 2147483647, %v4536
    %v4601 = vand.u32 2147483647, %v4537
    %v4602 = vand.u32 2147483647, %v4538
    %v4603 = vand.u32 2147483647, %v4539
    %v4604 = vand.u32 2147483647, %v4540
    %v4605 = vand.u32 2147483647, %v4541
    %v4606 = vand.u32 2147483647, %v4542
    %v4607 = vand.u32 2147483647, %v4543
    %v4608 = vand.u32 2147483647, %v4544
    %v4609 = vand.u32 2147483647, %v4545
    %v4610 = vand.u32 2147483647, %v4546
    %v4611 = vand.u32 2147483647, %v4547
    %v4612 = vand.u32 2147483647, %v4548
    %v4613 = vand.u32 2147483647, %v4549
    %v4614 = vand.u32 2147483647, %v4550
    %v4615 = vand.u32 2147483647, %v4551
    %v4616 = vand.u32 2147483647, %v4552
    %v4617 = vand.u32 2147483647, %v4553
    %v4618 = vand.u32 2147483647, %v4554
    %v4619 = vand.u32 2147483647, %v4555
    %v4620 = vand.u32 2147483647, %v4556
    %v4621 = vand.u32 2147483647, %v4557
    %v4622 = vand.u32 2147483647, %v4558
    %v4623 = vand.u32 2147483647, %v4559
    %v4624 = vand.u32 2147483647, %v4560
    %v4625 = vand.u32 2147483647, %v4561
    %v4626 = vand.u32 2147483647, %v4562
    %v4627 = vand.u32 2147483647, %v4563
    %v4628 = vand.u32 2147483647, %v4564
    %v4629 = vand.u32 2147483647, %v4565
    %v4630 = vand.u32 2147483647, %v4566
    %v4631 = vand.u32 2147483647, %v4567
    %v4632 = vand.u32 2147483647, %v4568
    %v4633 = vand.u32 2147483647, %v4569
    %v4634 = vand.u32 2147483647, %v4570
    %v4635 = vand.u32 2147483647, %v4571
    %v4636 = vand.u32 2147483647, %v4572
    %v4637 = vand.u32 2147483647, %v4573
    %v4638 = vand.u32 2147483647, %v4574
    %v4639 = vand.u32 2147483647, %v4575
    %v4640 = vand.u32 2147483647, %v4576
    %v4641 = vand.u32 2147483647, %v4577
    %v4642 = vand.u32 2147483647, %v4578
    %v4643 = vand.u32 2147483647, %v4579
    %v4644 = vand.u32 2147483647, %v4580
    %v4645 = vand.u32 2147483647, %v4581
    %v4646 = vand.u32 2147483647, %v4582
    %v4647 = vand.u32 2147483647, %v4583
    %v4648 = vand.u32 2147483647, %v4584
    %v4649 = vand.u32 2147483647, %v4585
    %v4650 = vand.u32 2147483647, %v4586
    %v4651 = vand.u32 2147483647, %v4587
    %v4652 = vand.u32 2147483647, %v4588
    %v4653 = vand.u32 2147483647, %v4589
    %v4654 = vand.u32 2147483647, %v4590
    %v4655 = vand.u32 2147483647, %v4591
    %v4656 = vand.u32 2147483647, %v4592
    %v4657 = vand.u32 2147483647, %v4593
    %v4658 = vand.u32 2147483647, %v4594
    %v4659 = vmul.f32 %v4595, 0.5
    %v4660 = vmul.f32 %v4596, 0.5
    %v4661 = vmul.f32 %v4597, 0.5
    %v4662 = vmul.f32 %v4598, 0.5
    %v4663 = vmul.f32 %v4599, 0.5
    %v4664 = vmul.f32 %v4600, 0.5
    %v4665 = vmul.f32 %v4601, 0.5
    %v4666 = vmul.f32 %v4602, 0.5
    %v4667 = vmul.f32 %v4603, 0.5
    %v4668 = vmul.f32 %v4604, 0.5
    %v4669 = vmul.f32 %v4605, 0.5
    %v4670 = vmul.f32 %v4606, 0.5
    %v4671 = vmul.f32 %v4607, 0.5
    %v4672 = vmul.f32 %v4608, 0.5
    %v4673 = vmul.f32 %v4609, 0.5
    %v4674 = vmul.f32 %v4610, 0.5
    %v4675 = vmul.f32 %v4611, 0.5
    %v4676 = vmul.f32 %v4612, 0.5
    %v4677 = vmul.f32 %v4613, 0.5
    %v4678 = vmul.f32 %v4614, 0.5
    %v4679 = vmul.f32 %v4615, 0.5
    %v4680 = vmul.f32 %v4616, 0.5
    %v4681 = vmul.f32 %v4617, 0.5
    %v4682 = vmul.f32 %v4618, 0.5
    %v4683 = vmul.f32 %v4619, 0.5
    %v4684 = vmul.f32 %v4620, 0.5
    %v4685 = vmul.f32 %v4621, 0.5
    %v4686 = vmul.f32 %v4622, 0.5
    %v4687 = vmul.f32 %v4623, 0.5
    %v4688 = vmul.f32 %v4624, 0.5
    %v4689 = vmul.f32 %v4625, 0.5
    %v4690 = vmul.f32 %v4626, 0.5
    %v4691 = vmul.f32 %v4627, 0.5
    %v4692 = vmul.f32 %v4628, 0.5
    %v4693 = vmul.f32 %v4629, 0.5
    %v4694 = vmul.f32 %v4630, 0.5
    %v4695 = vmul.f32 %v4631, 0.5
    %v4696 = vmul.f32 %v4632, 0.5
    %v4697 = vmul.f32 %v4633, 0.5
    %v4698 = vmul.f32 %v4634, 0.5
    %v4699 = vmul.f32 %v4635, 0.5
    %v4700 = vmul.f32 %v4636, 0.5
    %v4701 = vmul.f32 %v4637, 0.5
    %v4702 = vmul.f32 %v4638, 0.5
    %v4703 = vmul.f32 %v4639, 0.5
    %v4704 = vmul.f32 %v4640, 0.5
    %v4705 = vmul.f32 %v4641, 0.5
    %v4706 = vmul.f32 %v4642, 0.5
    %v4707 = vmul.f32 %v4643, 0.5
    %v4708 = vmul.f32 %v4644, 0.5
    %v4709 = vmul.f32 %v4645, 0.5
    %v4710 = vmul.f32 %v4646, 0.5
    %v4711 = vmul.f32 %v4647, 0.5
    %v4712 = vmul.f32 %v4648, 0.5
    %v4713 = vmul.f32 %v4649, 0.5
    %v4714 = vmul.f32 %v4650, 0.5
    %v4715 = vmul.f32 %v4651, 0.5
    %v4716 = vmul.f32 %v4652, 0.5
    %v4717 = vmul.f32 %v4653, 0.5
    %v4718 = vmul.f32 %v4654, 0.5
    %v4719 = vmul.f32 %v4655, 0.5
    %v4720 = vmul.f32 %v4656, 0.5
    %v4721 = vmul.f32 %v4657, 0.5
    %v4722 = vmul.f32 %v4658, 0.5
    %v4723 = vmul.f32 %v4083, %v4083
    %v4724 = vmul.f32 %v4084, %v4084
    %v4725 = vmul.f32 %v4085, %v4085
    %v4726 = vmul.f32 %v4086, %v4086
    %v4727 = vmul.f32 %v4087, %v4087
    %v4728 = vmul.f32 %v4088, %v4088
    %v4729 = vmul.f32 %v4089, %v4089
    %v4730 = vmul.f32 %v4090, %v4090
    %v4731 = vmul.f32 %v4091, %v4091
    %v4732 = vmul.f32 %v4092, %v4092
    %v4733 = vmul.f32 %v4093, %v4093
    %v4734 = vmul.f32 %v4094, %v4094
    %v4735 = vmul.f32 %v4095, %v4095
    %v4736 = vmul.f32 %v4096, %v4096
    %v4737 = vmul.f32 %v4097, %v4097
    %v4738 = vmul.f32 %v4098, %v4098
    %v4739 = vmul.f32 %v4099, %v4099
    %v4740 = vmul.f32 %v4100, %v4100
    %v4741 = vmul.f32 %v4101, %v4101
    %v4742 = vmul.f32 %v4102, %v4102
    %v4743 = vmul.f32 %v4103, %v4103
    %v4744 = vmul.f32 %v4104, %v4104
    %v4745 = vmul.f32 %v4105, %v4105
    %v4746 = vmul.f32 %v4106, %v4106
    %v4747 = vmul.f32 %v4107, %v4107
    %v4748 = vmul.f32 %v4108, %v4108
    %v4749 = vmul.f32 %v4109, %v4109
    %v4750 = vmul.f32 %v4110, %v4110
    %v4751 = vmul.f32 %v4111, %v4111
    %v4752 = vmul.f32 %v4112, %v4112
    %v4753 = vmul.f32 %v4113, %v4113
    %v4754 = vmul.f32 %v4114, %v4114
    %v4755 = vmul.f32 %v4115, %v4115
    %v4756 = vmul.f32 %v4116, %v4116
    %v4757 = vmul.f32 %v4117, %v4117
    %v4758 = vmul.f32 %v4118, %v4118
    %v4759 = vmul.f32 %v4119, %v4119
    %v4760 = vmul.f32 %v4120, %v4120
    %v4761 = vmul.f32 %v4121, %v4121
    %v4762 = vmul.f32 %v4122, %v4122
    %v4763 = vmul.f32 %v4123, %v4123
    %v4764 = vmul.f32 %v4124, %v4124
    %v4765 = vmul.f32 %v4125, %v4125
    %v4766 = vmul.f32 %v4126, %v4126
    %v4767 = vmul.f32 %v4127, %v4127
    %v4768 = vmul.f32 %v4128, %v4128
    %v4769 = vmul.f32 %v4129, %v4129
    %v4770 = vmul.f32 %v4130, %v4130
    %v4771 = vmul.f32 %v4131, %v4131
    %v4772 = vmul.f32 %v4132, %v4132
    %v4773 = vmul.f32 %v4133, %v4133
    %v4774 = vmul.f32 %v4134, %v4134
    %v4775 = vmul.f32 %v4135, %v4135
    %v4776 = vmul.f32 %v4136, %v4136
    %v4777 = vmul.f32 %v4137, %v4137
    %v4778 = vmul.f32 %v4138, %v4138
    %v4779 = vmul.f32 %v4139, %v4139
    %v4780 = vmul.f32 %v4140, %v4140
    %v4781 = vmul.f32 %v4141, %v4141
    %v4782 = vmul.f32 %v4142, %v4142
    %v4783 = vmul.f32 %v4143, %v4143
    %v4784 = vmul.f32 %v4144, %v4144
    %v4785 = vmul.f32 %v4145, %v4145
    %v4786 = vmul.f32 %v4146, %v4146
    %v4787 = vadd.f32 %v4723, %v4725
    %v4788 = vadd.f32 %v4787, %v4727
    %v4789 = vadd.f32 %v4788, %v4729
    %v4790 = vadd.f32 %v4789, %v4731
    %v4791 = vadd.f32 %v4790, %v4733
    %v4792 = vadd.f32 %v4791, %v4735
    %v4793 = vadd.f32 %v4792, %v4737
    %v4794 = vadd.f32 %v4793, %v4739
    %v4795 = vadd.f32 %v4794, %v4741
    %v4796 = vadd.f32 %v4795, %v4743
    %v4797 = vadd.f32 %v4796, %v4745
    %v4798 = vadd.f32 %v4797, %v4747
    %v4799 = vadd.f32 %v4798, %v4749
    %v4800 = vadd.f32 %v4799, %v4751
    %v4801 = vadd.f32 %v4800, %v4753
    %v4802 = vadd.f32 %v4801, %v4755
    %v4803 = vadd.f32 %v4802, %v4757
    %v4804 = vadd.f32 %v4803, %v4759
    %v4805 = vadd.f32 %v4804, %v4761
    %v4806 = vadd.f32 %v4805, %v4763
    %v4807 = vadd.f32 %v4806, %v4765
    %v4808 = vadd.f32 %v4807, %v4767
    %v4809 = vadd.f32 %v4808, %v4769
    %v4810 = vadd.f32 %v4809, %v4771
    %v4811 = vadd.f32 %v4810, %v4773
    %v4812 = vadd.f32 %v4811, %v4775
    %v4813 = vadd.f32 %v4812, %v4777
    %v4814 = vadd.f32 %v4813, %v4779
    %v4815 = vadd.f32 %v4814, %v4781
    %v4816 = vadd.f32 %v4815, %v4783
    %v4817 = vadd.f32 %v4816, %v4785
    %v4818 = vrot.slane %v4817, 4
    %v4819 = vadd.f32 %v4817, %v4818
    %v4820 = vrot.slane %v4819, 2
    %v4821 = vadd.f32 %v4819, %v4820
    %v4822 = vrot.slane %v4821, 1
    %v4823 = vadd.f32 %v4821, %v4822
    %v4824 = vadd.f32 %v4724, %v4726
    %v4825 = vadd.f32 %v4824, %v4728
    %v4826 = vadd.f32 %v4825, %v4730
    %v4827 = vadd.f32 %v4826, %v4732
    %v4828 = vadd.f32 %v4827, %v4734
    %v4829 = vadd.f32 %v4828, %v4736
    %v4830 = vadd.f32 %v4829, %v4738
    %v4831 = vadd.f32 %v4830, %v4740
    %v4832 = vadd.f32 %v4831, %v4742
    %v4833 = vadd.f32 %v4832, %v4744
    %v4834 = vadd.f32 %v4833, %v4746
    %v4835 = vadd.f32 %v4834, %v4748
    %v4836 = vadd.f32 %v4835, %v4750
    %v4837 = vadd.f32 %v4836, %v4752
    %v4838 = vadd.f32 %v4837, %v4754
    %v4839 = vadd.f32 %v4838, %v4756
    %v4840 = vadd.f32 %v4839, %v4758
    %v4841 = vadd.f32 %v4840, %v4760
    %v4842 = vadd.f32 %v4841, %v4762
    %v4843 = vadd.f32 %v4842, %v4764
    %v4844 = vadd.f32 %v4843, %v4766
    %v4845 = vadd.f32 %v4844, %v4768
    %v4846 = vadd.f32 %v4845, %v4770
    %v4847 = vadd.f32 %v4846, %v4772
    %v4848 = vadd.f32 %v4847, %v4774
    %v4849 = vadd.f32 %v4848, %v4776
    %v4850 = vadd.f32 %v4849, %v4778
    %v4851 = vadd.f32 %v4850, %v4780
    %v4852 = vadd.f32 %v4851, %v4782
    %v4853 = vadd.f32 %v4852, %v4784
    %v4854 = vadd.f32 %v4853, %v4786
    %v4855 = vrot.slane %v4854, 4
    %v4856 = vadd.f32 %v4854, %v4855
    %v4857 = vrot.slane %v4856, 2
    %v4858 = vadd.f32 %v4856, %v4857
    %v4859 = vrot.slane %v4858, 1
    %v4860 = vadd.f32 %v4858, %v4859
    %v4861 = vadd.f32 %v2291, %v2293
    %v4862 = vadd.f32 %v4861, %v2295
    %v4863 = vadd.f32 %v4862, %v2297
    %v4864 = vadd.f32 %v4863, %v2299
    %v4865 = vadd.f32 %v4864, %v2301
    %v4866 = vadd.f32 %v4865, %v2303
    %v4867 = vadd.f32 %v4866, %v2305
    %v4868 = vadd.f32 %v4867, %v2307
    %v4869 = vadd.f32 %v4868, %v2309
    %v4870 = vadd.f32 %v4869, %v2311
    %v4871 = vadd.f32 %v4870, %v2313
    %v4872 = vadd.f32 %v4871, %v2315
    %v4873 = vadd.f32 %v4872, %v2317
    %v4874 = vadd.f32 %v4873, %v2319
    %v4875 = vadd.f32 %v4874, %v2321
    %v4876 = vadd.f32 %v4875, %v2323
    %v4877 = vadd.f32 %v4876, %v2325
    %v4878 = vadd.f32 %v4877, %v2327
    %v4879 = vadd.f32 %v4878, %v2329
    %v4880 = vadd.f32 %v4879, %v2331
    %v4881 = vadd.f32 %v4880, %v2333
    %v4882 = vadd.f32 %v4881, %v2335
    %v4883 = vadd.f32 %v4882, %v2337
    %v4884 = vadd.f32 %v4883, %v2339
    %v4885 = vadd.f32 %v4884, %v2341
    %v4886 = vadd.f32 %v4885, %v2343
    %v4887 = vadd.f32 %v4886, %v2345
    %v4888 = vadd.f32 %v4887, %v2347
    %v4889 = vadd.f32 %v4888, %v2349
    %v4890 = vadd.f32 %v4889, %v2351
    %v4891 = vadd.f32 %v4890, %v2353
    %v4892 = vrot.slane %v4891, 4
    %v4893 = vadd.f32 %v4891, %v4892
    %v4894 = vrot.slane %v4893, 2
    %v4895 = vadd.f32 %v4893, %v4894
    %v4896 = vrot.slane %v4895, 1
    %v4897 = vadd.f32 %v4895, %v4896
    %v4898 = vadd.f32 %v2292, %v2294
    %v4899 = vadd.f32 %v4898, %v2296
    %v4900 = vadd.f32 %v4899, %v2298
    %v4901 = vadd.f32 %v4900, %v2300
    %v4902 = vadd.f32 %v4901, %v2302
    %v4903 = vadd.f32 %v4902, %v2304
    %v4904 = vadd.f32 %v4903, %v2306
    %v4905 = vadd.f32 %v4904, %v2308
    %v4906 = vadd.f32 %v4905, %v2310
    %v4907 = vadd.f32 %v4906, %v2312
    %v4908 = vadd.f32 %v4907, %v2314
    %v4909 = vadd.f32 %v4908, %v2316
    %v4910 = vadd.f32 %v4909, %v2318
    %v4911 = vadd.f32 %v4910, %v2320
    %v4912 = vadd.f32 %v4911, %v2322
    %v4913 = vadd.f32 %v4912, %v2324
    %v4914 = vadd.f32 %v4913, %v2326
    %v4915 = vadd.f32 %v4914, %v2328
    %v4916 = vadd.f32 %v4915, %v2330
    %v4917 = vadd.f32 %v4916, %v2332
    %v4918 = vadd.f32 %v4917, %v2334
    %v4919 = vadd.f32 %v4918, %v2336
    %v4920 = vadd.f32 %v4919, %v2338
    %v4921 = vadd.f32 %v4920, %v2340
    %v4922 = vadd.f32 %v4921, %v2342
    %v4923 = vadd.f32 %v4922, %v2344
    %v4924 = vadd.f32 %v4923, %v2346
    %v4925 = vadd.f32 %v4924, %v2348
    %v4926 = vadd.f32 %v4925, %v2350
    %v4927 = vadd.f32 %v4926, %v2352
    %v4928 = vadd.f32 %v4927, %v2354
    %v4929 = vrot.slane %v4928, 4
    %v4930 = vadd.f32 %v4928, %v4929
    %v4931 = vrot.slane %v4930, 2
    %v4932 = vadd.f32 %v4930, %v4931
    %v4933 = vrot.slane %v4932, 1
    %v4934 = vadd.f32 %v4932, %v4933
    %v4935 = vadd.f32 %v4659, %v4661
    %v4936 = vadd.f32 %v4935, %v4663
    %v4937 = vadd.f32 %v4936, %v4665
    %v4938 = vadd.f32 %v4937, %v4667
    %v4939 = vadd.f32 %v4938, %v4669
    %v4940 = vadd.f32 %v4939, %v4671
    %v4941 = vadd.f32 %v4940, %v4673
    %v4942 = vadd.f32 %v4941, %v4675
    %v4943 = vadd.f32 %v4942, %v4677
    %v4944 = vadd.f32 %v4943, %v4679
    %v4945 = vadd.f32 %v4944, %v4681
    %v4946 = vadd.f32 %v4945, %v4683
    %v4947 = vadd.f32 %v4946, %v4685
    %v4948 = vadd.f32 %v4947, %v4687
    %v4949 = vadd.f32 %v4948, %v4689
    %v4950 = vadd.f32 %v4949, %v4691
    %v4951 = vadd.f32 %v4950, %v4693
    %v4952 = vadd.f32 %v4951, %v4695
    %v4953 = vadd.f32 %v4952, %v4697
    %v4954 = vadd.f32 %v4953, %v4699
    %v4955 = vadd.f32 %v4954, %v4701
    %v4956 = vadd.f32 %v4955, %v4703
    %v4957 = vadd.f32 %v4956, %v4705
    %v4958 = vadd.f32 %v4957, %v4707
    %v4959 = vadd.f32 %v4958, %v4709
    %v4960 = vadd.f32 %v4959, %v4711
    %v4961 = vadd.f32 %v4960, %v4713
    %v4962 = vadd.f32 %v4961, %v4715
    %v4963 = vadd.f32 %v4962, %v4717
    %v4964 = vadd.f32 %v4963, %v4719
    %v4965 = vadd.f32 %v4964, %v4721
    %v4966 = vrot.slane %v4965, 4
    %v4967 = vadd.f32 %v4965, %v4966
    %v4968 = vrot.slane %v4967, 2
    %v4969 = vadd.f32 %v4967, %v4968
    %v4970 = vrot.slane %v4969, 1
    %v4971 = vadd.f32 %v4969, %v4970
    %v4972 = vadd.f32 %v4660, %v4662
    %v4973 = vadd.f32 %v4972, %v4664
    %v4974 = vadd.f32 %v4973, %v4666
    %v4975 = vadd.f32 %v4974, %v4668
    %v4976 = vadd.f32 %v4975, %v4670
    %v4977 = vadd.f32 %v4976, %v4672
    %v4978 = vadd.f32 %v4977, %v4674
    %v4979 = vadd.f32 %v4978, %v4676
    %v4980 = vadd.f32 %v4979, %v4678
    %v4981 = vadd.f32 %v4980, %v4680
    %v4982 = vadd.f32 %v4981, %v4682
    %v4983 = vadd.f32 %v4982, %v4684
    %v4984 = vadd.f32 %v4983, %v4686
    %v4985 = vadd.f32 %v4984, %v4688
    %v4986 = vadd.f32 %v4985, %v4690
    %v4987 = vadd.f32 %v4986, %v4692
    %v4988 = vadd.f32 %v4987, %v4694
    %v4989 = vadd.f32 %v4988, %v4696
    %v4990 = vadd.f32 %v4989, %v4698
    %v4991 = vadd.f32 %v4990, %v4700
    %v4992 = vadd.f32 %v4991, %v4702
    %v4993 = vadd.f32 %v4992, %v4704
    %v4994 = vadd.f32 %v4993, %v4706
    %v4995 = vadd.f32 %v4994, %v4708
    %v4996 = vadd.f32 %v4995, %v4710
    %v4997 = vadd.f32 %v4996, %v4712
    %v4998 = vadd.f32 %v4997, %v4714
    %v4999 = vadd.f32 %v4998, %v4716
    %v5000 = vadd.f32 %v4999, %v4718
    %v5001 = vadd.f32 %v5000, %v4720
    %v5002 = vadd.f32 %v5001, %v4722
    %v5003 = vrot.slane %v5002, 4
    %v5004 = vadd.f32 %v5002, %v5003
    %v5005 = vrot.slane %v5004, 2
    %v5006 = vadd.f32 %v5004, %v5005
    %v5007 = vrot.slane %v5006, 1
    %v5008 = vadd.f32 %v5006, %v5007
    %vm5009 = vcmask 1040384
    %v5010 = vsel %vm5009, %v4823, %v4897
    %v5011 = vsel %vm5009, %v4860, %v4934
    %vm5012 = vcmask 1041408
    %v5013 = vsel %vm5012, %v5010, %v4971
    %v5014 = vsel %vm5012, %v5011, %v5008
    %v5017 = vrot.slane %v5014, 4
    %vm5018 = vcmask 1043456
    %v5019 = vsel %vm5018, %v5013, %v5017
    %5021 = vst [vmem:[%s2] sm:$0x77] %v5019
    // Predicated region
    $region18: #{tpu_custom_call.1} parent=1 // pred_check
      _
    $region19: #{tpu_custom_call.1} parent=1 // pred_check_branch
      %5023 = sbr.rel (0) target = $region21
    $region20: #{tpu_custom_call.1} parent=1 // pred_region
      _
    $region21: #{tpu_custom_call.1} parent=1 // pred_fallthru
      _
    // Predicated region
    $region22: #{tpu_custom_call.1} parent=1 // pred_check
      _
    $region23: #{tpu_custom_call.1} parent=1 // pred_check_branch
      %5025 = sbr.rel (0) target = $region25
    $region24: #{tpu_custom_call.1} parent=1 // pred_region
      _
    $region25: #{tpu_custom_call.1} parent=1 // pred_fallthru
      _
    %5026 = vsyncpa [#allocation3], 1
    %5027 = vsyncpa [#allocation5], 1

</llo_original>
